<compile_context>
chip_gen: v5e
topology: v5e:2x2
jax: 0.10.0
libtpu: 0.0.40
codegen_flags: <defaults>
</compile_context>

<pallas_src>
import jax
import jax.numpy as jnp
import numpy as np
from jax.experimental import pallas as pl
from jax.experimental.pallas import tpu as pltpu


# ----------------------------------------------------------------------------
# Pallas kernel: fused conv-GEMM + 2x2 max-pool + bias + ReLU.
# Single invocation (no grid); every operand / result lives entirely in VMEM
# (the whole problem is a few hundred KiB, far below any scoped-VMEM limit).
# ----------------------------------------------------------------------------
def _conv_relu_pool_kernel(w_ref, x_ref, b_ref, o_ref):
    """o = relu(maxpool2x2(w @ patches) + b), with the 2x2 pool pre-factored.

    The wrapper orders the im2col patch matrix as (G=4, K, Mg): group g=2*dh+dw
    holds the patches of conv-output positions (2*ph+dh, 2*pw+dw), so the pool
    becomes an elementwise max over the four leading-axis GEMM results — no
    strided lane selects or in-kernel reshapes needed.

      w: (Cout, K) bf16   x: (4, K, Mg) bf16   b: (Cout, 1) f32   o: (Cout, Mg)

    Mg = N*PH*PW sits on the lane axis (lane-dense loads/stores); bf16 x bf16
    -> f32 accumulation is a single native MXU pass on v5e/v6e/v7x.  Bias and
    ReLU commute with the max, so they are applied once, after pooling, in f32.
    """
    w = w_ref[...]
    acc = jnp.dot(w, x_ref[0], preferred_element_type=jnp.float32)
    for g in range(1, x_ref.shape[0]):                  # static unroll, G == 4
        acc = jnp.maximum(
            acc, jnp.dot(w, x_ref[g], preferred_element_type=jnp.float32))
    o_ref[...] = jnp.maximum(acc + b_ref[...], 0.0).astype(o_ref.dtype)


def conv_relu_pool(w_mat, x_groups, bias, out_dtype=jnp.float32):
    """relu(maxpool2x2(conv(x))) for one layer as a single gridless pallas_call.

    w_mat: (Cout, K)   x_groups: (4, K, Mg)   bias: (Cout,)   ->   (Cout, Mg).

    Full-array blocks + no grid: no M padding, no grid-step overhead — per the
    perf review, on 1-TC v5e/v6e one full-M step beats any split at this size.
    """
    # TODO(synk): on v7x, split Mg across the two TensorCores with a 2-step grid
    # and dimension_semantics=(pltpu.CORE_PARALLEL,) (not valid on 1-TC parts).
    Cout, K = w_mat.shape
    G, K2, Mg = x_groups.shape
    assert K == K2 and G == 4
    return pl.pallas_call(
        _conv_relu_pool_kernel,
        out_shape=jax.ShapeDtypeStruct((Cout, Mg), out_dtype),
        in_specs=[
            pl.BlockSpec(memory_space=pltpu.MemorySpace.VMEM),  # weights
            pl.BlockSpec(memory_space=pltpu.MemorySpace.VMEM),  # grouped patches
            pl.BlockSpec(memory_space=pltpu.MemorySpace.VMEM),  # bias
        ],
        out_specs=pl.BlockSpec(memory_space=pltpu.MemorySpace.VMEM),
    )(w_mat.astype(jnp.bfloat16), x_groups.astype(jnp.bfloat16),
      bias.reshape(Cout, 1).astype(jnp.float32))


# ----------------------------------------------------------------------------
# XLA glue: reshape-based im2col, pre-grouped by 2x2-pool tap.
# ----------------------------------------------------------------------------
def im2col_pool_groups(x_cnhw, *, ksize, stride, padding, pool=2):
    """im2col for a strided conv (stride >= ksize), grouped by 2x2-pool tap.

    x_cnhw: (C, N, H, W)  ->  ((pool*pool, ksize*ksize*C, N*PH*PW), PH, PW)
    with PH = OH//pool.  K is ordered (kh, kw, c) to match the (cout,kh,kw,cin)
    weight reshape; M is ordered (n, ph, pw); the group axis is (dh, dw) with
    conv-output row oh = pool*ph + dh.

    Because stride(5) > ksize(3) the conv windows are disjoint, so this is pure
    pad -> reshape -> contiguous-slice -> transpose (per the perf review): no
    stride-5 gathers and no separate zero-padding pass over the patch matrix.
    """
    C, N, H, W = x_cnhw.shape
    assert stride >= ksize
    OH = (H + 2 * padding - ksize) // stride + 1
    OW = (W + 2 * padding - ksize) // stride + 1
    assert OH % pool == 0 and OW % pool == 0
    PH, PW = OH // pool, OW // pool
    xp = jnp.pad(x_cnhw, ((0, 0), (0, 0),
                          (padding, OH * stride - H - padding),
                          (padding, OW * stride - W - padding)))
    # padded row index = (ph*pool + dh)*stride + r  ->  axes (C,N,PH,dh,r,PW,dw,r)
    xr = xp.reshape(C, N, PH, pool, stride, PW, pool, stride)
    xr = xr[:, :, :, :, :ksize, :, :, :ksize]           # keep the in-window taps
    xr = jnp.transpose(xr, (3, 6, 4, 7, 0, 1, 2, 5))    # (dh,dw,kh,kw,C,n,ph,pw)
    return xr.reshape(pool * pool, ksize * ksize * C, N * PH * PW), PH, PW


# ----------------------------------------------------------------------------
# Full forward pass (matches torch CNN.forward: returns (output, flattened))
# ----------------------------------------------------------------------------
def cnn_forward(x_nchw, params):
    N = x_nchw.shape[0]
    # NCHW -> CNHW so M = N*PH*PW stays contiguous on the lane axis everywhere.
    x = jnp.transpose(x_nchw, (1, 0, 2, 3)).astype(jnp.bfloat16)       # (1, N, 444, 444)

    # Layer 1: conv1 + ReLU + maxpool1, fused in one Pallas kernel.
    p1, ph1, pw1 = im2col_pool_groups(x, ksize=3, stride=5, padding=2)  # (4, 9, N*45*45)
    w1 = jnp.transpose(params["conv1_w"], (0, 2, 3, 1)).reshape(16, 9)
    y1 = conv_relu_pool(w1, p1, params["conv1_b"], out_dtype=jnp.bfloat16)  # (16, N*45*45)
    y1 = y1.reshape(16, N, ph1, pw1)                                        # (16, N, 45, 45)

    # Layer 2: conv2 + ReLU + maxpool2, fused in one Pallas kernel.
    # TODO(synk): fold this im2col (and the one above) into the Pallas kernel so
    # the whole conv chain runs from one VMEM-resident activation (review item 2);
    # kept as contiguous XLA reshape glue for Mosaic-lowering robustness.
    p2, ph2, pw2 = im2col_pool_groups(y1, ksize=3, stride=5, padding=2)  # (4, 144, N*5*5)
    w2 = jnp.transpose(params["conv2_w"], (0, 2, 3, 1)).reshape(32, 144)
    y2 = conv_relu_pool(w2, p2, params["conv2_b"], out_dtype=jnp.float32)  # (32, N*5*5)

    # Flatten in PyTorch NCHW order; the (N,800)x(800,10) Linear stays in XLA
    # (perf review: a pallas_call launch costs more than this ~16 KFLOP matmul).
    feat = jnp.transpose(y2.reshape(32, N, ph2, pw2), (1, 0, 2, 3)).reshape(N, 32 * 5 * 5)
    out = feat @ params["lin_w"].T + params["lin_b"]
    return out, feat


# ----------------------------------------------------------------------------
# Pure-JAX f32 reference (numerical self-check)
# ----------------------------------------------------------------------------
def ref_forward(x_nchw, params):
    dn = ("NCHW", "OIHW", "NCHW")
    y = jax.lax.conv_general_dilated(x_nchw, params["conv1_w"], (5, 5),
                                     ((2, 2), (2, 2)), dimension_numbers=dn)
    y = jnp.maximum(y + params["conv1_b"][None, :, None, None], 0.0)
    y = jax.lax.reduce_window(y, -jnp.inf, jax.lax.max, (1, 1, 2, 2), (1, 1, 2, 2), "VALID")
    y = jax.lax.conv_general_dilated(y, params["conv2_w"], (5, 5),
                                     ((2, 2), (2, 2)), dimension_numbers=dn)
    y = jnp.maximum(y + params["conv2_b"][None, :, None, None], 0.0)
    y = jax.lax.reduce_window(y, -jnp.inf, jax.lax.max, (1, 1, 2, 2), (1, 1, 2, 2), "VALID")
    feat = y.reshape(y.shape[0], -1)
    out = feat @ params["lin_w"].T + params["lin_b"]
    return out, feat


# ----------------------------------------------------------------------------
if __name__ == "__main__":
    key = jax.random.PRNGKey(0)
    kx, k1, k2, k3, k4, k5, k6 = jax.random.split(key, 7)

    # Deterministic synthetic parameters (shapes from CNN.__init__).
    params = {
        "conv1_w": 0.1 * jax.random.normal(k1, (16, 1, 3, 3), jnp.float32),
        "conv1_b": 0.1 * jax.random.normal(k2, (16,), jnp.float32),
        "conv2_w": 0.1 * jax.random.normal(k3, (32, 16, 3, 3), jnp.float32),
        "conv2_b": 0.1 * jax.random.normal(k4, (32,), jnp.float32),
        "lin_w":   0.1 * jax.random.normal(k5, (10, 32 * 5 * 5), jnp.float32),
        "lin_b":   0.1 * jax.random.normal(k6, (10,), jnp.float32),
    }

    # Smallest input the architecture admits for the 32*5*5 flatten: (2, 1, 444, 444).
    x = jax.random.normal(kx, (2, 1, 444, 444), jnp.float32)

    out, feat = jax.block_until_ready(jax.jit(cnn_forward)(x, params))
    assert out.shape == (2, 10) and feat.shape == (2, 800)

    ref_out, ref_feat = jax.block_until_ready(jax.jit(ref_forward)(x, params))
    # bf16 GEMM inputs / activations (f32 accumulation) -> looser tolerance than f32.
    np.testing.assert_allclose(np.asarray(feat), np.asarray(ref_feat), rtol=5e-2, atol=5e-2)
    np.testing.assert_allclose(np.asarray(out), np.asarray(ref_out), rtol=5e-2, atol=5e-2)

    print("KERNEL_OK")
</pallas_src>

<mosaic_0001>
module attributes {stable_mosaic.version = 11 : i64} {
  func.func @_conv_relu_pool_kernel(%arg0: memref<16x9xbf16, #tpu.memory_space<vmem>>, %arg1: memref<4x9x4050xbf16, #tpu.memory_space<vmem>>, %arg2: memref<16x1xf32, #tpu.memory_space<vmem>>, %arg3: memref<16x4050xbf16, #tpu.memory_space<vmem>>) attributes {dimension_semantics = [], scalar_prefetch = 0 : i64, scratch_operands = 0 : i64, tpu.core_type = #tpu.core_type<tc>} {
    %c0 = arith.constant 0 : index
    %c0_0 = arith.constant 0 : index
    %0 = vector.load %arg0[%c0, %c0_0] : memref<16x9xbf16, #tpu.memory_space<vmem>>, vector<16x9xbf16>
    %c0_1 = arith.constant 0 : index
    %c0_2 = arith.constant 0 : index
    %c0_3 = arith.constant 0 : index
    %1 = vector.load %arg1[%c0_1, %c0_2, %c0_3] : memref<4x9x4050xbf16, #tpu.memory_space<vmem>>, vector<1x9x4050xbf16>
    %2 = vector.shape_cast %1 : vector<1x9x4050xbf16> to vector<9x4050xbf16>
    %cst = arith.constant dense<0.000000e+00> : vector<16x4050xf32>
    %3 = tpu.matmul %0, %2, %cst {dimension_numbers = #tpu.dot_dimension_numbers<[1], [0], [0], [1], [0, 0, 1, 1], [], []>} : vector<16x9xbf16>, vector<9x4050xbf16>, vector<16x4050xf32> -> vector<16x4050xf32>
    %c1 = arith.constant 1 : index
    %c0_4 = arith.constant 0 : index
    %c0_5 = arith.constant 0 : index
    %4 = vector.load %arg1[%c1, %c0_4, %c0_5] : memref<4x9x4050xbf16, #tpu.memory_space<vmem>>, vector<1x9x4050xbf16>
    %5 = vector.shape_cast %4 : vector<1x9x4050xbf16> to vector<9x4050xbf16>
    %cst_6 = arith.constant dense<0.000000e+00> : vector<16x4050xf32>
    %6 = tpu.matmul %0, %5, %cst_6 {dimension_numbers = #tpu.dot_dimension_numbers<[1], [0], [0], [1], [0, 0, 1, 1], [], []>} : vector<16x9xbf16>, vector<9x4050xbf16>, vector<16x4050xf32> -> vector<16x4050xf32>
    %7 = arith.maximumf %3, %6 : vector<16x4050xf32>
    %c2 = arith.constant 2 : index
    %c0_7 = arith.constant 0 : index
    %c0_8 = arith.constant 0 : index
    %8 = vector.load %arg1[%c2, %c0_7, %c0_8] : memref<4x9x4050xbf16, #tpu.memory_space<vmem>>, vector<1x9x4050xbf16>
    %9 = vector.shape_cast %8 : vector<1x9x4050xbf16> to vector<9x4050xbf16>
    %cst_9 = arith.constant dense<0.000000e+00> : vector<16x4050xf32>
    %10 = tpu.matmul %0, %9, %cst_9 {dimension_numbers = #tpu.dot_dimension_numbers<[1], [0], [0], [1], [0, 0, 1, 1], [], []>} : vector<16x9xbf16>, vector<9x4050xbf16>, vector<16x4050xf32> -> vector<16x4050xf32>
    %11 = arith.maximumf %7, %10 : vector<16x4050xf32>
    %c3 = arith.constant 3 : index
    %c0_10 = arith.constant 0 : index
    %c0_11 = arith.constant 0 : index
    %12 = vector.load %arg1[%c3, %c0_10, %c0_11] : memref<4x9x4050xbf16, #tpu.memory_space<vmem>>, vector<1x9x4050xbf16>
    %13 = vector.shape_cast %12 : vector<1x9x4050xbf16> to vector<9x4050xbf16>
    %cst_12 = arith.constant dense<0.000000e+00> : vector<16x4050xf32>
    %14 = tpu.matmul %0, %13, %cst_12 {dimension_numbers = #tpu.dot_dimension_numbers<[1], [0], [0], [1], [0, 0, 1, 1], [], []>} : vector<16x9xbf16>, vector<9x4050xbf16>, vector<16x4050xf32> -> vector<16x4050xf32>
    %15 = arith.maximumf %11, %14 : vector<16x4050xf32>
    %c0_13 = arith.constant 0 : index
    %c0_14 = arith.constant 0 : index
    %16 = vector.load %arg2[%c0_13, %c0_14] : memref<16x1xf32, #tpu.memory_space<vmem>>, vector<16x1xf32>
    %17 = vector.broadcast %16 : vector<16x1xf32> to vector<16x4050xf32>
    %18 = arith.addf %15, %17 : vector<16x4050xf32>
    %cst_15 = arith.constant 0.000000e+00 : f32
    %19 = vector.broadcast %cst_15 : f32 to vector<16x4050xf32>
    %20 = arith.maximumf %18, %19 : vector<16x4050xf32>
    %21 = arith.truncf %20 : vector<16x4050xf32> to vector<16x4050xbf16>
    %c0_16 = arith.constant 0 : index
    %c0_17 = arith.constant 0 : index
    %22 = vector.load %arg3[%c0_16, %c0_17] : memref<16x4050xbf16, #tpu.memory_space<vmem>>, vector<16x4050xbf16>
    tpu.vector_store %arg3[%c0_16, %c0_17], %21 {strides = array<i32>} : memref<16x4050xbf16, #tpu.memory_space<vmem>>, vector<16x4050xbf16>,
    return
  }
}

module attributes {stable_mosaic.version = 11 : i64} {
  func.func @_conv_relu_pool_kernel(%arg0: memref<32x144xbf16, #tpu.memory_space<vmem>>, %arg1: memref<4x144x50xbf16, #tpu.memory_space<vmem>>, %arg2: memref<32x1xf32, #tpu.memory_space<vmem>>, %arg3: memref<32x50xf32, #tpu.memory_space<vmem>>) attributes {dimension_semantics = [], scalar_prefetch = 0 : i64, scratch_operands = 0 : i64, tpu.core_type = #tpu.core_type<tc>} {
    %c0 = arith.constant 0 : index
    %c0_0 = arith.constant 0 : index
    %0 = vector.load %arg0[%c0, %c0_0] : memref<32x144xbf16, #tpu.memory_space<vmem>>, vector<32x144xbf16>
    %c0_1 = arith.constant 0 : index
    %c0_2 = arith.constant 0 : index
    %c0_3 = arith.constant 0 : index
    %1 = vector.load %arg1[%c0_1, %c0_2, %c0_3] : memref<4x144x50xbf16, #tpu.memory_space<vmem>>, vector<1x144x50xbf16>
    %2 = vector.shape_cast %1 : vector<1x144x50xbf16> to vector<144x50xbf16>
    %cst = arith.constant dense<0.000000e+00> : vector<32x50xf32>
    %3 = tpu.matmul %0, %2, %cst {dimension_numbers = #tpu.dot_dimension_numbers<[1], [0], [0], [1], [0, 0, 1, 1], [], []>} : vector<32x144xbf16>, vector<144x50xbf16>, vector<32x50xf32> -> vector<32x50xf32>
    %c1 = arith.constant 1 : index
    %c0_4 = arith.constant 0 : index
    %c0_5 = arith.constant 0 : index
    %4 = vector.load %arg1[%c1, %c0_4, %c0_5] : memref<4x144x50xbf16, #tpu.memory_space<vmem>>, vector<1x144x50xbf16>
    %5 = vector.shape_cast %4 : vector<1x144x50xbf16> to vector<144x50xbf16>
    %cst_6 = arith.constant dense<0.000000e+00> : vector<32x50xf32>
    %6 = tpu.matmul %0, %5, %cst_6 {dimension_numbers = #tpu.dot_dimension_numbers<[1], [0], [0], [1], [0, 0, 1, 1], [], []>} : vector<32x144xbf16>, vector<144x50xbf16>, vector<32x50xf32> -> vector<32x50xf32>
    %7 = arith.maximumf %3, %6 : vector<32x50xf32>
    %c2 = arith.constant 2 : index
    %c0_7 = arith.constant 0 : index
    %c0_8 = arith.constant 0 : index
    %8 = vector.load %arg1[%c2, %c0_7, %c0_8] : memref<4x144x50xbf16, #tpu.memory_space<vmem>>, vector<1x144x50xbf16>
    %9 = vector.shape_cast %8 : vector<1x144x50xbf16> to vector<144x50xbf16>
    %cst_9 = arith.constant dense<0.000000e+00> : vector<32x50xf32>
    %10 = tpu.matmul %0, %9, %cst_9 {dimension_numbers = #tpu.dot_dimension_numbers<[1], [0], [0], [1], [0, 0, 1, 1], [], []>} : vector<32x144xbf16>, vector<144x50xbf16>, vector<32x50xf32> -> vector<32x50xf32>
    %11 = arith.maximumf %7, %10 : vector<32x50xf32>
    %c3 = arith.constant 3 : index
    %c0_10 = arith.constant 0 : index
    %c0_11 = arith.constant 0 : index
    %12 = vector.load %arg1[%c3, %c0_10, %c0_11] : memref<4x144x50xbf16, #tpu.memory_space<vmem>>, vector<1x144x50xbf16>
    %13 = vector.shape_cast %12 : vector<1x144x50xbf16> to vector<144x50xbf16>
    %cst_12 = arith.constant dense<0.000000e+00> : vector<32x50xf32>
    %14 = tpu.matmul %0, %13, %cst_12 {dimension_numbers = #tpu.dot_dimension_numbers<[1], [0], [0], [1], [0, 0, 1, 1], [], []>} : vector<32x144xbf16>, vector<144x50xbf16>, vector<32x50xf32> -> vector<32x50xf32>
    %15 = arith.maximumf %11, %14 : vector<32x50xf32>
    %c0_13 = arith.constant 0 : index
    %c0_14 = arith.constant 0 : index
    %16 = vector.load %arg2[%c0_13, %c0_14] : memref<32x1xf32, #tpu.memory_space<vmem>>, vector<32x1xf32>
    %17 = vector.broadcast %16 : vector<32x1xf32> to vector<32x50xf32>
    %18 = arith.addf %15, %17 : vector<32x50xf32>
    %cst_15 = arith.constant 0.000000e+00 : f32
    %19 = vector.broadcast %cst_15 : f32 to vector<32x50xf32>
    %20 = arith.maximumf %18, %19 : vector<32x50xf32>
    %c0_16 = arith.constant 0 : index
    %c0_17 = arith.constant 0 : index
    %21 = vector.load %arg3[%c0_16, %c0_17] : memref<32x50xf32, #tpu.memory_space<vmem>>, vector<32x50xf32>
    tpu.vector_store %arg3[%c0_16, %c0_17], %20 {strides = array<i32>} : memref<32x50xf32, #tpu.memory_space<vmem>>, vector<32x50xf32>,
    return
  }
}

</mosaic_0001>

<llo_original>
// kernel: cnn_forward.2
$region0: #{cnn_forward.2}
  #allocation0 [shape = 'u32[]', space=smem, size = 0x4, offset = 0x4, fixed_abs, tag = 'smem constant byte address 0x4 - core index']
  #allocation1 [shape = 'u32[72,128]{1,0:T(1,128)}', space=vmem, size = 0x9000, scoped, tag = 'internal scratch']
  %s0 = inlined_call_operand.vmem [shape: bf16[16,9], index: 0, kind: input, shape index: {}]
  %s1 = inlined_call_operand.vmem [shape: bf16[4,9,4050], index: 1, kind: input, shape index: {}]
  %s2 = inlined_call_operand.vmem [shape: f32[16,1], index: 2, kind: input, shape index: {}]
  %s3 = inlined_call_operand.vmem [shape: bf16[16,4050], index: 3, kind: output, shape index: {}]
  %s4 = sld [smem:[#allocation0]]
  $region22: #{cnn_forward.2} parent=0
    _
  %s6 = ssub.s32 1, %s4
  %s7 = scalar_select 0, %s6, %s4
  // Predicated region
  $region2: #{cnn_forward.2} parent=0 // pred_check
    _
  $region3: #{cnn_forward.2} parent=0 // pred_check_branch
    %9 = sbr.rel (0) target = $region5
  $region4: #{cnn_forward.2} parent=0 // pred_region
    _
  $region5: #{cnn_forward.2} parent=0 // pred_fallthru
    _
  // Predicated region
  $region6: #{cnn_forward.2} parent=0 // pred_check
    _
  $region7: #{cnn_forward.2} parent=0 // pred_check_branch
    %11 = sbr.rel (0) target = $region9
  $region8: #{cnn_forward.2} parent=0 // pred_region
    _
  $region9: #{cnn_forward.2} parent=0 // pred_fallthru
    _
  // Predicated region
  $region10: #{cnn_forward.2} parent=0 // pred_check
    _
  $region11: #{cnn_forward.2} parent=0 // pred_check_branch
    %13 = sbr.rel (0) target = $region13
  $region12: #{cnn_forward.2} parent=0 // pred_region
    _
  $region13: #{cnn_forward.2} parent=0 // pred_fallthru
    _
  %v15 = vld [vmem:[%s0] sm:$0xf]
  %v16 = vld [vmem:[%s0 + $0x4] sm:$0xf]
  %v17 = vld [vmem:[%s1] sm:$0xff]
  %v18 = vld [vmem:[%s1 + $0x8] sm:$0xff]
  %v19 = vld [vmem:[%s1 + $0x10] sm:$0xff]
  %v20 = vld [vmem:[%s1 + $0x18] sm:$0xff]
  %v21 = vld [vmem:[%s1 + $0x20] sm:$0xff]
  %v22 = vld [vmem:[%s1 + $0x28] sm:$0xff]
  %v23 = vld [vmem:[%s1 + $0x30] sm:$0xff]
  %v24 = vld [vmem:[%s1 + $0x38] sm:$0xff]
  %v25 = vld [vmem:[%s1 + $0x40] sm:$0xff]
  %v26 = vld [vmem:[%s1 + $0x48] sm:$0xff]
  %v27 = vld [vmem:[%s1 + $0x50] sm:$0xff]
  %v28 = vld [vmem:[%s1 + $0x58] sm:$0xff]
  %v29 = vld [vmem:[%s1 + $0x60] sm:$0xff]
  %v30 = vld [vmem:[%s1 + $0x68] sm:$0xff]
  %v31 = vld [vmem:[%s1 + $0x70] sm:$0xff]
  %v32 = vld [vmem:[%s1 + $0x78] sm:$0xff]
  %v33 = vld [vmem:[%s1 + $0x80] sm:$0x11]
  %v34 = vld [vmem:[%s1 + $0x88] sm:$0x11]
  %v35 = vld [vmem:[%s1 + $0x90] sm:$0x11]
  %v36 = vld [vmem:[%s1 + $0x98] sm:$0x11]
  %v37 = vld [vmem:[%s1 + $0xa0] sm:$0x11]
  %v38 = vld [vmem:[%s1 + $0xa8] sm:$0x11]
  %v39 = vld [vmem:[%s1 + $0xb0] sm:$0x11]
  %v40 = vld [vmem:[%s1 + $0xb8] sm:$0x11]
  %v41 = vld [vmem:[%s1 + $0xc0] sm:$0x11]
  %v42 = vld [vmem:[%s1 + $0xc8] sm:$0x11]
  %v43 = vld [vmem:[%s1 + $0xd0] sm:$0x11]
  %v44 = vld [vmem:[%s1 + $0xd8] sm:$0x11]
  %v45 = vld [vmem:[%s1 + $0xe0] sm:$0x11]
  %v46 = vld [vmem:[%s1 + $0xe8] sm:$0x11]
  %v47 = vld [vmem:[%s1 + $0xf0] sm:$0x11]
  %v48 = vld [vmem:[%s1 + $0xf8] sm:$0x11]
  %v51 = vunpack.c.l.b16 %v15
  %v52 = vunpack.c.l.b16 %v16
  %v53 = vpack.c.b16 %v52, %v51
  %v86 = vunpack.c.l.b16 %v17
  %v87 = vunpack.c.h.b16 %v17
  %v88 = vunpack.c.l.b16 %v18
  %v89 = vunpack.c.h.b16 %v18
  %v90 = vunpack.c.l.b16 %v19
  %v91 = vunpack.c.h.b16 %v19
  %v92 = vunpack.c.l.b16 %v20
  %v93 = vunpack.c.h.b16 %v20
  %v94 = vunpack.c.l.b16 %v21
  %v95 = vunpack.c.h.b16 %v21
  %v96 = vunpack.c.l.b16 %v22
  %v97 = vunpack.c.h.b16 %v22
  %v98 = vunpack.c.l.b16 %v23
  %v99 = vunpack.c.h.b16 %v23
  %v100 = vunpack.c.l.b16 %v24
  %v101 = vunpack.c.h.b16 %v24
  %v102 = vunpack.c.l.b16 %v25
  %v103 = vunpack.c.h.b16 %v25
  %v104 = vunpack.c.l.b16 %v26
  %v105 = vunpack.c.h.b16 %v26
  %v106 = vunpack.c.l.b16 %v27
  %v107 = vunpack.c.h.b16 %v27
  %v108 = vunpack.c.l.b16 %v28
  %v109 = vunpack.c.h.b16 %v28
  %v110 = vunpack.c.l.b16 %v29
  %v111 = vunpack.c.h.b16 %v29
  %v112 = vunpack.c.l.b16 %v30
  %v113 = vunpack.c.h.b16 %v30
  %v114 = vunpack.c.l.b16 %v31
  %v115 = vunpack.c.h.b16 %v31
  %v116 = vunpack.c.l.b16 %v32
  %v117 = vunpack.c.h.b16 %v32
  %v118 = vunpack.c.l.b16 %v33
  %v119 = vunpack.c.h.b16 %v33
  %v120 = vunpack.c.l.b16 %v34
  %v121 = vunpack.c.h.b16 %v34
  %v122 = vunpack.c.l.b16 %v35
  %v123 = vunpack.c.h.b16 %v35
  %v124 = vunpack.c.l.b16 %v36
  %v125 = vunpack.c.h.b16 %v36
  %v126 = vunpack.c.l.b16 %v37
  %v127 = vunpack.c.h.b16 %v37
  %v128 = vunpack.c.l.b16 %v38
  %v129 = vunpack.c.h.b16 %v38
  %v130 = vunpack.c.l.b16 %v39
  %v131 = vunpack.c.h.b16 %v39
  %v132 = vunpack.c.l.b16 %v40
  %v133 = vunpack.c.h.b16 %v40
  %v134 = vunpack.c.l.b16 %v41
  %v135 = vunpack.c.h.b16 %v41
  %v136 = vunpack.c.l.b16 %v42
  %v137 = vunpack.c.h.b16 %v42
  %v138 = vunpack.c.l.b16 %v43
  %v139 = vunpack.c.h.b16 %v43
  %v140 = vunpack.c.l.b16 %v44
  %v141 = vunpack.c.h.b16 %v44
  %v142 = vunpack.c.l.b16 %v45
  %v143 = vunpack.c.h.b16 %v45
  %v144 = vunpack.c.l.b16 %v46
  %v145 = vunpack.c.h.b16 %v46
  %v146 = vunpack.c.l.b16 %v47
  %v147 = vunpack.c.h.b16 %v47
  %v148 = vunpack.c.l.b16 %v48
  %v149 = vunpack.c.h.b16 %v48
  %v150 = vpack.c.b16 %v118, %v86
  %v151 = vpack.c.b16 %v119, %v87
  %v152 = vpack.c.b16 %v120, %v88
  %v153 = vpack.c.b16 %v121, %v89
  %v154 = vpack.c.b16 %v122, %v90
  %v155 = vpack.c.b16 %v123, %v91
  %v156 = vpack.c.b16 %v124, %v92
  %v157 = vpack.c.b16 %v125, %v93
  %v158 = vpack.c.b16 %v126, %v94
  %v159 = vpack.c.b16 %v127, %v95
  %v160 = vpack.c.b16 %v128, %v96
  %v161 = vpack.c.b16 %v129, %v97
  %v162 = vpack.c.b16 %v130, %v98
  %v163 = vpack.c.b16 %v131, %v99
  %v164 = vpack.c.b16 %v132, %v100
  %v165 = vpack.c.b16 %v133, %v101
  %v166 = vpack.c.b16 %v134, %v102
  %v167 = vpack.c.b16 %v135, %v103
  %v168 = vpack.c.b16 %v136, %v104
  %v169 = vpack.c.b16 %v137, %v105
  %v170 = vpack.c.b16 %v138, %v106
  %v171 = vpack.c.b16 %v139, %v107
  %v172 = vpack.c.b16 %v140, %v108
  %v173 = vpack.c.b16 %v141, %v109
  %v174 = vpack.c.b16 %v142, %v110
  %v175 = vpack.c.b16 %v143, %v111
  %v176 = vpack.c.b16 %v144, %v112
  %v177 = vpack.c.b16 %v145, %v113
  %v178 = vpack.c.b16 %v146, %v114
  %v179 = vpack.c.b16 %v147, %v115
  %v180 = vpack.c.b16 %v148, %v116
  %v181 = vpack.c.b16 %v149, %v117
  %vm182 = vcmask 72704
  %v184 = vsel %vm182, %v53, 0
  %vm186 = vcmask 1043456
  %vm187 = vcmask 1044480
  %v188 = vsel %vm186, 4294967295, 65535
  %v189 = vsel %vm187, %v188, 0
  %v191 = vand.u32 %v150, %v189
  %v194 = vand.u32 %v151, %v189
  %v197 = vand.u32 %v152, %v189
  %v200 = vand.u32 %v153, %v189
  %v203 = vand.u32 %v154, %v189
  %v206 = vand.u32 %v155, %v189
  %v209 = vand.u32 %v156, %v189
  %v212 = vand.u32 %v157, %v189
  %v215 = vand.u32 %v158, %v189
  %v218 = vand.u32 %v159, %v189
  %v221 = vand.u32 %v160, %v189
  %v224 = vand.u32 %v161, %v189
  %v227 = vand.u32 %v162, %v189
  %v230 = vand.u32 %v163, %v189
  %v233 = vand.u32 %v164, %v189
  %v236 = vand.u32 %v165, %v189
  %v239 = vand.u32 %v166, %v189
  %v242 = vand.u32 %v167, %v189
  %v245 = vand.u32 %v168, %v189
  %v248 = vand.u32 %v169, %v189
  %v251 = vand.u32 %v170, %v189
  %v254 = vand.u32 %v171, %v189
  %v257 = vand.u32 %v172, %v189
  %v260 = vand.u32 %v173, %v189
  %v263 = vand.u32 %v174, %v189
  %v266 = vand.u32 %v175, %v189
  %v269 = vand.u32 %v176, %v189
  %v272 = vand.u32 %v177, %v189
  %v275 = vand.u32 %v178, %v189
  %v278 = vand.u32 %v179, %v189
  %v281 = vand.u32 %v180, %v189
  %v284 = vand.u32 %v181, %v189
  %286 = vmatpush.bf16.msra.mxu0 0
  %287 = vmatpush.bf16.msra.mxu0 0
  %288 = vmatpush.bf16.msra.mxu0 0
  %289 = vmatpush.bf16.msra.mxu0 0
  %290 = vmatpush.bf16.msra.mxu0 0
  %291 = vmatpush.bf16.msra.mxu0 0
  %292 = vmatpush.bf16.msra.mxu0 0
  %293 = vmatpush.bf16.msra.mxu0 %v191
  %294 = vmatmul.bf16.gmra.mxu0 %v184
  %v295 = vpop.f32.mrf.mxu0
  %v296 = vadd.f32 0.0, %v295
  %v297 = vpop.f32.mrf.mxu0
  %v298 = vadd.f32 0.0, %v297
  %299 = vdwg.mxu0
  %300 = vmatpush.bf16.msra.mxu0 0
  %301 = vmatpush.bf16.msra.mxu0 0
  %302 = vmatpush.bf16.msra.mxu0 0
  %303 = vmatpush.bf16.msra.mxu0 0
  %304 = vmatpush.bf16.msra.mxu0 0
  %305 = vmatpush.bf16.msra.mxu0 0
  %306 = vmatpush.bf16.msra.mxu0 0
  %307 = vmatpush.bf16.msra.mxu0 %v194
  %308 = vmatmul.bf16.gmra.mxu0 %v184
  %v309 = vpop.f32.mrf.mxu0
  %v310 = vadd.f32 0.0, %v309
  %v311 = vpop.f32.mrf.mxu0
  %v312 = vadd.f32 0.0, %v311
  %313 = vdwg.mxu0
  %314 = vmatpush.bf16.msra.mxu0 0
  %315 = vmatpush.bf16.msra.mxu0 0
  %316 = vmatpush.bf16.msra.mxu0 0
  %317 = vmatpush.bf16.msra.mxu0 0
  %318 = vmatpush.bf16.msra.mxu0 0
  %319 = vmatpush.bf16.msra.mxu0 0
  %320 = vmatpush.bf16.msra.mxu0 0
  %321 = vmatpush.bf16.msra.mxu0 %v197
  %322 = vmatmul.bf16.gmra.mxu0 %v184
  %v323 = vpop.f32.mrf.mxu0
  %v324 = vadd.f32 0.0, %v323
  %v325 = vpop.f32.mrf.mxu0
  %v326 = vadd.f32 0.0, %v325
  %327 = vdwg.mxu0
  %328 = vmatpush.bf16.msra.mxu0 0
  %329 = vmatpush.bf16.msra.mxu0 0
  %330 = vmatpush.bf16.msra.mxu0 0
  %331 = vmatpush.bf16.msra.mxu0 0
  %332 = vmatpush.bf16.msra.mxu0 0
  %333 = vmatpush.bf16.msra.mxu0 0
  %334 = vmatpush.bf16.msra.mxu0 0
  %335 = vmatpush.bf16.msra.mxu0 %v200
  %336 = vmatmul.bf16.gmra.mxu0 %v184
  %v337 = vpop.f32.mrf.mxu0
  %v338 = vadd.f32 0.0, %v337
  %v339 = vpop.f32.mrf.mxu0
  %v340 = vadd.f32 0.0, %v339
  %341 = vdwg.mxu0
  %342 = vmatpush.bf16.msra.mxu0 0
  %343 = vmatpush.bf16.msra.mxu0 0
  %344 = vmatpush.bf16.msra.mxu0 0
  %345 = vmatpush.bf16.msra.mxu0 0
  %346 = vmatpush.bf16.msra.mxu0 0
  %347 = vmatpush.bf16.msra.mxu0 0
  %348 = vmatpush.bf16.msra.mxu0 0
  %349 = vmatpush.bf16.msra.mxu0 %v203
  %350 = vmatmul.bf16.gmra.mxu0 %v184
  %v351 = vpop.f32.mrf.mxu0
  %v352 = vadd.f32 0.0, %v351
  %v353 = vpop.f32.mrf.mxu0
  %v354 = vadd.f32 0.0, %v353
  %355 = vdwg.mxu0
  %356 = vmatpush.bf16.msra.mxu0 0
  %357 = vmatpush.bf16.msra.mxu0 0
  %358 = vmatpush.bf16.msra.mxu0 0
  %359 = vmatpush.bf16.msra.mxu0 0
  %360 = vmatpush.bf16.msra.mxu0 0
  %361 = vmatpush.bf16.msra.mxu0 0
  %362 = vmatpush.bf16.msra.mxu0 0
  %363 = vmatpush.bf16.msra.mxu0 %v206
  %364 = vmatmul.bf16.gmra.mxu0 %v184
  %v365 = vpop.f32.mrf.mxu0
  %v366 = vadd.f32 0.0, %v365
  %v367 = vpop.f32.mrf.mxu0
  %v368 = vadd.f32 0.0, %v367
  %369 = vdwg.mxu0
  %370 = vmatpush.bf16.msra.mxu0 0
  %371 = vmatpush.bf16.msra.mxu0 0
  %372 = vmatpush.bf16.msra.mxu0 0
  %373 = vmatpush.bf16.msra.mxu0 0
  %374 = vmatpush.bf16.msra.mxu0 0
  %375 = vmatpush.bf16.msra.mxu0 0
  %376 = vmatpush.bf16.msra.mxu0 0
  %377 = vmatpush.bf16.msra.mxu0 %v209
  %378 = vmatmul.bf16.gmra.mxu0 %v184
  %v379 = vpop.f32.mrf.mxu0
  %v380 = vadd.f32 0.0, %v379
  %v381 = vpop.f32.mrf.mxu0
  %v382 = vadd.f32 0.0, %v381
  %383 = vdwg.mxu0
  %384 = vmatpush.bf16.msra.mxu0 0
  %385 = vmatpush.bf16.msra.mxu0 0
  %386 = vmatpush.bf16.msra.mxu0 0
  %387 = vmatpush.bf16.msra.mxu0 0
  %388 = vmatpush.bf16.msra.mxu0 0
  %389 = vmatpush.bf16.msra.mxu0 0
  %390 = vmatpush.bf16.msra.mxu0 0
  %391 = vmatpush.bf16.msra.mxu0 %v212
  %392 = vmatmul.bf16.gmra.mxu0 %v184
  %v393 = vpop.f32.mrf.mxu0
  %v394 = vadd.f32 0.0, %v393
  %v395 = vpop.f32.mrf.mxu0
  %v396 = vadd.f32 0.0, %v395
  %397 = vdwg.mxu0
  %398 = vmatpush.bf16.msra.mxu0 0
  %399 = vmatpush.bf16.msra.mxu0 0
  %400 = vmatpush.bf16.msra.mxu0 0
  %401 = vmatpush.bf16.msra.mxu0 0
  %402 = vmatpush.bf16.msra.mxu0 0
  %403 = vmatpush.bf16.msra.mxu0 0
  %404 = vmatpush.bf16.msra.mxu0 0
  %405 = vmatpush.bf16.msra.mxu0 %v215
  %406 = vmatmul.bf16.gmra.mxu0 %v184
  %v407 = vpop.f32.mrf.mxu0
  %v408 = vadd.f32 0.0, %v407
  %v409 = vpop.f32.mrf.mxu0
  %v410 = vadd.f32 0.0, %v409
  %411 = vdwg.mxu0
  %412 = vmatpush.bf16.msra.mxu0 0
  %413 = vmatpush.bf16.msra.mxu0 0
  %414 = vmatpush.bf16.msra.mxu0 0
  %415 = vmatpush.bf16.msra.mxu0 0
  %416 = vmatpush.bf16.msra.mxu0 0
  %417 = vmatpush.bf16.msra.mxu0 0
  %418 = vmatpush.bf16.msra.mxu0 0
  %419 = vmatpush.bf16.msra.mxu0 %v218
  %420 = vmatmul.bf16.gmra.mxu0 %v184
  %v421 = vpop.f32.mrf.mxu0
  %v422 = vadd.f32 0.0, %v421
  %v423 = vpop.f32.mrf.mxu0
  %v424 = vadd.f32 0.0, %v423
  %425 = vdwg.mxu0
  %426 = vmatpush.bf16.msra.mxu0 0
  %427 = vmatpush.bf16.msra.mxu0 0
  %428 = vmatpush.bf16.msra.mxu0 0
  %429 = vmatpush.bf16.msra.mxu0 0
  %430 = vmatpush.bf16.msra.mxu0 0
  %431 = vmatpush.bf16.msra.mxu0 0
  %432 = vmatpush.bf16.msra.mxu0 0
  %433 = vmatpush.bf16.msra.mxu0 %v221
  %434 = vmatmul.bf16.gmra.mxu0 %v184
  %v435 = vpop.f32.mrf.mxu0
  %v436 = vadd.f32 0.0, %v435
  %v437 = vpop.f32.mrf.mxu0
  %v438 = vadd.f32 0.0, %v437
  %439 = vdwg.mxu0
  %440 = vmatpush.bf16.msra.mxu0 0
  %441 = vmatpush.bf16.msra.mxu0 0
  %442 = vmatpush.bf16.msra.mxu0 0
  %443 = vmatpush.bf16.msra.mxu0 0
  %444 = vmatpush.bf16.msra.mxu0 0
  %445 = vmatpush.bf16.msra.mxu0 0
  %446 = vmatpush.bf16.msra.mxu0 0
  %447 = vmatpush.bf16.msra.mxu0 %v224
  %448 = vmatmul.bf16.gmra.mxu0 %v184
  %v449 = vpop.f32.mrf.mxu0
  %v450 = vadd.f32 0.0, %v449
  %v451 = vpop.f32.mrf.mxu0
  %v452 = vadd.f32 0.0, %v451
  %453 = vdwg.mxu0
  %454 = vmatpush.bf16.msra.mxu0 0
  %455 = vmatpush.bf16.msra.mxu0 0
  %456 = vmatpush.bf16.msra.mxu0 0
  %457 = vmatpush.bf16.msra.mxu0 0
  %458 = vmatpush.bf16.msra.mxu0 0
  %459 = vmatpush.bf16.msra.mxu0 0
  %460 = vmatpush.bf16.msra.mxu0 0
  %461 = vmatpush.bf16.msra.mxu0 %v227
  %462 = vmatmul.bf16.gmra.mxu0 %v184
  %v463 = vpop.f32.mrf.mxu0
  %v464 = vadd.f32 0.0, %v463
  %v465 = vpop.f32.mrf.mxu0
  %v466 = vadd.f32 0.0, %v465
  %467 = vdwg.mxu0
  %468 = vmatpush.bf16.msra.mxu0 0
  %469 = vmatpush.bf16.msra.mxu0 0
  %470 = vmatpush.bf16.msra.mxu0 0
  %471 = vmatpush.bf16.msra.mxu0 0
  %472 = vmatpush.bf16.msra.mxu0 0
  %473 = vmatpush.bf16.msra.mxu0 0
  %474 = vmatpush.bf16.msra.mxu0 0
  %475 = vmatpush.bf16.msra.mxu0 %v230
  %476 = vmatmul.bf16.gmra.mxu0 %v184
  %v477 = vpop.f32.mrf.mxu0
  %v478 = vadd.f32 0.0, %v477
  %v479 = vpop.f32.mrf.mxu0
  %v480 = vadd.f32 0.0, %v479
  %481 = vdwg.mxu0
  %482 = vmatpush.bf16.msra.mxu0 0
  %483 = vmatpush.bf16.msra.mxu0 0
  %484 = vmatpush.bf16.msra.mxu0 0
  %485 = vmatpush.bf16.msra.mxu0 0
  %486 = vmatpush.bf16.msra.mxu0 0
  %487 = vmatpush.bf16.msra.mxu0 0
  %488 = vmatpush.bf16.msra.mxu0 0
  %489 = vmatpush.bf16.msra.mxu0 %v233
  %490 = vmatmul.bf16.gmra.mxu0 %v184
  %v491 = vpop.f32.mrf.mxu0
  %v492 = vadd.f32 0.0, %v491
  %v493 = vpop.f32.mrf.mxu0
  %v494 = vadd.f32 0.0, %v493
  %495 = vdwg.mxu0
  %496 = vmatpush.bf16.msra.mxu0 0
  %497 = vmatpush.bf16.msra.mxu0 0
  %498 = vmatpush.bf16.msra.mxu0 0
  %499 = vmatpush.bf16.msra.mxu0 0
  %500 = vmatpush.bf16.msra.mxu0 0
  %501 = vmatpush.bf16.msra.mxu0 0
  %502 = vmatpush.bf16.msra.mxu0 0
  %503 = vmatpush.bf16.msra.mxu0 %v236
  %504 = vmatmul.bf16.gmra.mxu0 %v184
  %v505 = vpop.f32.mrf.mxu0
  %v506 = vadd.f32 0.0, %v505
  %v507 = vpop.f32.mrf.mxu0
  %v508 = vadd.f32 0.0, %v507
  %509 = vdwg.mxu0
  %510 = vmatpush.bf16.msra.mxu0 0
  %511 = vmatpush.bf16.msra.mxu0 0
  %512 = vmatpush.bf16.msra.mxu0 0
  %513 = vmatpush.bf16.msra.mxu0 0
  %514 = vmatpush.bf16.msra.mxu0 0
  %515 = vmatpush.bf16.msra.mxu0 0
  %516 = vmatpush.bf16.msra.mxu0 0
  %517 = vmatpush.bf16.msra.mxu0 %v239
  %518 = vmatmul.bf16.gmra.mxu0 %v184
  %v519 = vpop.f32.mrf.mxu0
  %v520 = vadd.f32 0.0, %v519
  %v521 = vpop.f32.mrf.mxu0
  %v522 = vadd.f32 0.0, %v521
  %523 = vdwg.mxu0
  %524 = vmatpush.bf16.msra.mxu0 0
  %525 = vmatpush.bf16.msra.mxu0 0
  %526 = vmatpush.bf16.msra.mxu0 0
  %527 = vmatpush.bf16.msra.mxu0 0
  %528 = vmatpush.bf16.msra.mxu0 0
  %529 = vmatpush.bf16.msra.mxu0 0
  %530 = vmatpush.bf16.msra.mxu0 0
  %531 = vmatpush.bf16.msra.mxu0 %v242
  %532 = vmatmul.bf16.gmra.mxu0 %v184
  %v533 = vpop.f32.mrf.mxu0
  %v534 = vadd.f32 0.0, %v533
  %v535 = vpop.f32.mrf.mxu0
  %v536 = vadd.f32 0.0, %v535
  %537 = vdwg.mxu0
  %538 = vmatpush.bf16.msra.mxu0 0
  %539 = vmatpush.bf16.msra.mxu0 0
  %540 = vmatpush.bf16.msra.mxu0 0
  %541 = vmatpush.bf16.msra.mxu0 0
  %542 = vmatpush.bf16.msra.mxu0 0
  %543 = vmatpush.bf16.msra.mxu0 0
  %544 = vmatpush.bf16.msra.mxu0 0
  %545 = vmatpush.bf16.msra.mxu0 %v245
  %546 = vmatmul.bf16.gmra.mxu0 %v184
  %v547 = vpop.f32.mrf.mxu0
  %v548 = vadd.f32 0.0, %v547
  %v549 = vpop.f32.mrf.mxu0
  %v550 = vadd.f32 0.0, %v549
  %551 = vdwg.mxu0
  %552 = vmatpush.bf16.msra.mxu0 0
  %553 = vmatpush.bf16.msra.mxu0 0
  %554 = vmatpush.bf16.msra.mxu0 0
  %555 = vmatpush.bf16.msra.mxu0 0
  %556 = vmatpush.bf16.msra.mxu0 0
  %557 = vmatpush.bf16.msra.mxu0 0
  %558 = vmatpush.bf16.msra.mxu0 0
  %559 = vmatpush.bf16.msra.mxu0 %v248
  %560 = vmatmul.bf16.gmra.mxu0 %v184
  %v561 = vpop.f32.mrf.mxu0
  %v562 = vadd.f32 0.0, %v561
  %v563 = vpop.f32.mrf.mxu0
  %v564 = vadd.f32 0.0, %v563
  %565 = vdwg.mxu0
  %566 = vmatpush.bf16.msra.mxu0 0
  %567 = vmatpush.bf16.msra.mxu0 0
  %568 = vmatpush.bf16.msra.mxu0 0
  %569 = vmatpush.bf16.msra.mxu0 0
  %570 = vmatpush.bf16.msra.mxu0 0
  %571 = vmatpush.bf16.msra.mxu0 0
  %572 = vmatpush.bf16.msra.mxu0 0
  %573 = vmatpush.bf16.msra.mxu0 %v251
  %574 = vmatmul.bf16.gmra.mxu0 %v184
  %v575 = vpop.f32.mrf.mxu0
  %v576 = vadd.f32 0.0, %v575
  %v577 = vpop.f32.mrf.mxu0
  %v578 = vadd.f32 0.0, %v577
  %579 = vdwg.mxu0
  %580 = vmatpush.bf16.msra.mxu0 0
  %581 = vmatpush.bf16.msra.mxu0 0
  %582 = vmatpush.bf16.msra.mxu0 0
  %583 = vmatpush.bf16.msra.mxu0 0
  %584 = vmatpush.bf16.msra.mxu0 0
  %585 = vmatpush.bf16.msra.mxu0 0
  %586 = vmatpush.bf16.msra.mxu0 0
  %587 = vmatpush.bf16.msra.mxu0 %v254
  %588 = vmatmul.bf16.gmra.mxu0 %v184
  %v589 = vpop.f32.mrf.mxu0
  %v590 = vadd.f32 0.0, %v589
  %v591 = vpop.f32.mrf.mxu0
  %v592 = vadd.f32 0.0, %v591
  %593 = vdwg.mxu0
  %594 = vmatpush.bf16.msra.mxu0 0
  %595 = vmatpush.bf16.msra.mxu0 0
  %596 = vmatpush.bf16.msra.mxu0 0
  %597 = vmatpush.bf16.msra.mxu0 0
  %598 = vmatpush.bf16.msra.mxu0 0
  %599 = vmatpush.bf16.msra.mxu0 0
  %600 = vmatpush.bf16.msra.mxu0 0
  %601 = vmatpush.bf16.msra.mxu0 %v257
  %602 = vmatmul.bf16.gmra.mxu0 %v184
  %v603 = vpop.f32.mrf.mxu0
  %v604 = vadd.f32 0.0, %v603
  %v605 = vpop.f32.mrf.mxu0
  %v606 = vadd.f32 0.0, %v605
  %607 = vdwg.mxu0
  %608 = vmatpush.bf16.msra.mxu0 0
  %609 = vmatpush.bf16.msra.mxu0 0
  %610 = vmatpush.bf16.msra.mxu0 0
  %611 = vmatpush.bf16.msra.mxu0 0
  %612 = vmatpush.bf16.msra.mxu0 0
  %613 = vmatpush.bf16.msra.mxu0 0
  %614 = vmatpush.bf16.msra.mxu0 0
  %615 = vmatpush.bf16.msra.mxu0 %v260
  %616 = vmatmul.bf16.gmra.mxu0 %v184
  %v617 = vpop.f32.mrf.mxu0
  %v618 = vadd.f32 0.0, %v617
  %v619 = vpop.f32.mrf.mxu0
  %v620 = vadd.f32 0.0, %v619
  %621 = vdwg.mxu0
  %622 = vmatpush.bf16.msra.mxu0 0
  %623 = vmatpush.bf16.msra.mxu0 0
  %624 = vmatpush.bf16.msra.mxu0 0
  %625 = vmatpush.bf16.msra.mxu0 0
  %626 = vmatpush.bf16.msra.mxu0 0
  %627 = vmatpush.bf16.msra.mxu0 0
  %628 = vmatpush.bf16.msra.mxu0 0
  %629 = vmatpush.bf16.msra.mxu0 %v263
  %630 = vmatmul.bf16.gmra.mxu0 %v184
  %v631 = vpop.f32.mrf.mxu0
  %v632 = vadd.f32 0.0, %v631
  %v633 = vpop.f32.mrf.mxu0
  %v634 = vadd.f32 0.0, %v633
  %635 = vdwg.mxu0
  %636 = vmatpush.bf16.msra.mxu0 0
  %637 = vmatpush.bf16.msra.mxu0 0
  %638 = vmatpush.bf16.msra.mxu0 0
  %639 = vmatpush.bf16.msra.mxu0 0
  %640 = vmatpush.bf16.msra.mxu0 0
  %641 = vmatpush.bf16.msra.mxu0 0
  %642 = vmatpush.bf16.msra.mxu0 0
  %643 = vmatpush.bf16.msra.mxu0 %v266
  %644 = vmatmul.bf16.gmra.mxu0 %v184
  %v645 = vpop.f32.mrf.mxu0
  %v646 = vadd.f32 0.0, %v645
  %v647 = vpop.f32.mrf.mxu0
  %v648 = vadd.f32 0.0, %v647
  %649 = vdwg.mxu0
  %650 = vmatpush.bf16.msra.mxu0 0
  %651 = vmatpush.bf16.msra.mxu0 0
  %652 = vmatpush.bf16.msra.mxu0 0
  %653 = vmatpush.bf16.msra.mxu0 0
  %654 = vmatpush.bf16.msra.mxu0 0
  %655 = vmatpush.bf16.msra.mxu0 0
  %656 = vmatpush.bf16.msra.mxu0 0
  %657 = vmatpush.bf16.msra.mxu0 %v269
  %658 = vmatmul.bf16.gmra.mxu0 %v184
  %v659 = vpop.f32.mrf.mxu0
  %v660 = vadd.f32 0.0, %v659
  %v661 = vpop.f32.mrf.mxu0
  %v662 = vadd.f32 0.0, %v661
  %663 = vdwg.mxu0
  %664 = vmatpush.bf16.msra.mxu0 0
  %665 = vmatpush.bf16.msra.mxu0 0
  %666 = vmatpush.bf16.msra.mxu0 0
  %667 = vmatpush.bf16.msra.mxu0 0
  %668 = vmatpush.bf16.msra.mxu0 0
  %669 = vmatpush.bf16.msra.mxu0 0
  %670 = vmatpush.bf16.msra.mxu0 0
  %671 = vmatpush.bf16.msra.mxu0 %v272
  %672 = vmatmul.bf16.gmra.mxu0 %v184
  %v673 = vpop.f32.mrf.mxu0
  %v674 = vadd.f32 0.0, %v673
  %v675 = vpop.f32.mrf.mxu0
  %v676 = vadd.f32 0.0, %v675
  %677 = vdwg.mxu0
  %678 = vmatpush.bf16.msra.mxu0 0
  %679 = vmatpush.bf16.msra.mxu0 0
  %680 = vmatpush.bf16.msra.mxu0 0
  %681 = vmatpush.bf16.msra.mxu0 0
  %682 = vmatpush.bf16.msra.mxu0 0
  %683 = vmatpush.bf16.msra.mxu0 0
  %684 = vmatpush.bf16.msra.mxu0 0
  %685 = vmatpush.bf16.msra.mxu0 %v275
  %686 = vmatmul.bf16.gmra.mxu0 %v184
  %v687 = vpop.f32.mrf.mxu0
  %v688 = vadd.f32 0.0, %v687
  %v689 = vpop.f32.mrf.mxu0
  %v690 = vadd.f32 0.0, %v689
  %691 = vdwg.mxu0
  %692 = vmatpush.bf16.msra.mxu0 0
  %693 = vmatpush.bf16.msra.mxu0 0
  %694 = vmatpush.bf16.msra.mxu0 0
  %695 = vmatpush.bf16.msra.mxu0 0
  %696 = vmatpush.bf16.msra.mxu0 0
  %697 = vmatpush.bf16.msra.mxu0 0
  %698 = vmatpush.bf16.msra.mxu0 0
  %699 = vmatpush.bf16.msra.mxu0 %v278
  %700 = vmatmul.bf16.gmra.mxu0 %v184
  %v701 = vpop.f32.mrf.mxu0
  %v702 = vadd.f32 0.0, %v701
  %v703 = vpop.f32.mrf.mxu0
  %v704 = vadd.f32 0.0, %v703
  %705 = vdwg.mxu0
  %706 = vmatpush.bf16.msra.mxu0 0
  %707 = vmatpush.bf16.msra.mxu0 0
  %708 = vmatpush.bf16.msra.mxu0 0
  %709 = vmatpush.bf16.msra.mxu0 0
  %710 = vmatpush.bf16.msra.mxu0 0
  %711 = vmatpush.bf16.msra.mxu0 0
  %712 = vmatpush.bf16.msra.mxu0 0
  %713 = vmatpush.bf16.msra.mxu0 %v281
  %714 = vmatmul.bf16.gmra.mxu0 %v184
  %v715 = vpop.f32.mrf.mxu0
  %v716 = vadd.f32 0.0, %v715
  %v717 = vpop.f32.mrf.mxu0
  %v718 = vadd.f32 0.0, %v717
  %719 = vdwg.mxu0
  %720 = vmatpush.bf16.msra.mxu0 0
  %721 = vmatpush.bf16.msra.mxu0 0
  %722 = vmatpush.bf16.msra.mxu0 0
  %723 = vmatpush.bf16.msra.mxu0 0
  %724 = vmatpush.bf16.msra.mxu0 0
  %725 = vmatpush.bf16.msra.mxu0 0
  %726 = vmatpush.bf16.msra.mxu0 0
  %727 = vmatpush.bf16.msra.mxu0 %v284
  %728 = vmatmul.bf16.gmra.mxu0 %v184
  %v729 = vpop.f32.mrf.mxu0
  %v730 = vadd.f32 0.0, %v729
  %v731 = vpop.f32.mrf.mxu0
  %v732 = vadd.f32 0.0, %v731
  %733 = vdwg.mxu0
  %s734 = scalar_lea.vmem %s1, 256
  %v735 = vld [vmem:[%s734] sm:$0xff]
  %v736 = vld [vmem:[%s734 + $0x8] sm:$0xff]
  %v737 = vld [vmem:[%s734 + $0x10] sm:$0xff]
  %v738 = vld [vmem:[%s734 + $0x18] sm:$0xff]
  %v739 = vld [vmem:[%s734 + $0x20] sm:$0xff]
  %v740 = vld [vmem:[%s734 + $0x28] sm:$0xff]
  %v741 = vld [vmem:[%s734 + $0x30] sm:$0xff]
  %v742 = vld [vmem:[%s734 + $0x38] sm:$0xff]
  %v743 = vld [vmem:[%s734 + $0x40] sm:$0xff]
  %v744 = vld [vmem:[%s734 + $0x48] sm:$0xff]
  %v745 = vld [vmem:[%s734 + $0x50] sm:$0xff]
  %v746 = vld [vmem:[%s734 + $0x58] sm:$0xff]
  %v747 = vld [vmem:[%s734 + $0x60] sm:$0xff]
  %v748 = vld [vmem:[%s734 + $0x68] sm:$0xff]
  %v749 = vld [vmem:[%s734 + $0x70] sm:$0xff]
  %v750 = vld [vmem:[%s734 + $0x78] sm:$0xff]
  %v751 = vld [vmem:[%s734 + $0x80] sm:$0x11]
  %v752 = vld [vmem:[%s734 + $0x88] sm:$0x11]
  %v753 = vld [vmem:[%s734 + $0x90] sm:$0x11]
  %v754 = vld [vmem:[%s734 + $0x98] sm:$0x11]
  %v755 = vld [vmem:[%s734 + $0xa0] sm:$0x11]
  %v756 = vld [vmem:[%s734 + $0xa8] sm:$0x11]
  %v757 = vld [vmem:[%s734 + $0xb0] sm:$0x11]
  %v758 = vld [vmem:[%s734 + $0xb8] sm:$0x11]
  %v759 = vld [vmem:[%s734 + $0xc0] sm:$0x11]
  %v760 = vld [vmem:[%s734 + $0xc8] sm:$0x11]
  %v761 = vld [vmem:[%s734 + $0xd0] sm:$0x11]
  %v762 = vld [vmem:[%s734 + $0xd8] sm:$0x11]
  %v763 = vld [vmem:[%s734 + $0xe0] sm:$0x11]
  %v764 = vld [vmem:[%s734 + $0xe8] sm:$0x11]
  %v765 = vld [vmem:[%s734 + $0xf0] sm:$0x11]
  %v766 = vld [vmem:[%s734 + $0xf8] sm:$0x11]
  %v799 = vunpack.c.l.b16 %v735
  %v800 = vunpack.c.h.b16 %v735
  %v801 = vunpack.c.l.b16 %v736
  %v802 = vunpack.c.h.b16 %v736
  %v803 = vunpack.c.l.b16 %v737
  %v804 = vunpack.c.h.b16 %v737
  %v805 = vunpack.c.l.b16 %v738
  %v806 = vunpack.c.h.b16 %v738
  %v807 = vunpack.c.l.b16 %v739
  %v808 = vunpack.c.h.b16 %v739
  %v809 = vunpack.c.l.b16 %v740
  %v810 = vunpack.c.h.b16 %v740
  %v811 = vunpack.c.l.b16 %v741
  %v812 = vunpack.c.h.b16 %v741
  %v813 = vunpack.c.l.b16 %v742
  %v814 = vunpack.c.h.b16 %v742
  %v815 = vunpack.c.l.b16 %v743
  %v816 = vunpack.c.h.b16 %v743
  %v817 = vunpack.c.l.b16 %v744
  %v818 = vunpack.c.h.b16 %v744
  %v819 = vunpack.c.l.b16 %v745
  %v820 = vunpack.c.h.b16 %v745
  %v821 = vunpack.c.l.b16 %v746
  %v822 = vunpack.c.h.b16 %v746
  %v823 = vunpack.c.l.b16 %v747
  %v824 = vunpack.c.h.b16 %v747
  %v825 = vunpack.c.l.b16 %v748
  %v826 = vunpack.c.h.b16 %v748
  %v827 = vunpack.c.l.b16 %v749
  %v828 = vunpack.c.h.b16 %v749
  %v829 = vunpack.c.l.b16 %v750
  %v830 = vunpack.c.h.b16 %v750
  %v831 = vunpack.c.l.b16 %v751
  %v832 = vunpack.c.h.b16 %v751
  %v833 = vunpack.c.l.b16 %v752
  %v834 = vunpack.c.h.b16 %v752
  %v835 = vunpack.c.l.b16 %v753
  %v836 = vunpack.c.h.b16 %v753
  %v837 = vunpack.c.l.b16 %v754
  %v838 = vunpack.c.h.b16 %v754
  %v839 = vunpack.c.l.b16 %v755
  %v840 = vunpack.c.h.b16 %v755
  %v841 = vunpack.c.l.b16 %v756
  %v842 = vunpack.c.h.b16 %v756
  %v843 = vunpack.c.l.b16 %v757
  %v844 = vunpack.c.h.b16 %v757
  %v845 = vunpack.c.l.b16 %v758
  %v846 = vunpack.c.h.b16 %v758
  %v847 = vunpack.c.l.b16 %v759
  %v848 = vunpack.c.h.b16 %v759
  %v849 = vunpack.c.l.b16 %v760
  %v850 = vunpack.c.h.b16 %v760
  %v851 = vunpack.c.l.b16 %v761
  %v852 = vunpack.c.h.b16 %v761
  %v853 = vunpack.c.l.b16 %v762
  %v854 = vunpack.c.h.b16 %v762
  %v855 = vunpack.c.l.b16 %v763
  %v856 = vunpack.c.h.b16 %v763
  %v857 = vunpack.c.l.b16 %v764
  %v858 = vunpack.c.h.b16 %v764
  %v859 = vunpack.c.l.b16 %v765
  %v860 = vunpack.c.h.b16 %v765
  %v861 = vunpack.c.l.b16 %v766
  %v862 = vunpack.c.h.b16 %v766
  %v863 = vpack.c.b16 %v831, %v799
  %v864 = vpack.c.b16 %v832, %v800
  %v865 = vpack.c.b16 %v833, %v801
  %v866 = vpack.c.b16 %v834, %v802
  %v867 = vpack.c.b16 %v835, %v803
  %v868 = vpack.c.b16 %v836, %v804
  %v869 = vpack.c.b16 %v837, %v805
  %v870 = vpack.c.b16 %v838, %v806
  %v871 = vpack.c.b16 %v839, %v807
  %v872 = vpack.c.b16 %v840, %v808
  %v873 = vpack.c.b16 %v841, %v809
  %v874 = vpack.c.b16 %v842, %v810
  %v875 = vpack.c.b16 %v843, %v811
  %v876 = vpack.c.b16 %v844, %v812
  %v877 = vpack.c.b16 %v845, %v813
  %v878 = vpack.c.b16 %v846, %v814
  %v879 = vpack.c.b16 %v847, %v815
  %v880 = vpack.c.b16 %v848, %v816
  %v881 = vpack.c.b16 %v849, %v817
  %v882 = vpack.c.b16 %v850, %v818
  %v883 = vpack.c.b16 %v851, %v819
  %v884 = vpack.c.b16 %v852, %v820
  %v885 = vpack.c.b16 %v853, %v821
  %v886 = vpack.c.b16 %v854, %v822
  %v887 = vpack.c.b16 %v855, %v823
  %v888 = vpack.c.b16 %v856, %v824
  %v889 = vpack.c.b16 %v857, %v825
  %v890 = vpack.c.b16 %v858, %v826
  %v891 = vpack.c.b16 %v859, %v827
  %v892 = vpack.c.b16 %v860, %v828
  %v893 = vpack.c.b16 %v861, %v829
  %v894 = vpack.c.b16 %v862, %v830
  %v896 = vand.u32 %v863, %v189
  %v899 = vand.u32 %v864, %v189
  %v902 = vand.u32 %v865, %v189
  %v905 = vand.u32 %v866, %v189
  %v908 = vand.u32 %v867, %v189
  %v911 = vand.u32 %v868, %v189
  %v914 = vand.u32 %v869, %v189
  %v917 = vand.u32 %v870, %v189
  %v920 = vand.u32 %v871, %v189
  %v923 = vand.u32 %v872, %v189
  %v926 = vand.u32 %v873, %v189
  %v929 = vand.u32 %v874, %v189
  %v932 = vand.u32 %v875, %v189
  %v935 = vand.u32 %v876, %v189
  %v938 = vand.u32 %v877, %v189
  %v941 = vand.u32 %v878, %v189
  %v944 = vand.u32 %v879, %v189
  %v947 = vand.u32 %v880, %v189
  %v950 = vand.u32 %v881, %v189
  %v953 = vand.u32 %v882, %v189
  %v956 = vand.u32 %v883, %v189
  %v959 = vand.u32 %v884, %v189
  %v962 = vand.u32 %v885, %v189
  %v965 = vand.u32 %v886, %v189
  %v968 = vand.u32 %v887, %v189
  %v971 = vand.u32 %v888, %v189
  %v974 = vand.u32 %v889, %v189
  %v977 = vand.u32 %v890, %v189
  %v980 = vand.u32 %v891, %v189
  %v983 = vand.u32 %v892, %v189
  %v986 = vand.u32 %v893, %v189
  %v989 = vand.u32 %v894, %v189
  %991 = vmatpush.bf16.msra.mxu0 0
  %992 = vmatpush.bf16.msra.mxu0 0
  %993 = vmatpush.bf16.msra.mxu0 0
  %994 = vmatpush.bf16.msra.mxu0 0
  %995 = vmatpush.bf16.msra.mxu0 0
  %996 = vmatpush.bf16.msra.mxu0 0
  %997 = vmatpush.bf16.msra.mxu0 0
  %998 = vmatpush.bf16.msra.mxu0 %v896
  %999 = vmatmul.bf16.gmra.mxu0 %v184
  %v1000 = vpop.f32.mrf.mxu0
  %v1001 = vadd.f32 0.0, %v1000
  %v1002 = vpop.f32.mrf.mxu0
  %v1003 = vadd.f32 0.0, %v1002
  %1004 = vdwg.mxu0
  %1005 = vmatpush.bf16.msra.mxu0 0
  %1006 = vmatpush.bf16.msra.mxu0 0
  %1007 = vmatpush.bf16.msra.mxu0 0
  %1008 = vmatpush.bf16.msra.mxu0 0
  %1009 = vmatpush.bf16.msra.mxu0 0
  %1010 = vmatpush.bf16.msra.mxu0 0
  %1011 = vmatpush.bf16.msra.mxu0 0
  %1012 = vmatpush.bf16.msra.mxu0 %v899
  %1013 = vmatmul.bf16.gmra.mxu0 %v184
  %v1014 = vpop.f32.mrf.mxu0
  %v1015 = vadd.f32 0.0, %v1014
  %v1016 = vpop.f32.mrf.mxu0
  %v1017 = vadd.f32 0.0, %v1016
  %1018 = vdwg.mxu0
  %1019 = vmatpush.bf16.msra.mxu0 0
  %1020 = vmatpush.bf16.msra.mxu0 0
  %1021 = vmatpush.bf16.msra.mxu0 0
  %1022 = vmatpush.bf16.msra.mxu0 0
  %1023 = vmatpush.bf16.msra.mxu0 0
  %1024 = vmatpush.bf16.msra.mxu0 0
  %1025 = vmatpush.bf16.msra.mxu0 0
  %1026 = vmatpush.bf16.msra.mxu0 %v902
  %1027 = vmatmul.bf16.gmra.mxu0 %v184
  %v1028 = vpop.f32.mrf.mxu0
  %v1029 = vadd.f32 0.0, %v1028
  %v1030 = vpop.f32.mrf.mxu0
  %v1031 = vadd.f32 0.0, %v1030
  %1032 = vdwg.mxu0
  %1033 = vmatpush.bf16.msra.mxu0 0
  %1034 = vmatpush.bf16.msra.mxu0 0
  %1035 = vmatpush.bf16.msra.mxu0 0
  %1036 = vmatpush.bf16.msra.mxu0 0
  %1037 = vmatpush.bf16.msra.mxu0 0
  %1038 = vmatpush.bf16.msra.mxu0 0
  %1039 = vmatpush.bf16.msra.mxu0 0
  %1040 = vmatpush.bf16.msra.mxu0 %v905
  %1041 = vmatmul.bf16.gmra.mxu0 %v184
  %v1042 = vpop.f32.mrf.mxu0
  %v1043 = vadd.f32 0.0, %v1042
  %v1044 = vpop.f32.mrf.mxu0
  %v1045 = vadd.f32 0.0, %v1044
  %1046 = vdwg.mxu0
  %1047 = vmatpush.bf16.msra.mxu0 0
  %1048 = vmatpush.bf16.msra.mxu0 0
  %1049 = vmatpush.bf16.msra.mxu0 0
  %1050 = vmatpush.bf16.msra.mxu0 0
  %1051 = vmatpush.bf16.msra.mxu0 0
  %1052 = vmatpush.bf16.msra.mxu0 0
  %1053 = vmatpush.bf16.msra.mxu0 0
  %1054 = vmatpush.bf16.msra.mxu0 %v908
  %1055 = vmatmul.bf16.gmra.mxu0 %v184
  %v1056 = vpop.f32.mrf.mxu0
  %v1057 = vadd.f32 0.0, %v1056
  %v1058 = vpop.f32.mrf.mxu0
  %v1059 = vadd.f32 0.0, %v1058
  %1060 = vdwg.mxu0
  %1061 = vmatpush.bf16.msra.mxu0 0
  %1062 = vmatpush.bf16.msra.mxu0 0
  %1063 = vmatpush.bf16.msra.mxu0 0
  %1064 = vmatpush.bf16.msra.mxu0 0
  %1065 = vmatpush.bf16.msra.mxu0 0
  %1066 = vmatpush.bf16.msra.mxu0 0
  %1067 = vmatpush.bf16.msra.mxu0 0
  %1068 = vmatpush.bf16.msra.mxu0 %v911
  %1069 = vmatmul.bf16.gmra.mxu0 %v184
  %v1070 = vpop.f32.mrf.mxu0
  %v1071 = vadd.f32 0.0, %v1070
  %v1072 = vpop.f32.mrf.mxu0
  %v1073 = vadd.f32 0.0, %v1072
  %1074 = vdwg.mxu0
  %1075 = vmatpush.bf16.msra.mxu0 0
  %1076 = vmatpush.bf16.msra.mxu0 0
  %1077 = vmatpush.bf16.msra.mxu0 0
  %1078 = vmatpush.bf16.msra.mxu0 0
  %1079 = vmatpush.bf16.msra.mxu0 0
  %1080 = vmatpush.bf16.msra.mxu0 0
  %1081 = vmatpush.bf16.msra.mxu0 0
  %1082 = vmatpush.bf16.msra.mxu0 %v914
  %1083 = vmatmul.bf16.gmra.mxu0 %v184
  %v1084 = vpop.f32.mrf.mxu0
  %v1085 = vadd.f32 0.0, %v1084
  %v1086 = vpop.f32.mrf.mxu0
  %v1087 = vadd.f32 0.0, %v1086
  %1088 = vdwg.mxu0
  %1089 = vmatpush.bf16.msra.mxu0 0
  %1090 = vmatpush.bf16.msra.mxu0 0
  %1091 = vmatpush.bf16.msra.mxu0 0
  %1092 = vmatpush.bf16.msra.mxu0 0
  %1093 = vmatpush.bf16.msra.mxu0 0
  %1094 = vmatpush.bf16.msra.mxu0 0
  %1095 = vmatpush.bf16.msra.mxu0 0
  %1096 = vmatpush.bf16.msra.mxu0 %v917
  %1097 = vmatmul.bf16.gmra.mxu0 %v184
  %v1098 = vpop.f32.mrf.mxu0
  %v1099 = vadd.f32 0.0, %v1098
  %v1100 = vpop.f32.mrf.mxu0
  %v1101 = vadd.f32 0.0, %v1100
  %1102 = vdwg.mxu0
  %1103 = vmatpush.bf16.msra.mxu0 0
  %1104 = vmatpush.bf16.msra.mxu0 0
  %1105 = vmatpush.bf16.msra.mxu0 0
  %1106 = vmatpush.bf16.msra.mxu0 0
  %1107 = vmatpush.bf16.msra.mxu0 0
  %1108 = vmatpush.bf16.msra.mxu0 0
  %1109 = vmatpush.bf16.msra.mxu0 0
  %1110 = vmatpush.bf16.msra.mxu0 %v920
  %1111 = vmatmul.bf16.gmra.mxu0 %v184
  %v1112 = vpop.f32.mrf.mxu0
  %v1113 = vadd.f32 0.0, %v1112
  %v1114 = vpop.f32.mrf.mxu0
  %v1115 = vadd.f32 0.0, %v1114
  %1116 = vdwg.mxu0
  %1117 = vmatpush.bf16.msra.mxu0 0
  %1118 = vmatpush.bf16.msra.mxu0 0
  %1119 = vmatpush.bf16.msra.mxu0 0
  %1120 = vmatpush.bf16.msra.mxu0 0
  %1121 = vmatpush.bf16.msra.mxu0 0
  %1122 = vmatpush.bf16.msra.mxu0 0
  %1123 = vmatpush.bf16.msra.mxu0 0
  %1124 = vmatpush.bf16.msra.mxu0 %v923
  %1125 = vmatmul.bf16.gmra.mxu0 %v184
  %v1126 = vpop.f32.mrf.mxu0
  %v1127 = vadd.f32 0.0, %v1126
  %v1128 = vpop.f32.mrf.mxu0
  %v1129 = vadd.f32 0.0, %v1128
  %1130 = vdwg.mxu0
  %1131 = vmatpush.bf16.msra.mxu0 0
  %1132 = vmatpush.bf16.msra.mxu0 0
  %1133 = vmatpush.bf16.msra.mxu0 0
  %1134 = vmatpush.bf16.msra.mxu0 0
  %1135 = vmatpush.bf16.msra.mxu0 0
  %1136 = vmatpush.bf16.msra.mxu0 0
  %1137 = vmatpush.bf16.msra.mxu0 0
  %1138 = vmatpush.bf16.msra.mxu0 %v926
  %1139 = vmatmul.bf16.gmra.mxu0 %v184
  %v1140 = vpop.f32.mrf.mxu0
  %v1141 = vadd.f32 0.0, %v1140
  %v1142 = vpop.f32.mrf.mxu0
  %v1143 = vadd.f32 0.0, %v1142
  %1144 = vdwg.mxu0
  %1145 = vmatpush.bf16.msra.mxu0 0
  %1146 = vmatpush.bf16.msra.mxu0 0
  %1147 = vmatpush.bf16.msra.mxu0 0
  %1148 = vmatpush.bf16.msra.mxu0 0
  %1149 = vmatpush.bf16.msra.mxu0 0
  %1150 = vmatpush.bf16.msra.mxu0 0
  %1151 = vmatpush.bf16.msra.mxu0 0
  %1152 = vmatpush.bf16.msra.mxu0 %v929
  %1153 = vmatmul.bf16.gmra.mxu0 %v184
  %v1154 = vpop.f32.mrf.mxu0
  %v1155 = vadd.f32 0.0, %v1154
  %v1156 = vpop.f32.mrf.mxu0
  %v1157 = vadd.f32 0.0, %v1156
  %1158 = vdwg.mxu0
  %1159 = vmatpush.bf16.msra.mxu0 0
  %1160 = vmatpush.bf16.msra.mxu0 0
  %1161 = vmatpush.bf16.msra.mxu0 0
  %1162 = vmatpush.bf16.msra.mxu0 0
  %1163 = vmatpush.bf16.msra.mxu0 0
  %1164 = vmatpush.bf16.msra.mxu0 0
  %1165 = vmatpush.bf16.msra.mxu0 0
  %1166 = vmatpush.bf16.msra.mxu0 %v932
  %1167 = vmatmul.bf16.gmra.mxu0 %v184
  %v1168 = vpop.f32.mrf.mxu0
  %v1169 = vadd.f32 0.0, %v1168
  %v1170 = vpop.f32.mrf.mxu0
  %v1171 = vadd.f32 0.0, %v1170
  %1172 = vdwg.mxu0
  %1173 = vmatpush.bf16.msra.mxu0 0
  %1174 = vmatpush.bf16.msra.mxu0 0
  %1175 = vmatpush.bf16.msra.mxu0 0
  %1176 = vmatpush.bf16.msra.mxu0 0
  %1177 = vmatpush.bf16.msra.mxu0 0
  %1178 = vmatpush.bf16.msra.mxu0 0
  %1179 = vmatpush.bf16.msra.mxu0 0
  %1180 = vmatpush.bf16.msra.mxu0 %v935
  %1181 = vmatmul.bf16.gmra.mxu0 %v184
  %v1182 = vpop.f32.mrf.mxu0
  %v1183 = vadd.f32 0.0, %v1182
  %v1184 = vpop.f32.mrf.mxu0
  %v1185 = vadd.f32 0.0, %v1184
  %1186 = vdwg.mxu0
  %1187 = vmatpush.bf16.msra.mxu0 0
  %1188 = vmatpush.bf16.msra.mxu0 0
  %1189 = vmatpush.bf16.msra.mxu0 0
  %1190 = vmatpush.bf16.msra.mxu0 0
  %1191 = vmatpush.bf16.msra.mxu0 0
  %1192 = vmatpush.bf16.msra.mxu0 0
  %1193 = vmatpush.bf16.msra.mxu0 0
  %1194 = vmatpush.bf16.msra.mxu0 %v938
  %1195 = vmatmul.bf16.gmra.mxu0 %v184
  %v1196 = vpop.f32.mrf.mxu0
  %v1197 = vadd.f32 0.0, %v1196
  %v1198 = vpop.f32.mrf.mxu0
  %v1199 = vadd.f32 0.0, %v1198
  %1200 = vdwg.mxu0
  %1201 = vmatpush.bf16.msra.mxu0 0
  %1202 = vmatpush.bf16.msra.mxu0 0
  %1203 = vmatpush.bf16.msra.mxu0 0
  %1204 = vmatpush.bf16.msra.mxu0 0
  %1205 = vmatpush.bf16.msra.mxu0 0
  %1206 = vmatpush.bf16.msra.mxu0 0
  %1207 = vmatpush.bf16.msra.mxu0 0
  %1208 = vmatpush.bf16.msra.mxu0 %v941
  %1209 = vmatmul.bf16.gmra.mxu0 %v184
  %v1210 = vpop.f32.mrf.mxu0
  %v1211 = vadd.f32 0.0, %v1210
  %v1212 = vpop.f32.mrf.mxu0
  %v1213 = vadd.f32 0.0, %v1212
  %1214 = vdwg.mxu0
  %1215 = vmatpush.bf16.msra.mxu0 0
  %1216 = vmatpush.bf16.msra.mxu0 0
  %1217 = vmatpush.bf16.msra.mxu0 0
  %1218 = vmatpush.bf16.msra.mxu0 0
  %1219 = vmatpush.bf16.msra.mxu0 0
  %1220 = vmatpush.bf16.msra.mxu0 0
  %1221 = vmatpush.bf16.msra.mxu0 0
  %1222 = vmatpush.bf16.msra.mxu0 %v944
  %1223 = vmatmul.bf16.gmra.mxu0 %v184
  %v1224 = vpop.f32.mrf.mxu0
  %v1225 = vadd.f32 0.0, %v1224
  %v1226 = vpop.f32.mrf.mxu0
  %v1227 = vadd.f32 0.0, %v1226
  %1228 = vdwg.mxu0
  %1229 = vmatpush.bf16.msra.mxu0 0
  %1230 = vmatpush.bf16.msra.mxu0 0
  %1231 = vmatpush.bf16.msra.mxu0 0
  %1232 = vmatpush.bf16.msra.mxu0 0
  %1233 = vmatpush.bf16.msra.mxu0 0
  %1234 = vmatpush.bf16.msra.mxu0 0
  %1235 = vmatpush.bf16.msra.mxu0 0
  %1236 = vmatpush.bf16.msra.mxu0 %v947
  %1237 = vmatmul.bf16.gmra.mxu0 %v184
  %v1238 = vpop.f32.mrf.mxu0
  %v1239 = vadd.f32 0.0, %v1238
  %v1240 = vpop.f32.mrf.mxu0
  %v1241 = vadd.f32 0.0, %v1240
  %1242 = vdwg.mxu0
  %1243 = vmatpush.bf16.msra.mxu0 0
  %1244 = vmatpush.bf16.msra.mxu0 0
  %1245 = vmatpush.bf16.msra.mxu0 0
  %1246 = vmatpush.bf16.msra.mxu0 0
  %1247 = vmatpush.bf16.msra.mxu0 0
  %1248 = vmatpush.bf16.msra.mxu0 0
  %1249 = vmatpush.bf16.msra.mxu0 0
  %1250 = vmatpush.bf16.msra.mxu0 %v950
  %1251 = vmatmul.bf16.gmra.mxu0 %v184
  %v1252 = vpop.f32.mrf.mxu0
  %v1253 = vadd.f32 0.0, %v1252
  %v1254 = vpop.f32.mrf.mxu0
  %v1255 = vadd.f32 0.0, %v1254
  %1256 = vdwg.mxu0
  %1257 = vmatpush.bf16.msra.mxu0 0
  %1258 = vmatpush.bf16.msra.mxu0 0
  %1259 = vmatpush.bf16.msra.mxu0 0
  %1260 = vmatpush.bf16.msra.mxu0 0
  %1261 = vmatpush.bf16.msra.mxu0 0
  %1262 = vmatpush.bf16.msra.mxu0 0
  %1263 = vmatpush.bf16.msra.mxu0 0
  %1264 = vmatpush.bf16.msra.mxu0 %v953
  %1265 = vmatmul.bf16.gmra.mxu0 %v184
  %v1266 = vpop.f32.mrf.mxu0
  %v1267 = vadd.f32 0.0, %v1266
  %v1268 = vpop.f32.mrf.mxu0
  %v1269 = vadd.f32 0.0, %v1268
  %1270 = vdwg.mxu0
  %1271 = vmatpush.bf16.msra.mxu0 0
  %1272 = vmatpush.bf16.msra.mxu0 0
  %1273 = vmatpush.bf16.msra.mxu0 0
  %1274 = vmatpush.bf16.msra.mxu0 0
  %1275 = vmatpush.bf16.msra.mxu0 0
  %1276 = vmatpush.bf16.msra.mxu0 0
  %1277 = vmatpush.bf16.msra.mxu0 0
  %1278 = vmatpush.bf16.msra.mxu0 %v956
  %1279 = vmatmul.bf16.gmra.mxu0 %v184
  %v1280 = vpop.f32.mrf.mxu0
  %v1281 = vadd.f32 0.0, %v1280
  %v1282 = vpop.f32.mrf.mxu0
  %v1283 = vadd.f32 0.0, %v1282
  %1284 = vdwg.mxu0
  %1285 = vmatpush.bf16.msra.mxu0 0
  %1286 = vmatpush.bf16.msra.mxu0 0
  %1287 = vmatpush.bf16.msra.mxu0 0
  %1288 = vmatpush.bf16.msra.mxu0 0
  %1289 = vmatpush.bf16.msra.mxu0 0
  %1290 = vmatpush.bf16.msra.mxu0 0
  %1291 = vmatpush.bf16.msra.mxu0 0
  %1292 = vmatpush.bf16.msra.mxu0 %v959
  %1293 = vmatmul.bf16.gmra.mxu0 %v184
  %v1294 = vpop.f32.mrf.mxu0
  %v1295 = vadd.f32 0.0, %v1294
  %v1296 = vpop.f32.mrf.mxu0
  %v1297 = vadd.f32 0.0, %v1296
  %1298 = vdwg.mxu0
  %1299 = vmatpush.bf16.msra.mxu0 0
  %1300 = vmatpush.bf16.msra.mxu0 0
  %1301 = vmatpush.bf16.msra.mxu0 0
  %1302 = vmatpush.bf16.msra.mxu0 0
  %1303 = vmatpush.bf16.msra.mxu0 0
  %1304 = vmatpush.bf16.msra.mxu0 0
  %1305 = vmatpush.bf16.msra.mxu0 0
  %1306 = vmatpush.bf16.msra.mxu0 %v962
  %1307 = vmatmul.bf16.gmra.mxu0 %v184
  %v1308 = vpop.f32.mrf.mxu0
  %v1309 = vadd.f32 0.0, %v1308
  %v1310 = vpop.f32.mrf.mxu0
  %v1311 = vadd.f32 0.0, %v1310
  %1312 = vdwg.mxu0
  %1313 = vmatpush.bf16.msra.mxu0 0
  %1314 = vmatpush.bf16.msra.mxu0 0
  %1315 = vmatpush.bf16.msra.mxu0 0
  %1316 = vmatpush.bf16.msra.mxu0 0
  %1317 = vmatpush.bf16.msra.mxu0 0
  %1318 = vmatpush.bf16.msra.mxu0 0
  %1319 = vmatpush.bf16.msra.mxu0 0
  %1320 = vmatpush.bf16.msra.mxu0 %v965
  %1321 = vmatmul.bf16.gmra.mxu0 %v184
  %v1322 = vpop.f32.mrf.mxu0
  %v1323 = vadd.f32 0.0, %v1322
  %v1324 = vpop.f32.mrf.mxu0
  %v1325 = vadd.f32 0.0, %v1324
  %1326 = vdwg.mxu0
  %1327 = vmatpush.bf16.msra.mxu0 0
  %1328 = vmatpush.bf16.msra.mxu0 0
  %1329 = vmatpush.bf16.msra.mxu0 0
  %1330 = vmatpush.bf16.msra.mxu0 0
  %1331 = vmatpush.bf16.msra.mxu0 0
  %1332 = vmatpush.bf16.msra.mxu0 0
  %1333 = vmatpush.bf16.msra.mxu0 0
  %1334 = vmatpush.bf16.msra.mxu0 %v968
  %1335 = vmatmul.bf16.gmra.mxu0 %v184
  %v1336 = vpop.f32.mrf.mxu0
  %v1337 = vadd.f32 0.0, %v1336
  %v1338 = vpop.f32.mrf.mxu0
  %v1339 = vadd.f32 0.0, %v1338
  %1340 = vdwg.mxu0
  %1341 = vmatpush.bf16.msra.mxu0 0
  %1342 = vmatpush.bf16.msra.mxu0 0
  %1343 = vmatpush.bf16.msra.mxu0 0
  %1344 = vmatpush.bf16.msra.mxu0 0
  %1345 = vmatpush.bf16.msra.mxu0 0
  %1346 = vmatpush.bf16.msra.mxu0 0
  %1347 = vmatpush.bf16.msra.mxu0 0
  %1348 = vmatpush.bf16.msra.mxu0 %v971
  %1349 = vmatmul.bf16.gmra.mxu0 %v184
  %v1350 = vpop.f32.mrf.mxu0
  %v1351 = vadd.f32 0.0, %v1350
  %v1352 = vpop.f32.mrf.mxu0
  %v1353 = vadd.f32 0.0, %v1352
  %1354 = vdwg.mxu0
  %1355 = vmatpush.bf16.msra.mxu0 0
  %1356 = vmatpush.bf16.msra.mxu0 0
  %1357 = vmatpush.bf16.msra.mxu0 0
  %1358 = vmatpush.bf16.msra.mxu0 0
  %1359 = vmatpush.bf16.msra.mxu0 0
  %1360 = vmatpush.bf16.msra.mxu0 0
  %1361 = vmatpush.bf16.msra.mxu0 0
  %1362 = vmatpush.bf16.msra.mxu0 %v974
  %1363 = vmatmul.bf16.gmra.mxu0 %v184
  %v1364 = vpop.f32.mrf.mxu0
  %v1365 = vadd.f32 0.0, %v1364
  %v1366 = vpop.f32.mrf.mxu0
  %v1367 = vadd.f32 0.0, %v1366
  %1368 = vdwg.mxu0
  %1369 = vmatpush.bf16.msra.mxu0 0
  %1370 = vmatpush.bf16.msra.mxu0 0
  %1371 = vmatpush.bf16.msra.mxu0 0
  %1372 = vmatpush.bf16.msra.mxu0 0
  %1373 = vmatpush.bf16.msra.mxu0 0
  %1374 = vmatpush.bf16.msra.mxu0 0
  %1375 = vmatpush.bf16.msra.mxu0 0
  %1376 = vmatpush.bf16.msra.mxu0 %v977
  %1377 = vmatmul.bf16.gmra.mxu0 %v184
  %v1378 = vpop.f32.mrf.mxu0
  %v1379 = vadd.f32 0.0, %v1378
  %v1380 = vpop.f32.mrf.mxu0
  %v1381 = vadd.f32 0.0, %v1380
  %1382 = vdwg.mxu0
  %1383 = vmatpush.bf16.msra.mxu0 0
  %1384 = vmatpush.bf16.msra.mxu0 0
  %1385 = vmatpush.bf16.msra.mxu0 0
  %1386 = vmatpush.bf16.msra.mxu0 0
  %1387 = vmatpush.bf16.msra.mxu0 0
  %1388 = vmatpush.bf16.msra.mxu0 0
  %1389 = vmatpush.bf16.msra.mxu0 0
  %1390 = vmatpush.bf16.msra.mxu0 %v980
  %1391 = vmatmul.bf16.gmra.mxu0 %v184
  %v1392 = vpop.f32.mrf.mxu0
  %v1393 = vadd.f32 0.0, %v1392
  %v1394 = vpop.f32.mrf.mxu0
  %v1395 = vadd.f32 0.0, %v1394
  %1396 = vdwg.mxu0
  %1397 = vmatpush.bf16.msra.mxu0 0
  %1398 = vmatpush.bf16.msra.mxu0 0
  %1399 = vmatpush.bf16.msra.mxu0 0
  %1400 = vmatpush.bf16.msra.mxu0 0
  %1401 = vmatpush.bf16.msra.mxu0 0
  %1402 = vmatpush.bf16.msra.mxu0 0
  %1403 = vmatpush.bf16.msra.mxu0 0
  %1404 = vmatpush.bf16.msra.mxu0 %v983
  %1405 = vmatmul.bf16.gmra.mxu0 %v184
  %v1406 = vpop.f32.mrf.mxu0
  %v1407 = vadd.f32 0.0, %v1406
  %v1408 = vpop.f32.mrf.mxu0
  %v1409 = vadd.f32 0.0, %v1408
  %1410 = vdwg.mxu0
  %1411 = vmatpush.bf16.msra.mxu0 0
  %1412 = vmatpush.bf16.msra.mxu0 0
  %1413 = vmatpush.bf16.msra.mxu0 0
  %1414 = vmatpush.bf16.msra.mxu0 0
  %1415 = vmatpush.bf16.msra.mxu0 0
  %1416 = vmatpush.bf16.msra.mxu0 0
  %1417 = vmatpush.bf16.msra.mxu0 0
  %1418 = vmatpush.bf16.msra.mxu0 %v986
  %1419 = vmatmul.bf16.gmra.mxu0 %v184
  %v1420 = vpop.f32.mrf.mxu0
  %v1421 = vadd.f32 0.0, %v1420
  %v1422 = vpop.f32.mrf.mxu0
  %v1423 = vadd.f32 0.0, %v1422
  %1424 = vdwg.mxu0
  %1425 = vmatpush.bf16.msra.mxu0 0
  %1426 = vmatpush.bf16.msra.mxu0 0
  %1427 = vmatpush.bf16.msra.mxu0 0
  %1428 = vmatpush.bf16.msra.mxu0 0
  %1429 = vmatpush.bf16.msra.mxu0 0
  %1430 = vmatpush.bf16.msra.mxu0 0
  %1431 = vmatpush.bf16.msra.mxu0 0
  %1432 = vmatpush.bf16.msra.mxu0 %v989
  %1433 = vmatmul.bf16.gmra.mxu0 %v184
  %v1434 = vpop.f32.mrf.mxu0
  %v1435 = vadd.f32 0.0, %v1434
  %v1436 = vpop.f32.mrf.mxu0
  %v1437 = vadd.f32 0.0, %v1436
  %1438 = vdwg.mxu0
  %v1439 = vmax.f32 %v296, %v1001
  %v1440 = vmax.f32 %v310, %v1015
  %v1441 = vmax.f32 %v324, %v1029
  %v1442 = vmax.f32 %v338, %v1043
  %v1443 = vmax.f32 %v352, %v1057
  %v1444 = vmax.f32 %v366, %v1071
  %v1445 = vmax.f32 %v380, %v1085
  %v1446 = vmax.f32 %v394, %v1099
  %v1447 = vmax.f32 %v408, %v1113
  %v1448 = vmax.f32 %v422, %v1127
  %v1449 = vmax.f32 %v436, %v1141
  %v1450 = vmax.f32 %v450, %v1155
  %v1451 = vmax.f32 %v464, %v1169
  %v1452 = vmax.f32 %v478, %v1183
  %v1453 = vmax.f32 %v492, %v1197
  %v1454 = vmax.f32 %v506, %v1211
  %v1455 = vmax.f32 %v520, %v1225
  %v1456 = vmax.f32 %v534, %v1239
  %v1457 = vmax.f32 %v548, %v1253
  %v1458 = vmax.f32 %v562, %v1267
  %v1459 = vmax.f32 %v576, %v1281
  %v1460 = vmax.f32 %v590, %v1295
  %v1461 = vmax.f32 %v604, %v1309
  %v1462 = vmax.f32 %v618, %v1323
  %v1463 = vmax.f32 %v632, %v1337
  %v1464 = vmax.f32 %v646, %v1351
  %v1465 = vmax.f32 %v660, %v1365
  %v1466 = vmax.f32 %v674, %v1379
  %v1467 = vmax.f32 %v688, %v1393
  %v1468 = vmax.f32 %v702, %v1407
  %v1469 = vmax.f32 %v716, %v1421
  %v1470 = vmax.f32 %v730, %v1435
  %v1471 = vmax.f32 %v298, %v1003
  %v1472 = vmax.f32 %v312, %v1017
  %v1473 = vmax.f32 %v326, %v1031
  %v1474 = vmax.f32 %v340, %v1045
  %v1475 = vmax.f32 %v354, %v1059
  %v1476 = vmax.f32 %v368, %v1073
  %v1477 = vmax.f32 %v382, %v1087
  %v1478 = vmax.f32 %v396, %v1101
  %v1479 = vmax.f32 %v410, %v1115
  %v1480 = vmax.f32 %v424, %v1129
  %v1481 = vmax.f32 %v438, %v1143
  %v1482 = vmax.f32 %v452, %v1157
  %v1483 = vmax.f32 %v466, %v1171
  %v1484 = vmax.f32 %v480, %v1185
  %v1485 = vmax.f32 %v494, %v1199
  %v1486 = vmax.f32 %v508, %v1213
  %v1487 = vmax.f32 %v522, %v1227
  %v1488 = vmax.f32 %v536, %v1241
  %v1489 = vmax.f32 %v550, %v1255
  %v1490 = vmax.f32 %v564, %v1269
  %v1491 = vmax.f32 %v578, %v1283
  %v1492 = vmax.f32 %v592, %v1297
  %v1493 = vmax.f32 %v606, %v1311
  %v1494 = vmax.f32 %v620, %v1325
  %v1495 = vmax.f32 %v634, %v1339
  %v1496 = vmax.f32 %v648, %v1353
  %v1497 = vmax.f32 %v662, %v1367
  %v1498 = vmax.f32 %v676, %v1381
  %v1499 = vmax.f32 %v690, %v1395
  %v1500 = vmax.f32 %v704, %v1409
  %v1501 = vmax.f32 %v718, %v1423
  %v1502 = vmax.f32 %v732, %v1437
  %s1503 = scalar_lea.vmem %s1, 512
  %v1504 = vld [vmem:[%s1503] sm:$0xff]
  %v1505 = vld [vmem:[%s1503 + $0x8] sm:$0xff]
  %v1506 = vld [vmem:[%s1503 + $0x10] sm:$0xff]
  %v1507 = vld [vmem:[%s1503 + $0x18] sm:$0xff]
  %v1508 = vld [vmem:[%s1503 + $0x20] sm:$0xff]
  %v1509 = vld [vmem:[%s1503 + $0x28] sm:$0xff]
  %v1510 = vld [vmem:[%s1503 + $0x30] sm:$0xff]
  %v1511 = vld [vmem:[%s1503 + $0x38] sm:$0xff]
  %v1512 = vld [vmem:[%s1503 + $0x40] sm:$0xff]
  %v1513 = vld [vmem:[%s1503 + $0x48] sm:$0xff]
  %v1514 = vld [vmem:[%s1503 + $0x50] sm:$0xff]
  %v1515 = vld [vmem:[%s1503 + $0x58] sm:$0xff]
  %v1516 = vld [vmem:[%s1503 + $0x60] sm:$0xff]
  %v1517 = vld [vmem:[%s1503 + $0x68] sm:$0xff]
  %v1518 = vld [vmem:[%s1503 + $0x70] sm:$0xff]
  %v1519 = vld [vmem:[%s1503 + $0x78] sm:$0xff]
  %v1520 = vld [vmem:[%s1503 + $0x80] sm:$0x11]
  %v1521 = vld [vmem:[%s1503 + $0x88] sm:$0x11]
  %v1522 = vld [vmem:[%s1503 + $0x90] sm:$0x11]
  %v1523 = vld [vmem:[%s1503 + $0x98] sm:$0x11]
  %v1524 = vld [vmem:[%s1503 + $0xa0] sm:$0x11]
  %v1525 = vld [vmem:[%s1503 + $0xa8] sm:$0x11]
  %v1526 = vld [vmem:[%s1503 + $0xb0] sm:$0x11]
  %v1527 = vld [vmem:[%s1503 + $0xb8] sm:$0x11]
  %v1528 = vld [vmem:[%s1503 + $0xc0] sm:$0x11]
  %v1529 = vld [vmem:[%s1503 + $0xc8] sm:$0x11]
  %v1530 = vld [vmem:[%s1503 + $0xd0] sm:$0x11]
  %v1531 = vld [vmem:[%s1503 + $0xd8] sm:$0x11]
  %v1532 = vld [vmem:[%s1503 + $0xe0] sm:$0x11]
  %v1533 = vld [vmem:[%s1503 + $0xe8] sm:$0x11]
  %v1534 = vld [vmem:[%s1503 + $0xf0] sm:$0x11]
  %v1535 = vld [vmem:[%s1503 + $0xf8] sm:$0x11]
  %v1568 = vunpack.c.l.b16 %v1504
  %v1569 = vunpack.c.h.b16 %v1504
  %v1570 = vunpack.c.l.b16 %v1505
  %v1571 = vunpack.c.h.b16 %v1505
  %v1572 = vunpack.c.l.b16 %v1506
  %v1573 = vunpack.c.h.b16 %v1506
  %v1574 = vunpack.c.l.b16 %v1507
  %v1575 = vunpack.c.h.b16 %v1507
  %v1576 = vunpack.c.l.b16 %v1508
  %v1577 = vunpack.c.h.b16 %v1508
  %v1578 = vunpack.c.l.b16 %v1509
  %v1579 = vunpack.c.h.b16 %v1509
  %v1580 = vunpack.c.l.b16 %v1510
  %v1581 = vunpack.c.h.b16 %v1510
  %v1582 = vunpack.c.l.b16 %v1511
  %v1583 = vunpack.c.h.b16 %v1511
  %v1584 = vunpack.c.l.b16 %v1512
  %v1585 = vunpack.c.h.b16 %v1512
  %v1586 = vunpack.c.l.b16 %v1513
  %v1587 = vunpack.c.h.b16 %v1513
  %v1588 = vunpack.c.l.b16 %v1514
  %v1589 = vunpack.c.h.b16 %v1514
  %v1590 = vunpack.c.l.b16 %v1515
  %v1591 = vunpack.c.h.b16 %v1515
  %v1592 = vunpack.c.l.b16 %v1516
  %v1593 = vunpack.c.h.b16 %v1516
  %v1594 = vunpack.c.l.b16 %v1517
  %v1595 = vunpack.c.h.b16 %v1517
  %v1596 = vunpack.c.l.b16 %v1518
  %v1597 = vunpack.c.h.b16 %v1518
  %v1598 = vunpack.c.l.b16 %v1519
  %v1599 = vunpack.c.h.b16 %v1519
  %v1600 = vunpack.c.l.b16 %v1520
  %v1601 = vunpack.c.h.b16 %v1520
  %v1602 = vunpack.c.l.b16 %v1521
  %v1603 = vunpack.c.h.b16 %v1521
  %v1604 = vunpack.c.l.b16 %v1522
  %v1605 = vunpack.c.h.b16 %v1522
  %v1606 = vunpack.c.l.b16 %v1523
  %v1607 = vunpack.c.h.b16 %v1523
  %v1608 = vunpack.c.l.b16 %v1524
  %v1609 = vunpack.c.h.b16 %v1524
  %v1610 = vunpack.c.l.b16 %v1525
  %v1611 = vunpack.c.h.b16 %v1525
  %v1612 = vunpack.c.l.b16 %v1526
  %v1613 = vunpack.c.h.b16 %v1526
  %v1614 = vunpack.c.l.b16 %v1527
  %v1615 = vunpack.c.h.b16 %v1527
  %v1616 = vunpack.c.l.b16 %v1528
  %v1617 = vunpack.c.h.b16 %v1528
  %v1618 = vunpack.c.l.b16 %v1529
  %v1619 = vunpack.c.h.b16 %v1529
  %v1620 = vunpack.c.l.b16 %v1530
  %v1621 = vunpack.c.h.b16 %v1530
  %v1622 = vunpack.c.l.b16 %v1531
  %v1623 = vunpack.c.h.b16 %v1531
  %v1624 = vunpack.c.l.b16 %v1532
  %v1625 = vunpack.c.h.b16 %v1532
  %v1626 = vunpack.c.l.b16 %v1533
  %v1627 = vunpack.c.h.b16 %v1533
  %v1628 = vunpack.c.l.b16 %v1534
  %v1629 = vunpack.c.h.b16 %v1534
  %v1630 = vunpack.c.l.b16 %v1535
  %v1631 = vunpack.c.h.b16 %v1535
  %v1632 = vpack.c.b16 %v1600, %v1568
  %v1633 = vpack.c.b16 %v1601, %v1569
  %v1634 = vpack.c.b16 %v1602, %v1570
  %v1635 = vpack.c.b16 %v1603, %v1571
  %v1636 = vpack.c.b16 %v1604, %v1572
  %v1637 = vpack.c.b16 %v1605, %v1573
  %v1638 = vpack.c.b16 %v1606, %v1574
  %v1639 = vpack.c.b16 %v1607, %v1575
  %v1640 = vpack.c.b16 %v1608, %v1576
  %v1641 = vpack.c.b16 %v1609, %v1577
  %v1642 = vpack.c.b16 %v1610, %v1578
  %v1643 = vpack.c.b16 %v1611, %v1579
  %v1644 = vpack.c.b16 %v1612, %v1580
  %v1645 = vpack.c.b16 %v1613, %v1581
  %v1646 = vpack.c.b16 %v1614, %v1582
  %v1647 = vpack.c.b16 %v1615, %v1583
  %v1648 = vpack.c.b16 %v1616, %v1584
  %v1649 = vpack.c.b16 %v1617, %v1585
  %v1650 = vpack.c.b16 %v1618, %v1586
  %v1651 = vpack.c.b16 %v1619, %v1587
  %v1652 = vpack.c.b16 %v1620, %v1588
  %v1653 = vpack.c.b16 %v1621, %v1589
  %v1654 = vpack.c.b16 %v1622, %v1590
  %v1655 = vpack.c.b16 %v1623, %v1591
  %v1656 = vpack.c.b16 %v1624, %v1592
  %v1657 = vpack.c.b16 %v1625, %v1593
  %v1658 = vpack.c.b16 %v1626, %v1594
  %v1659 = vpack.c.b16 %v1627, %v1595
  %v1660 = vpack.c.b16 %v1628, %v1596
  %v1661 = vpack.c.b16 %v1629, %v1597
  %v1662 = vpack.c.b16 %v1630, %v1598
  %v1663 = vpack.c.b16 %v1631, %v1599
  %v1665 = vand.u32 %v1632, %v189
  %v1668 = vand.u32 %v1633, %v189
  %v1671 = vand.u32 %v1634, %v189
  %v1674 = vand.u32 %v1635, %v189
  %v1677 = vand.u32 %v1636, %v189
  %v1680 = vand.u32 %v1637, %v189
  %v1683 = vand.u32 %v1638, %v189
  %v1686 = vand.u32 %v1639, %v189
  %v1689 = vand.u32 %v1640, %v189
  %v1692 = vand.u32 %v1641, %v189
  %v1695 = vand.u32 %v1642, %v189
  %v1698 = vand.u32 %v1643, %v189
  %v1701 = vand.u32 %v1644, %v189
  %v1704 = vand.u32 %v1645, %v189
  %v1707 = vand.u32 %v1646, %v189
  %v1710 = vand.u32 %v1647, %v189
  %v1713 = vand.u32 %v1648, %v189
  %v1716 = vand.u32 %v1649, %v189
  %v1719 = vand.u32 %v1650, %v189
  %v1722 = vand.u32 %v1651, %v189
  %v1725 = vand.u32 %v1652, %v189
  %v1728 = vand.u32 %v1653, %v189
  %v1731 = vand.u32 %v1654, %v189
  %v1734 = vand.u32 %v1655, %v189
  %v1737 = vand.u32 %v1656, %v189
  %v1740 = vand.u32 %v1657, %v189
  %v1743 = vand.u32 %v1658, %v189
  %v1746 = vand.u32 %v1659, %v189
  %v1749 = vand.u32 %v1660, %v189
  %v1752 = vand.u32 %v1661, %v189
  %v1755 = vand.u32 %v1662, %v189
  %v1758 = vand.u32 %v1663, %v189
  %1760 = vmatpush.bf16.msra.mxu0 0
  %1761 = vmatpush.bf16.msra.mxu0 0
  %1762 = vmatpush.bf16.msra.mxu0 0
  %1763 = vmatpush.bf16.msra.mxu0 0
  %1764 = vmatpush.bf16.msra.mxu0 0
  %1765 = vmatpush.bf16.msra.mxu0 0
  %1766 = vmatpush.bf16.msra.mxu0 0
  %1767 = vmatpush.bf16.msra.mxu0 %v1665
  %1768 = vmatmul.bf16.gmra.mxu0 %v184
  %v1769 = vpop.f32.mrf.mxu0
  %v1770 = vadd.f32 0.0, %v1769
  %v1771 = vpop.f32.mrf.mxu0
  %v1772 = vadd.f32 0.0, %v1771
  %1773 = vdwg.mxu0
  %1774 = vmatpush.bf16.msra.mxu0 0
  %1775 = vmatpush.bf16.msra.mxu0 0
  %1776 = vmatpush.bf16.msra.mxu0 0
  %1777 = vmatpush.bf16.msra.mxu0 0
  %1778 = vmatpush.bf16.msra.mxu0 0
  %1779 = vmatpush.bf16.msra.mxu0 0
  %1780 = vmatpush.bf16.msra.mxu0 0
  %1781 = vmatpush.bf16.msra.mxu0 %v1668
  %1782 = vmatmul.bf16.gmra.mxu0 %v184
  %v1783 = vpop.f32.mrf.mxu0
  %v1784 = vadd.f32 0.0, %v1783
  %v1785 = vpop.f32.mrf.mxu0
  %v1786 = vadd.f32 0.0, %v1785
  %1787 = vdwg.mxu0
  %1788 = vmatpush.bf16.msra.mxu0 0
  %1789 = vmatpush.bf16.msra.mxu0 0
  %1790 = vmatpush.bf16.msra.mxu0 0
  %1791 = vmatpush.bf16.msra.mxu0 0
  %1792 = vmatpush.bf16.msra.mxu0 0
  %1793 = vmatpush.bf16.msra.mxu0 0
  %1794 = vmatpush.bf16.msra.mxu0 0
  %1795 = vmatpush.bf16.msra.mxu0 %v1671
  %1796 = vmatmul.bf16.gmra.mxu0 %v184
  %v1797 = vpop.f32.mrf.mxu0
  %v1798 = vadd.f32 0.0, %v1797
  %v1799 = vpop.f32.mrf.mxu0
  %v1800 = vadd.f32 0.0, %v1799
  %1801 = vdwg.mxu0
  %1802 = vmatpush.bf16.msra.mxu0 0
  %1803 = vmatpush.bf16.msra.mxu0 0
  %1804 = vmatpush.bf16.msra.mxu0 0
  %1805 = vmatpush.bf16.msra.mxu0 0
  %1806 = vmatpush.bf16.msra.mxu0 0
  %1807 = vmatpush.bf16.msra.mxu0 0
  %1808 = vmatpush.bf16.msra.mxu0 0
  %1809 = vmatpush.bf16.msra.mxu0 %v1674
  %1810 = vmatmul.bf16.gmra.mxu0 %v184
  %v1811 = vpop.f32.mrf.mxu0
  %v1812 = vadd.f32 0.0, %v1811
  %v1813 = vpop.f32.mrf.mxu0
  %v1814 = vadd.f32 0.0, %v1813
  %1815 = vdwg.mxu0
  %1816 = vmatpush.bf16.msra.mxu0 0
  %1817 = vmatpush.bf16.msra.mxu0 0
  %1818 = vmatpush.bf16.msra.mxu0 0
  %1819 = vmatpush.bf16.msra.mxu0 0
  %1820 = vmatpush.bf16.msra.mxu0 0
  %1821 = vmatpush.bf16.msra.mxu0 0
  %1822 = vmatpush.bf16.msra.mxu0 0
  %1823 = vmatpush.bf16.msra.mxu0 %v1677
  %1824 = vmatmul.bf16.gmra.mxu0 %v184
  %v1825 = vpop.f32.mrf.mxu0
  %v1826 = vadd.f32 0.0, %v1825
  %v1827 = vpop.f32.mrf.mxu0
  %v1828 = vadd.f32 0.0, %v1827
  %1829 = vdwg.mxu0
  %1830 = vmatpush.bf16.msra.mxu0 0
  %1831 = vmatpush.bf16.msra.mxu0 0
  %1832 = vmatpush.bf16.msra.mxu0 0
  %1833 = vmatpush.bf16.msra.mxu0 0
  %1834 = vmatpush.bf16.msra.mxu0 0
  %1835 = vmatpush.bf16.msra.mxu0 0
  %1836 = vmatpush.bf16.msra.mxu0 0
  %1837 = vmatpush.bf16.msra.mxu0 %v1680
  %1838 = vmatmul.bf16.gmra.mxu0 %v184
  %v1839 = vpop.f32.mrf.mxu0
  %v1840 = vadd.f32 0.0, %v1839
  %v1841 = vpop.f32.mrf.mxu0
  %v1842 = vadd.f32 0.0, %v1841
  %1843 = vdwg.mxu0
  %1844 = vmatpush.bf16.msra.mxu0 0
  %1845 = vmatpush.bf16.msra.mxu0 0
  %1846 = vmatpush.bf16.msra.mxu0 0
  %1847 = vmatpush.bf16.msra.mxu0 0
  %1848 = vmatpush.bf16.msra.mxu0 0
  %1849 = vmatpush.bf16.msra.mxu0 0
  %1850 = vmatpush.bf16.msra.mxu0 0
  %1851 = vmatpush.bf16.msra.mxu0 %v1683
  %1852 = vmatmul.bf16.gmra.mxu0 %v184
  %v1853 = vpop.f32.mrf.mxu0
  %v1854 = vadd.f32 0.0, %v1853
  %v1855 = vpop.f32.mrf.mxu0
  %v1856 = vadd.f32 0.0, %v1855
  %1857 = vdwg.mxu0
  %1858 = vmatpush.bf16.msra.mxu0 0
  %1859 = vmatpush.bf16.msra.mxu0 0
  %1860 = vmatpush.bf16.msra.mxu0 0
  %1861 = vmatpush.bf16.msra.mxu0 0
  %1862 = vmatpush.bf16.msra.mxu0 0
  %1863 = vmatpush.bf16.msra.mxu0 0
  %1864 = vmatpush.bf16.msra.mxu0 0
  %1865 = vmatpush.bf16.msra.mxu0 %v1686
  %1866 = vmatmul.bf16.gmra.mxu0 %v184
  %v1867 = vpop.f32.mrf.mxu0
  %v1868 = vadd.f32 0.0, %v1867
  %v1869 = vpop.f32.mrf.mxu0
  %v1870 = vadd.f32 0.0, %v1869
  %1871 = vdwg.mxu0
  %1872 = vmatpush.bf16.msra.mxu0 0
  %1873 = vmatpush.bf16.msra.mxu0 0
  %1874 = vmatpush.bf16.msra.mxu0 0
  %1875 = vmatpush.bf16.msra.mxu0 0
  %1876 = vmatpush.bf16.msra.mxu0 0
  %1877 = vmatpush.bf16.msra.mxu0 0
  %1878 = vmatpush.bf16.msra.mxu0 0
  %1879 = vmatpush.bf16.msra.mxu0 %v1689
  %1880 = vmatmul.bf16.gmra.mxu0 %v184
  %v1881 = vpop.f32.mrf.mxu0
  %v1882 = vadd.f32 0.0, %v1881
  %v1883 = vpop.f32.mrf.mxu0
  %v1884 = vadd.f32 0.0, %v1883
  %1885 = vdwg.mxu0
  %1886 = vmatpush.bf16.msra.mxu0 0
  %1887 = vmatpush.bf16.msra.mxu0 0
  %1888 = vmatpush.bf16.msra.mxu0 0
  %1889 = vmatpush.bf16.msra.mxu0 0
  %1890 = vmatpush.bf16.msra.mxu0 0
  %1891 = vmatpush.bf16.msra.mxu0 0
  %1892 = vmatpush.bf16.msra.mxu0 0
  %1893 = vmatpush.bf16.msra.mxu0 %v1692
  %1894 = vmatmul.bf16.gmra.mxu0 %v184
  %v1895 = vpop.f32.mrf.mxu0
  %v1896 = vadd.f32 0.0, %v1895
  %v1897 = vpop.f32.mrf.mxu0
  %v1898 = vadd.f32 0.0, %v1897
  %1899 = vdwg.mxu0
  %1900 = vmatpush.bf16.msra.mxu0 0
  %1901 = vmatpush.bf16.msra.mxu0 0
  %1902 = vmatpush.bf16.msra.mxu0 0
  %1903 = vmatpush.bf16.msra.mxu0 0
  %1904 = vmatpush.bf16.msra.mxu0 0
  %1905 = vmatpush.bf16.msra.mxu0 0
  %1906 = vmatpush.bf16.msra.mxu0 0
  %1907 = vmatpush.bf16.msra.mxu0 %v1695
  %1908 = vmatmul.bf16.gmra.mxu0 %v184
  %v1909 = vpop.f32.mrf.mxu0
  %v1910 = vadd.f32 0.0, %v1909
  %v1911 = vpop.f32.mrf.mxu0
  %v1912 = vadd.f32 0.0, %v1911
  %1913 = vdwg.mxu0
  %1914 = vmatpush.bf16.msra.mxu0 0
  %1915 = vmatpush.bf16.msra.mxu0 0
  %1916 = vmatpush.bf16.msra.mxu0 0
  %1917 = vmatpush.bf16.msra.mxu0 0
  %1918 = vmatpush.bf16.msra.mxu0 0
  %1919 = vmatpush.bf16.msra.mxu0 0
  %1920 = vmatpush.bf16.msra.mxu0 0
  %1921 = vmatpush.bf16.msra.mxu0 %v1698
  %1922 = vmatmul.bf16.gmra.mxu0 %v184
  %v1923 = vpop.f32.mrf.mxu0
  %v1924 = vadd.f32 0.0, %v1923
  %v1925 = vpop.f32.mrf.mxu0
  %v1926 = vadd.f32 0.0, %v1925
  %1927 = vdwg.mxu0
  %1928 = vmatpush.bf16.msra.mxu0 0
  %1929 = vmatpush.bf16.msra.mxu0 0
  %1930 = vmatpush.bf16.msra.mxu0 0
  %1931 = vmatpush.bf16.msra.mxu0 0
  %1932 = vmatpush.bf16.msra.mxu0 0
  %1933 = vmatpush.bf16.msra.mxu0 0
  %1934 = vmatpush.bf16.msra.mxu0 0
  %1935 = vmatpush.bf16.msra.mxu0 %v1701
  %1936 = vmatmul.bf16.gmra.mxu0 %v184
  %v1937 = vpop.f32.mrf.mxu0
  %v1938 = vadd.f32 0.0, %v1937
  %v1939 = vpop.f32.mrf.mxu0
  %v1940 = vadd.f32 0.0, %v1939
  %1941 = vdwg.mxu0
  %1942 = vmatpush.bf16.msra.mxu0 0
  %1943 = vmatpush.bf16.msra.mxu0 0
  %1944 = vmatpush.bf16.msra.mxu0 0
  %1945 = vmatpush.bf16.msra.mxu0 0
  %1946 = vmatpush.bf16.msra.mxu0 0
  %1947 = vmatpush.bf16.msra.mxu0 0
  %1948 = vmatpush.bf16.msra.mxu0 0
  %1949 = vmatpush.bf16.msra.mxu0 %v1704
  %1950 = vmatmul.bf16.gmra.mxu0 %v184
  %v1951 = vpop.f32.mrf.mxu0
  %v1952 = vadd.f32 0.0, %v1951
  %v1953 = vpop.f32.mrf.mxu0
  %v1954 = vadd.f32 0.0, %v1953
  %1955 = vdwg.mxu0
  %1956 = vmatpush.bf16.msra.mxu0 0
  %1957 = vmatpush.bf16.msra.mxu0 0
  %1958 = vmatpush.bf16.msra.mxu0 0
  %1959 = vmatpush.bf16.msra.mxu0 0
  %1960 = vmatpush.bf16.msra.mxu0 0
  %1961 = vmatpush.bf16.msra.mxu0 0
  %1962 = vmatpush.bf16.msra.mxu0 0
  %1963 = vmatpush.bf16.msra.mxu0 %v1707
  %1964 = vmatmul.bf16.gmra.mxu0 %v184
  %v1965 = vpop.f32.mrf.mxu0
  %v1966 = vadd.f32 0.0, %v1965
  %v1967 = vpop.f32.mrf.mxu0
  %v1968 = vadd.f32 0.0, %v1967
  %1969 = vdwg.mxu0
  %1970 = vmatpush.bf16.msra.mxu0 0
  %1971 = vmatpush.bf16.msra.mxu0 0
  %1972 = vmatpush.bf16.msra.mxu0 0
  %1973 = vmatpush.bf16.msra.mxu0 0
  %1974 = vmatpush.bf16.msra.mxu0 0
  %1975 = vmatpush.bf16.msra.mxu0 0
  %1976 = vmatpush.bf16.msra.mxu0 0
  %1977 = vmatpush.bf16.msra.mxu0 %v1710
  %1978 = vmatmul.bf16.gmra.mxu0 %v184
  %v1979 = vpop.f32.mrf.mxu0
  %v1980 = vadd.f32 0.0, %v1979
  %v1981 = vpop.f32.mrf.mxu0
  %v1982 = vadd.f32 0.0, %v1981
  %1983 = vdwg.mxu0
  %1984 = vmatpush.bf16.msra.mxu0 0
  %1985 = vmatpush.bf16.msra.mxu0 0
  %1986 = vmatpush.bf16.msra.mxu0 0
  %1987 = vmatpush.bf16.msra.mxu0 0
  %1988 = vmatpush.bf16.msra.mxu0 0
  %1989 = vmatpush.bf16.msra.mxu0 0
  %1990 = vmatpush.bf16.msra.mxu0 0
  %1991 = vmatpush.bf16.msra.mxu0 %v1713
  %1992 = vmatmul.bf16.gmra.mxu0 %v184
  %v1993 = vpop.f32.mrf.mxu0
  %v1994 = vadd.f32 0.0, %v1993
  %v1995 = vpop.f32.mrf.mxu0
  %v1996 = vadd.f32 0.0, %v1995
  %1997 = vdwg.mxu0
  %1998 = vmatpush.bf16.msra.mxu0 0
  %1999 = vmatpush.bf16.msra.mxu0 0
  %2000 = vmatpush.bf16.msra.mxu0 0
  %2001 = vmatpush.bf16.msra.mxu0 0
  %2002 = vmatpush.bf16.msra.mxu0 0
  %2003 = vmatpush.bf16.msra.mxu0 0
  %2004 = vmatpush.bf16.msra.mxu0 0
  %2005 = vmatpush.bf16.msra.mxu0 %v1716
  %2006 = vmatmul.bf16.gmra.mxu0 %v184
  %v2007 = vpop.f32.mrf.mxu0
  %v2008 = vadd.f32 0.0, %v2007
  %v2009 = vpop.f32.mrf.mxu0
  %v2010 = vadd.f32 0.0, %v2009
  %2011 = vdwg.mxu0
  %2012 = vmatpush.bf16.msra.mxu0 0
  %2013 = vmatpush.bf16.msra.mxu0 0
  %2014 = vmatpush.bf16.msra.mxu0 0
  %2015 = vmatpush.bf16.msra.mxu0 0
  %2016 = vmatpush.bf16.msra.mxu0 0
  %2017 = vmatpush.bf16.msra.mxu0 0
  %2018 = vmatpush.bf16.msra.mxu0 0
  %2019 = vmatpush.bf16.msra.mxu0 %v1719
  %2020 = vmatmul.bf16.gmra.mxu0 %v184
  %v2021 = vpop.f32.mrf.mxu0
  %v2022 = vadd.f32 0.0, %v2021
  %v2023 = vpop.f32.mrf.mxu0
  %v2024 = vadd.f32 0.0, %v2023
  %2025 = vdwg.mxu0
  %2026 = vmatpush.bf16.msra.mxu0 0
  %2027 = vmatpush.bf16.msra.mxu0 0
  %2028 = vmatpush.bf16.msra.mxu0 0
  %2029 = vmatpush.bf16.msra.mxu0 0
  %2030 = vmatpush.bf16.msra.mxu0 0
  %2031 = vmatpush.bf16.msra.mxu0 0
  %2032 = vmatpush.bf16.msra.mxu0 0
  %2033 = vmatpush.bf16.msra.mxu0 %v1722
  %2034 = vmatmul.bf16.gmra.mxu0 %v184
  %v2035 = vpop.f32.mrf.mxu0
  %v2036 = vadd.f32 0.0, %v2035
  %v2037 = vpop.f32.mrf.mxu0
  %v2038 = vadd.f32 0.0, %v2037
  %2039 = vdwg.mxu0
  %2040 = vmatpush.bf16.msra.mxu0 0
  %2041 = vmatpush.bf16.msra.mxu0 0
  %2042 = vmatpush.bf16.msra.mxu0 0
  %2043 = vmatpush.bf16.msra.mxu0 0
  %2044 = vmatpush.bf16.msra.mxu0 0
  %2045 = vmatpush.bf16.msra.mxu0 0
  %2046 = vmatpush.bf16.msra.mxu0 0
  %2047 = vmatpush.bf16.msra.mxu0 %v1725
  %2048 = vmatmul.bf16.gmra.mxu0 %v184
  %v2049 = vpop.f32.mrf.mxu0
  %v2050 = vadd.f32 0.0, %v2049
  %v2051 = vpop.f32.mrf.mxu0
  %v2052 = vadd.f32 0.0, %v2051
  %2053 = vdwg.mxu0
  %2054 = vmatpush.bf16.msra.mxu0 0
  %2055 = vmatpush.bf16.msra.mxu0 0
  %2056 = vmatpush.bf16.msra.mxu0 0
  %2057 = vmatpush.bf16.msra.mxu0 0
  %2058 = vmatpush.bf16.msra.mxu0 0
  %2059 = vmatpush.bf16.msra.mxu0 0
  %2060 = vmatpush.bf16.msra.mxu0 0
  %2061 = vmatpush.bf16.msra.mxu0 %v1728
  %2062 = vmatmul.bf16.gmra.mxu0 %v184
  %v2063 = vpop.f32.mrf.mxu0
  %v2064 = vadd.f32 0.0, %v2063
  %v2065 = vpop.f32.mrf.mxu0
  %v2066 = vadd.f32 0.0, %v2065
  %2067 = vdwg.mxu0
  %2068 = vmatpush.bf16.msra.mxu0 0
  %2069 = vmatpush.bf16.msra.mxu0 0
  %2070 = vmatpush.bf16.msra.mxu0 0
  %2071 = vmatpush.bf16.msra.mxu0 0
  %2072 = vmatpush.bf16.msra.mxu0 0
  %2073 = vmatpush.bf16.msra.mxu0 0
  %2074 = vmatpush.bf16.msra.mxu0 0
  %2075 = vmatpush.bf16.msra.mxu0 %v1731
  %2076 = vmatmul.bf16.gmra.mxu0 %v184
  %v2077 = vpop.f32.mrf.mxu0
  %v2078 = vadd.f32 0.0, %v2077
  %v2079 = vpop.f32.mrf.mxu0
  %v2080 = vadd.f32 0.0, %v2079
  %2081 = vdwg.mxu0
  %2082 = vmatpush.bf16.msra.mxu0 0
  %2083 = vmatpush.bf16.msra.mxu0 0
  %2084 = vmatpush.bf16.msra.mxu0 0
  %2085 = vmatpush.bf16.msra.mxu0 0
  %2086 = vmatpush.bf16.msra.mxu0 0
  %2087 = vmatpush.bf16.msra.mxu0 0
  %2088 = vmatpush.bf16.msra.mxu0 0
  %2089 = vmatpush.bf16.msra.mxu0 %v1734
  %2090 = vmatmul.bf16.gmra.mxu0 %v184
  %v2091 = vpop.f32.mrf.mxu0
  %v2092 = vadd.f32 0.0, %v2091
  %v2093 = vpop.f32.mrf.mxu0
  %v2094 = vadd.f32 0.0, %v2093
  %2095 = vdwg.mxu0
  %2096 = vmatpush.bf16.msra.mxu0 0
  %2097 = vmatpush.bf16.msra.mxu0 0
  %2098 = vmatpush.bf16.msra.mxu0 0
  %2099 = vmatpush.bf16.msra.mxu0 0
  %2100 = vmatpush.bf16.msra.mxu0 0
  %2101 = vmatpush.bf16.msra.mxu0 0
  %2102 = vmatpush.bf16.msra.mxu0 0
  %2103 = vmatpush.bf16.msra.mxu0 %v1737
  %2104 = vmatmul.bf16.gmra.mxu0 %v184
  %v2105 = vpop.f32.mrf.mxu0
  %v2106 = vadd.f32 0.0, %v2105
  %v2107 = vpop.f32.mrf.mxu0
  %v2108 = vadd.f32 0.0, %v2107
  %2109 = vdwg.mxu0
  %2110 = vmatpush.bf16.msra.mxu0 0
  %2111 = vmatpush.bf16.msra.mxu0 0
  %2112 = vmatpush.bf16.msra.mxu0 0
  %2113 = vmatpush.bf16.msra.mxu0 0
  %2114 = vmatpush.bf16.msra.mxu0 0
  %2115 = vmatpush.bf16.msra.mxu0 0
  %2116 = vmatpush.bf16.msra.mxu0 0
  %2117 = vmatpush.bf16.msra.mxu0 %v1740
  %2118 = vmatmul.bf16.gmra.mxu0 %v184
  %v2119 = vpop.f32.mrf.mxu0
  %v2120 = vadd.f32 0.0, %v2119
  %v2121 = vpop.f32.mrf.mxu0
  %v2122 = vadd.f32 0.0, %v2121
  %2123 = vdwg.mxu0
  %2124 = vmatpush.bf16.msra.mxu0 0
  %2125 = vmatpush.bf16.msra.mxu0 0
  %2126 = vmatpush.bf16.msra.mxu0 0
  %2127 = vmatpush.bf16.msra.mxu0 0
  %2128 = vmatpush.bf16.msra.mxu0 0
  %2129 = vmatpush.bf16.msra.mxu0 0
  %2130 = vmatpush.bf16.msra.mxu0 0
  %2131 = vmatpush.bf16.msra.mxu0 %v1743
  %2132 = vmatmul.bf16.gmra.mxu0 %v184
  %v2133 = vpop.f32.mrf.mxu0
  %v2134 = vadd.f32 0.0, %v2133
  %v2135 = vpop.f32.mrf.mxu0
  %v2136 = vadd.f32 0.0, %v2135
  %2137 = vdwg.mxu0
  %2138 = vmatpush.bf16.msra.mxu0 0
  %2139 = vmatpush.bf16.msra.mxu0 0
  %2140 = vmatpush.bf16.msra.mxu0 0
  %2141 = vmatpush.bf16.msra.mxu0 0
  %2142 = vmatpush.bf16.msra.mxu0 0
  %2143 = vmatpush.bf16.msra.mxu0 0
  %2144 = vmatpush.bf16.msra.mxu0 0
  %2145 = vmatpush.bf16.msra.mxu0 %v1746
  %2146 = vmatmul.bf16.gmra.mxu0 %v184
  %v2147 = vpop.f32.mrf.mxu0
  %v2148 = vadd.f32 0.0, %v2147
  %v2149 = vpop.f32.mrf.mxu0
  %v2150 = vadd.f32 0.0, %v2149
  %2151 = vdwg.mxu0
  %2152 = vmatpush.bf16.msra.mxu0 0
  %2153 = vmatpush.bf16.msra.mxu0 0
  %2154 = vmatpush.bf16.msra.mxu0 0
  %2155 = vmatpush.bf16.msra.mxu0 0
  %2156 = vmatpush.bf16.msra.mxu0 0
  %2157 = vmatpush.bf16.msra.mxu0 0
  %2158 = vmatpush.bf16.msra.mxu0 0
  %2159 = vmatpush.bf16.msra.mxu0 %v1749
  %2160 = vmatmul.bf16.gmra.mxu0 %v184
  %v2161 = vpop.f32.mrf.mxu0
  %v2162 = vadd.f32 0.0, %v2161
  %v2163 = vpop.f32.mrf.mxu0
  %v2164 = vadd.f32 0.0, %v2163
  %2165 = vdwg.mxu0
  %2166 = vmatpush.bf16.msra.mxu0 0
  %2167 = vmatpush.bf16.msra.mxu0 0
  %2168 = vmatpush.bf16.msra.mxu0 0
  %2169 = vmatpush.bf16.msra.mxu0 0
  %2170 = vmatpush.bf16.msra.mxu0 0
  %2171 = vmatpush.bf16.msra.mxu0 0
  %2172 = vmatpush.bf16.msra.mxu0 0
  %2173 = vmatpush.bf16.msra.mxu0 %v1752
  %2174 = vmatmul.bf16.gmra.mxu0 %v184
  %v2175 = vpop.f32.mrf.mxu0
  %v2176 = vadd.f32 0.0, %v2175
  %v2177 = vpop.f32.mrf.mxu0
  %v2178 = vadd.f32 0.0, %v2177
  %2179 = vdwg.mxu0
  %2180 = vmatpush.bf16.msra.mxu0 0
  %2181 = vmatpush.bf16.msra.mxu0 0
  %2182 = vmatpush.bf16.msra.mxu0 0
  %2183 = vmatpush.bf16.msra.mxu0 0
  %2184 = vmatpush.bf16.msra.mxu0 0
  %2185 = vmatpush.bf16.msra.mxu0 0
  %2186 = vmatpush.bf16.msra.mxu0 0
  %2187 = vmatpush.bf16.msra.mxu0 %v1755
  %2188 = vmatmul.bf16.gmra.mxu0 %v184
  %v2189 = vpop.f32.mrf.mxu0
  %v2190 = vadd.f32 0.0, %v2189
  %v2191 = vpop.f32.mrf.mxu0
  %v2192 = vadd.f32 0.0, %v2191
  %2193 = vdwg.mxu0
  %2194 = vmatpush.bf16.msra.mxu0 0
  %2195 = vmatpush.bf16.msra.mxu0 0
  %2196 = vmatpush.bf16.msra.mxu0 0
  %2197 = vmatpush.bf16.msra.mxu0 0
  %2198 = vmatpush.bf16.msra.mxu0 0
  %2199 = vmatpush.bf16.msra.mxu0 0
  %2200 = vmatpush.bf16.msra.mxu0 0
  %2201 = vmatpush.bf16.msra.mxu0 %v1758
  %2202 = vmatmul.bf16.gmra.mxu0 %v184
  %v2203 = vpop.f32.mrf.mxu0
  %v2204 = vadd.f32 0.0, %v2203
  %v2205 = vpop.f32.mrf.mxu0
  %v2206 = vadd.f32 0.0, %v2205
  %2207 = vdwg.mxu0
  %v2208 = vmax.f32 %v1439, %v1770
  %v2209 = vmax.f32 %v1440, %v1784
  %v2210 = vmax.f32 %v1441, %v1798
  %v2211 = vmax.f32 %v1442, %v1812
  %v2212 = vmax.f32 %v1443, %v1826
  %v2213 = vmax.f32 %v1444, %v1840
  %v2214 = vmax.f32 %v1445, %v1854
  %v2215 = vmax.f32 %v1446, %v1868
  %v2216 = vmax.f32 %v1447, %v1882
  %v2217 = vmax.f32 %v1448, %v1896
  %v2218 = vmax.f32 %v1449, %v1910
  %v2219 = vmax.f32 %v1450, %v1924
  %v2220 = vmax.f32 %v1451, %v1938
  %v2221 = vmax.f32 %v1452, %v1952
  %v2222 = vmax.f32 %v1453, %v1966
  %v2223 = vmax.f32 %v1454, %v1980
  %v2224 = vmax.f32 %v1455, %v1994
  %v2225 = vmax.f32 %v1456, %v2008
  %v2226 = vmax.f32 %v1457, %v2022
  %v2227 = vmax.f32 %v1458, %v2036
  %v2228 = vmax.f32 %v1459, %v2050
  %v2229 = vmax.f32 %v1460, %v2064
  %v2230 = vmax.f32 %v1461, %v2078
  %v2231 = vmax.f32 %v1462, %v2092
  %v2232 = vmax.f32 %v1463, %v2106
  %v2233 = vmax.f32 %v1464, %v2120
  %v2234 = vmax.f32 %v1465, %v2134
  %v2235 = vmax.f32 %v1466, %v2148
  %v2236 = vmax.f32 %v1467, %v2162
  %v2237 = vmax.f32 %v1468, %v2176
  %v2238 = vmax.f32 %v1469, %v2190
  %v2239 = vmax.f32 %v1470, %v2204
  %v2240 = vmax.f32 %v1471, %v1772
  %v2241 = vmax.f32 %v1472, %v1786
  %v2242 = vmax.f32 %v1473, %v1800
  %v2243 = vmax.f32 %v1474, %v1814
  %v2244 = vmax.f32 %v1475, %v1828
  %v2245 = vmax.f32 %v1476, %v1842
  %v2246 = vmax.f32 %v1477, %v1856
  %v2247 = vmax.f32 %v1478, %v1870
  %v2248 = vmax.f32 %v1479, %v1884
  %v2249 = vmax.f32 %v1480, %v1898
  %v2250 = vmax.f32 %v1481, %v1912
  %v2251 = vmax.f32 %v1482, %v1926
  %v2252 = vmax.f32 %v1483, %v1940
  %v2253 = vmax.f32 %v1484, %v1954
  %v2254 = vmax.f32 %v1485, %v1968
  %v2255 = vmax.f32 %v1486, %v1982
  %v2256 = vmax.f32 %v1487, %v1996
  %v2257 = vmax.f32 %v1488, %v2010
  %v2258 = vmax.f32 %v1489, %v2024
  %v2259 = vmax.f32 %v1490, %v2038
  %v2260 = vmax.f32 %v1491, %v2052
  %v2261 = vmax.f32 %v1492, %v2066
  %v2262 = vmax.f32 %v1493, %v2080
  %v2263 = vmax.f32 %v1494, %v2094
  %v2264 = vmax.f32 %v1495, %v2108
  %v2265 = vmax.f32 %v1496, %v2122
  %v2266 = vmax.f32 %v1497, %v2136
  %v2267 = vmax.f32 %v1498, %v2150
  %v2268 = vmax.f32 %v1499, %v2164
  %v2269 = vmax.f32 %v1500, %v2178
  %v2270 = vmax.f32 %v1501, %v2192
  %v2271 = vmax.f32 %v1502, %v2206
  %s2272 = scalar_lea.vmem %s1, 768
  %v2273 = vld [vmem:[%s2272] sm:$0xff]
  %v2274 = vld [vmem:[%s2272 + $0x8] sm:$0xff]
  %v2275 = vld [vmem:[%s2272 + $0x10] sm:$0xff]
  %v2276 = vld [vmem:[%s2272 + $0x18] sm:$0xff]
  %v2277 = vld [vmem:[%s2272 + $0x20] sm:$0xff]
  %v2278 = vld [vmem:[%s2272 + $0x28] sm:$0xff]
  %v2279 = vld [vmem:[%s2272 + $0x30] sm:$0xff]
  %v2280 = vld [vmem:[%s2272 + $0x38] sm:$0xff]
  %v2281 = vld [vmem:[%s2272 + $0x40] sm:$0xff]
  %v2282 = vld [vmem:[%s2272 + $0x48] sm:$0xff]
  %v2283 = vld [vmem:[%s2272 + $0x50] sm:$0xff]
  %v2284 = vld [vmem:[%s2272 + $0x58] sm:$0xff]
  %v2285 = vld [vmem:[%s2272 + $0x60] sm:$0xff]
  %v2286 = vld [vmem:[%s2272 + $0x68] sm:$0xff]
  %v2287 = vld [vmem:[%s2272 + $0x70] sm:$0xff]
  %v2288 = vld [vmem:[%s2272 + $0x78] sm:$0xff]
  %v2289 = vld [vmem:[%s2272 + $0x80] sm:$0x11]
  %v2290 = vld [vmem:[%s2272 + $0x88] sm:$0x11]
  %v2291 = vld [vmem:[%s2272 + $0x90] sm:$0x11]
  %v2292 = vld [vmem:[%s2272 + $0x98] sm:$0x11]
  %v2293 = vld [vmem:[%s2272 + $0xa0] sm:$0x11]
  %v2294 = vld [vmem:[%s2272 + $0xa8] sm:$0x11]
  %v2295 = vld [vmem:[%s2272 + $0xb0] sm:$0x11]
  %v2296 = vld [vmem:[%s2272 + $0xb8] sm:$0x11]
  %v2297 = vld [vmem:[%s2272 + $0xc0] sm:$0x11]
  %v2298 = vld [vmem:[%s2272 + $0xc8] sm:$0x11]
  %v2299 = vld [vmem:[%s2272 + $0xd0] sm:$0x11]
  %v2300 = vld [vmem:[%s2272 + $0xd8] sm:$0x11]
  %v2301 = vld [vmem:[%s2272 + $0xe0] sm:$0x11]
  %v2302 = vld [vmem:[%s2272 + $0xe8] sm:$0x11]
  %v2303 = vld [vmem:[%s2272 + $0xf0] sm:$0x11]
  %v2304 = vld [vmem:[%s2272 + $0xf8] sm:$0x11]
  %v2337 = vunpack.c.l.b16 %v2273
  %v2338 = vunpack.c.h.b16 %v2273
  %v2339 = vunpack.c.l.b16 %v2274
  %v2340 = vunpack.c.h.b16 %v2274
  %v2341 = vunpack.c.l.b16 %v2275
  %v2342 = vunpack.c.h.b16 %v2275
  %v2343 = vunpack.c.l.b16 %v2276
  %v2344 = vunpack.c.h.b16 %v2276
  %v2345 = vunpack.c.l.b16 %v2277
  %v2346 = vunpack.c.h.b16 %v2277
  %v2347 = vunpack.c.l.b16 %v2278
  %v2348 = vunpack.c.h.b16 %v2278
  %v2349 = vunpack.c.l.b16 %v2279
  %v2350 = vunpack.c.h.b16 %v2279
  %v2351 = vunpack.c.l.b16 %v2280
  %v2352 = vunpack.c.h.b16 %v2280
  %v2353 = vunpack.c.l.b16 %v2281
  %v2354 = vunpack.c.h.b16 %v2281
  %v2355 = vunpack.c.l.b16 %v2282
  %v2356 = vunpack.c.h.b16 %v2282
  %v2357 = vunpack.c.l.b16 %v2283
  %v2358 = vunpack.c.h.b16 %v2283
  %v2359 = vunpack.c.l.b16 %v2284
  %v2360 = vunpack.c.h.b16 %v2284
  %v2361 = vunpack.c.l.b16 %v2285
  %v2362 = vunpack.c.h.b16 %v2285
  %v2363 = vunpack.c.l.b16 %v2286
  %v2364 = vunpack.c.h.b16 %v2286
  %v2365 = vunpack.c.l.b16 %v2287
  %v2366 = vunpack.c.h.b16 %v2287
  %v2367 = vunpack.c.l.b16 %v2288
  %v2368 = vunpack.c.h.b16 %v2288
  %v2369 = vunpack.c.l.b16 %v2289
  %v2370 = vunpack.c.h.b16 %v2289
  %v2371 = vunpack.c.l.b16 %v2290
  %v2372 = vunpack.c.h.b16 %v2290
  %v2373 = vunpack.c.l.b16 %v2291
  %v2374 = vunpack.c.h.b16 %v2291
  %v2375 = vunpack.c.l.b16 %v2292
  %v2376 = vunpack.c.h.b16 %v2292
  %v2377 = vunpack.c.l.b16 %v2293
  %v2378 = vunpack.c.h.b16 %v2293
  %v2379 = vunpack.c.l.b16 %v2294
  %v2380 = vunpack.c.h.b16 %v2294
  %v2381 = vunpack.c.l.b16 %v2295
  %v2382 = vunpack.c.h.b16 %v2295
  %v2383 = vunpack.c.l.b16 %v2296
  %v2384 = vunpack.c.h.b16 %v2296
  %v2385 = vunpack.c.l.b16 %v2297
  %v2386 = vunpack.c.h.b16 %v2297
  %v2387 = vunpack.c.l.b16 %v2298
  %v2388 = vunpack.c.h.b16 %v2298
  %v2389 = vunpack.c.l.b16 %v2299
  %v2390 = vunpack.c.h.b16 %v2299
  %v2391 = vunpack.c.l.b16 %v2300
  %v2392 = vunpack.c.h.b16 %v2300
  %v2393 = vunpack.c.l.b16 %v2301
  %v2394 = vunpack.c.h.b16 %v2301
  %v2395 = vunpack.c.l.b16 %v2302
  %v2396 = vunpack.c.h.b16 %v2302
  %v2397 = vunpack.c.l.b16 %v2303
  %v2398 = vunpack.c.h.b16 %v2303
  %v2399 = vunpack.c.l.b16 %v2304
  %v2400 = vunpack.c.h.b16 %v2304
  %v2401 = vpack.c.b16 %v2369, %v2337
  %v2402 = vpack.c.b16 %v2370, %v2338
  %v2403 = vpack.c.b16 %v2371, %v2339
  %v2404 = vpack.c.b16 %v2372, %v2340
  %v2405 = vpack.c.b16 %v2373, %v2341
  %v2406 = vpack.c.b16 %v2374, %v2342
  %v2407 = vpack.c.b16 %v2375, %v2343
  %v2408 = vpack.c.b16 %v2376, %v2344
  %v2409 = vpack.c.b16 %v2377, %v2345
  %v2410 = vpack.c.b16 %v2378, %v2346
  %v2411 = vpack.c.b16 %v2379, %v2347
  %v2412 = vpack.c.b16 %v2380, %v2348
  %v2413 = vpack.c.b16 %v2381, %v2349
  %v2414 = vpack.c.b16 %v2382, %v2350
  %v2415 = vpack.c.b16 %v2383, %v2351
  %v2416 = vpack.c.b16 %v2384, %v2352
  %v2417 = vpack.c.b16 %v2385, %v2353
  %v2418 = vpack.c.b16 %v2386, %v2354
  %v2419 = vpack.c.b16 %v2387, %v2355
  %v2420 = vpack.c.b16 %v2388, %v2356
  %v2421 = vpack.c.b16 %v2389, %v2357
  %v2422 = vpack.c.b16 %v2390, %v2358
  %v2423 = vpack.c.b16 %v2391, %v2359
  %v2424 = vpack.c.b16 %v2392, %v2360
  %v2425 = vpack.c.b16 %v2393, %v2361
  %v2426 = vpack.c.b16 %v2394, %v2362
  %v2427 = vpack.c.b16 %v2395, %v2363
  %v2428 = vpack.c.b16 %v2396, %v2364
  %v2429 = vpack.c.b16 %v2397, %v2365
  %v2430 = vpack.c.b16 %v2398, %v2366
  %v2431 = vpack.c.b16 %v2399, %v2367
  %v2432 = vpack.c.b16 %v2400, %v2368
  %v2434 = vand.u32 %v2401, %v189
  %v2437 = vand.u32 %v2402, %v189
  %v2440 = vand.u32 %v2403, %v189
  %v2443 = vand.u32 %v2404, %v189
  %v2446 = vand.u32 %v2405, %v189
  %v2449 = vand.u32 %v2406, %v189
  %v2452 = vand.u32 %v2407, %v189
  %v2455 = vand.u32 %v2408, %v189
  %v2458 = vand.u32 %v2409, %v189
  %v2461 = vand.u32 %v2410, %v189
  %v2464 = vand.u32 %v2411, %v189
  %v2467 = vand.u32 %v2412, %v189
  %v2470 = vand.u32 %v2413, %v189
  %v2473 = vand.u32 %v2414, %v189
  %v2476 = vand.u32 %v2415, %v189
  %v2479 = vand.u32 %v2416, %v189
  %v2482 = vand.u32 %v2417, %v189
  %v2485 = vand.u32 %v2418, %v189
  %v2488 = vand.u32 %v2419, %v189
  %v2491 = vand.u32 %v2420, %v189
  %v2494 = vand.u32 %v2421, %v189
  %v2497 = vand.u32 %v2422, %v189
  %v2500 = vand.u32 %v2423, %v189
  %v2503 = vand.u32 %v2424, %v189
  %v2506 = vand.u32 %v2425, %v189
  %v2509 = vand.u32 %v2426, %v189
  %v2512 = vand.u32 %v2427, %v189
  %v2515 = vand.u32 %v2428, %v189
  %v2518 = vand.u32 %v2429, %v189
  %v2521 = vand.u32 %v2430, %v189
  %v2524 = vand.u32 %v2431, %v189
  %v2527 = vand.u32 %v2432, %v189
  %2529 = vmatpush.bf16.msra.mxu0 0
  %2530 = vmatpush.bf16.msra.mxu0 0
  %2531 = vmatpush.bf16.msra.mxu0 0
  %2532 = vmatpush.bf16.msra.mxu0 0
  %2533 = vmatpush.bf16.msra.mxu0 0
  %2534 = vmatpush.bf16.msra.mxu0 0
  %2535 = vmatpush.bf16.msra.mxu0 0
  %2536 = vmatpush.bf16.msra.mxu0 %v2434
  %2537 = vmatmul.bf16.gmra.mxu0 %v184
  %v2538 = vpop.f32.mrf.mxu0
  %v2539 = vadd.f32 0.0, %v2538
  %v2540 = vpop.f32.mrf.mxu0
  %v2541 = vadd.f32 0.0, %v2540
  %2542 = vdwg.mxu0
  %2543 = vmatpush.bf16.msra.mxu0 0
  %2544 = vmatpush.bf16.msra.mxu0 0
  %2545 = vmatpush.bf16.msra.mxu0 0
  %2546 = vmatpush.bf16.msra.mxu0 0
  %2547 = vmatpush.bf16.msra.mxu0 0
  %2548 = vmatpush.bf16.msra.mxu0 0
  %2549 = vmatpush.bf16.msra.mxu0 0
  %2550 = vmatpush.bf16.msra.mxu0 %v2437
  %2551 = vmatmul.bf16.gmra.mxu0 %v184
  %v2552 = vpop.f32.mrf.mxu0
  %v2553 = vadd.f32 0.0, %v2552
  %v2554 = vpop.f32.mrf.mxu0
  %v2555 = vadd.f32 0.0, %v2554
  %2556 = vdwg.mxu0
  %2557 = vmatpush.bf16.msra.mxu0 0
  %2558 = vmatpush.bf16.msra.mxu0 0
  %2559 = vmatpush.bf16.msra.mxu0 0
  %2560 = vmatpush.bf16.msra.mxu0 0
  %2561 = vmatpush.bf16.msra.mxu0 0
  %2562 = vmatpush.bf16.msra.mxu0 0
  %2563 = vmatpush.bf16.msra.mxu0 0
  %2564 = vmatpush.bf16.msra.mxu0 %v2440
  %2565 = vmatmul.bf16.gmra.mxu0 %v184
  %v2566 = vpop.f32.mrf.mxu0
  %v2567 = vadd.f32 0.0, %v2566
  %v2568 = vpop.f32.mrf.mxu0
  %v2569 = vadd.f32 0.0, %v2568
  %2570 = vdwg.mxu0
  %2571 = vmatpush.bf16.msra.mxu0 0
  %2572 = vmatpush.bf16.msra.mxu0 0
  %2573 = vmatpush.bf16.msra.mxu0 0
  %2574 = vmatpush.bf16.msra.mxu0 0
  %2575 = vmatpush.bf16.msra.mxu0 0
  %2576 = vmatpush.bf16.msra.mxu0 0
  %2577 = vmatpush.bf16.msra.mxu0 0
  %2578 = vmatpush.bf16.msra.mxu0 %v2443
  %2579 = vmatmul.bf16.gmra.mxu0 %v184
  %v2580 = vpop.f32.mrf.mxu0
  %v2581 = vadd.f32 0.0, %v2580
  %v2582 = vpop.f32.mrf.mxu0
  %v2583 = vadd.f32 0.0, %v2582
  %2584 = vdwg.mxu0
  %2585 = vmatpush.bf16.msra.mxu0 0
  %2586 = vmatpush.bf16.msra.mxu0 0
  %2587 = vmatpush.bf16.msra.mxu0 0
  %2588 = vmatpush.bf16.msra.mxu0 0
  %2589 = vmatpush.bf16.msra.mxu0 0
  %2590 = vmatpush.bf16.msra.mxu0 0
  %2591 = vmatpush.bf16.msra.mxu0 0
  %2592 = vmatpush.bf16.msra.mxu0 %v2446
  %2593 = vmatmul.bf16.gmra.mxu0 %v184
  %v2594 = vpop.f32.mrf.mxu0
  %v2595 = vadd.f32 0.0, %v2594
  %v2596 = vpop.f32.mrf.mxu0
  %v2597 = vadd.f32 0.0, %v2596
  %2598 = vdwg.mxu0
  %2599 = vmatpush.bf16.msra.mxu0 0
  %2600 = vmatpush.bf16.msra.mxu0 0
  %2601 = vmatpush.bf16.msra.mxu0 0
  %2602 = vmatpush.bf16.msra.mxu0 0
  %2603 = vmatpush.bf16.msra.mxu0 0
  %2604 = vmatpush.bf16.msra.mxu0 0
  %2605 = vmatpush.bf16.msra.mxu0 0
  %2606 = vmatpush.bf16.msra.mxu0 %v2449
  %2607 = vmatmul.bf16.gmra.mxu0 %v184
  %v2608 = vpop.f32.mrf.mxu0
  %v2609 = vadd.f32 0.0, %v2608
  %v2610 = vpop.f32.mrf.mxu0
  %v2611 = vadd.f32 0.0, %v2610
  %2612 = vdwg.mxu0
  %2613 = vmatpush.bf16.msra.mxu0 0
  %2614 = vmatpush.bf16.msra.mxu0 0
  %2615 = vmatpush.bf16.msra.mxu0 0
  %2616 = vmatpush.bf16.msra.mxu0 0
  %2617 = vmatpush.bf16.msra.mxu0 0
  %2618 = vmatpush.bf16.msra.mxu0 0
  %2619 = vmatpush.bf16.msra.mxu0 0
  %2620 = vmatpush.bf16.msra.mxu0 %v2452
  %2621 = vmatmul.bf16.gmra.mxu0 %v184
  %v2622 = vpop.f32.mrf.mxu0
  %v2623 = vadd.f32 0.0, %v2622
  %v2624 = vpop.f32.mrf.mxu0
  %v2625 = vadd.f32 0.0, %v2624
  %2626 = vdwg.mxu0
  %2627 = vmatpush.bf16.msra.mxu0 0
  %2628 = vmatpush.bf16.msra.mxu0 0
  %2629 = vmatpush.bf16.msra.mxu0 0
  %2630 = vmatpush.bf16.msra.mxu0 0
  %2631 = vmatpush.bf16.msra.mxu0 0
  %2632 = vmatpush.bf16.msra.mxu0 0
  %2633 = vmatpush.bf16.msra.mxu0 0
  %2634 = vmatpush.bf16.msra.mxu0 %v2455
  %2635 = vmatmul.bf16.gmra.mxu0 %v184
  %v2636 = vpop.f32.mrf.mxu0
  %v2637 = vadd.f32 0.0, %v2636
  %v2638 = vpop.f32.mrf.mxu0
  %v2639 = vadd.f32 0.0, %v2638
  %2640 = vdwg.mxu0
  %2641 = vmatpush.bf16.msra.mxu0 0
  %2642 = vmatpush.bf16.msra.mxu0 0
  %2643 = vmatpush.bf16.msra.mxu0 0
  %2644 = vmatpush.bf16.msra.mxu0 0
  %2645 = vmatpush.bf16.msra.mxu0 0
  %2646 = vmatpush.bf16.msra.mxu0 0
  %2647 = vmatpush.bf16.msra.mxu0 0
  %2648 = vmatpush.bf16.msra.mxu0 %v2458
  %2649 = vmatmul.bf16.gmra.mxu0 %v184
  %v2650 = vpop.f32.mrf.mxu0
  %v2651 = vadd.f32 0.0, %v2650
  %v2652 = vpop.f32.mrf.mxu0
  %v2653 = vadd.f32 0.0, %v2652
  %2654 = vdwg.mxu0
  %2655 = vmatpush.bf16.msra.mxu0 0
  %2656 = vmatpush.bf16.msra.mxu0 0
  %2657 = vmatpush.bf16.msra.mxu0 0
  %2658 = vmatpush.bf16.msra.mxu0 0
  %2659 = vmatpush.bf16.msra.mxu0 0
  %2660 = vmatpush.bf16.msra.mxu0 0
  %2661 = vmatpush.bf16.msra.mxu0 0
  %2662 = vmatpush.bf16.msra.mxu0 %v2461
  %2663 = vmatmul.bf16.gmra.mxu0 %v184
  %v2664 = vpop.f32.mrf.mxu0
  %v2665 = vadd.f32 0.0, %v2664
  %v2666 = vpop.f32.mrf.mxu0
  %v2667 = vadd.f32 0.0, %v2666
  %2668 = vdwg.mxu0
  %2669 = vmatpush.bf16.msra.mxu0 0
  %2670 = vmatpush.bf16.msra.mxu0 0
  %2671 = vmatpush.bf16.msra.mxu0 0
  %2672 = vmatpush.bf16.msra.mxu0 0
  %2673 = vmatpush.bf16.msra.mxu0 0
  %2674 = vmatpush.bf16.msra.mxu0 0
  %2675 = vmatpush.bf16.msra.mxu0 0
  %2676 = vmatpush.bf16.msra.mxu0 %v2464
  %2677 = vmatmul.bf16.gmra.mxu0 %v184
  %v2678 = vpop.f32.mrf.mxu0
  %v2679 = vadd.f32 0.0, %v2678
  %v2680 = vpop.f32.mrf.mxu0
  %v2681 = vadd.f32 0.0, %v2680
  %2682 = vdwg.mxu0
  %2683 = vmatpush.bf16.msra.mxu0 0
  %2684 = vmatpush.bf16.msra.mxu0 0
  %2685 = vmatpush.bf16.msra.mxu0 0
  %2686 = vmatpush.bf16.msra.mxu0 0
  %2687 = vmatpush.bf16.msra.mxu0 0
  %2688 = vmatpush.bf16.msra.mxu0 0
  %2689 = vmatpush.bf16.msra.mxu0 0
  %2690 = vmatpush.bf16.msra.mxu0 %v2467
  %2691 = vmatmul.bf16.gmra.mxu0 %v184
  %v2692 = vpop.f32.mrf.mxu0
  %v2693 = vadd.f32 0.0, %v2692
  %v2694 = vpop.f32.mrf.mxu0
  %v2695 = vadd.f32 0.0, %v2694
  %2696 = vdwg.mxu0
  %2697 = vmatpush.bf16.msra.mxu0 0
  %2698 = vmatpush.bf16.msra.mxu0 0
  %2699 = vmatpush.bf16.msra.mxu0 0
  %2700 = vmatpush.bf16.msra.mxu0 0
  %2701 = vmatpush.bf16.msra.mxu0 0
  %2702 = vmatpush.bf16.msra.mxu0 0
  %2703 = vmatpush.bf16.msra.mxu0 0
  %2704 = vmatpush.bf16.msra.mxu0 %v2470
  %2705 = vmatmul.bf16.gmra.mxu0 %v184
  %v2706 = vpop.f32.mrf.mxu0
  %v2707 = vadd.f32 0.0, %v2706
  %v2708 = vpop.f32.mrf.mxu0
  %v2709 = vadd.f32 0.0, %v2708
  %2710 = vdwg.mxu0
  %2711 = vmatpush.bf16.msra.mxu0 0
  %2712 = vmatpush.bf16.msra.mxu0 0
  %2713 = vmatpush.bf16.msra.mxu0 0
  %2714 = vmatpush.bf16.msra.mxu0 0
  %2715 = vmatpush.bf16.msra.mxu0 0
  %2716 = vmatpush.bf16.msra.mxu0 0
  %2717 = vmatpush.bf16.msra.mxu0 0
  %2718 = vmatpush.bf16.msra.mxu0 %v2473
  %2719 = vmatmul.bf16.gmra.mxu0 %v184
  %v2720 = vpop.f32.mrf.mxu0
  %v2721 = vadd.f32 0.0, %v2720
  %v2722 = vpop.f32.mrf.mxu0
  %v2723 = vadd.f32 0.0, %v2722
  %2724 = vdwg.mxu0
  %2725 = vmatpush.bf16.msra.mxu0 0
  %2726 = vmatpush.bf16.msra.mxu0 0
  %2727 = vmatpush.bf16.msra.mxu0 0
  %2728 = vmatpush.bf16.msra.mxu0 0
  %2729 = vmatpush.bf16.msra.mxu0 0
  %2730 = vmatpush.bf16.msra.mxu0 0
  %2731 = vmatpush.bf16.msra.mxu0 0
  %2732 = vmatpush.bf16.msra.mxu0 %v2476
  %2733 = vmatmul.bf16.gmra.mxu0 %v184
  %v2734 = vpop.f32.mrf.mxu0
  %v2735 = vadd.f32 0.0, %v2734
  %v2736 = vpop.f32.mrf.mxu0
  %v2737 = vadd.f32 0.0, %v2736
  %2738 = vdwg.mxu0
  %2739 = vmatpush.bf16.msra.mxu0 0
  %2740 = vmatpush.bf16.msra.mxu0 0
  %2741 = vmatpush.bf16.msra.mxu0 0
  %2742 = vmatpush.bf16.msra.mxu0 0
  %2743 = vmatpush.bf16.msra.mxu0 0
  %2744 = vmatpush.bf16.msra.mxu0 0
  %2745 = vmatpush.bf16.msra.mxu0 0
  %2746 = vmatpush.bf16.msra.mxu0 %v2479
  %2747 = vmatmul.bf16.gmra.mxu0 %v184
  %v2748 = vpop.f32.mrf.mxu0
  %v2749 = vadd.f32 0.0, %v2748
  %v2750 = vpop.f32.mrf.mxu0
  %v2751 = vadd.f32 0.0, %v2750
  %2752 = vdwg.mxu0
  %2753 = vmatpush.bf16.msra.mxu0 0
  %2754 = vmatpush.bf16.msra.mxu0 0
  %2755 = vmatpush.bf16.msra.mxu0 0
  %2756 = vmatpush.bf16.msra.mxu0 0
  %2757 = vmatpush.bf16.msra.mxu0 0
  %2758 = vmatpush.bf16.msra.mxu0 0
  %2759 = vmatpush.bf16.msra.mxu0 0
  %2760 = vmatpush.bf16.msra.mxu0 %v2482
  %2761 = vmatmul.bf16.gmra.mxu0 %v184
  %v2762 = vpop.f32.mrf.mxu0
  %v2763 = vadd.f32 0.0, %v2762
  %v2764 = vpop.f32.mrf.mxu0
  %v2765 = vadd.f32 0.0, %v2764
  %2766 = vdwg.mxu0
  %2767 = vmatpush.bf16.msra.mxu0 0
  %2768 = vmatpush.bf16.msra.mxu0 0
  %2769 = vmatpush.bf16.msra.mxu0 0
  %2770 = vmatpush.bf16.msra.mxu0 0
  %2771 = vmatpush.bf16.msra.mxu0 0
  %2772 = vmatpush.bf16.msra.mxu0 0
  %2773 = vmatpush.bf16.msra.mxu0 0
  %2774 = vmatpush.bf16.msra.mxu0 %v2485
  %2775 = vmatmul.bf16.gmra.mxu0 %v184
  %v2776 = vpop.f32.mrf.mxu0
  %v2777 = vadd.f32 0.0, %v2776
  %v2778 = vpop.f32.mrf.mxu0
  %v2779 = vadd.f32 0.0, %v2778
  %2780 = vdwg.mxu0
  %2781 = vmatpush.bf16.msra.mxu0 0
  %2782 = vmatpush.bf16.msra.mxu0 0
  %2783 = vmatpush.bf16.msra.mxu0 0
  %2784 = vmatpush.bf16.msra.mxu0 0
  %2785 = vmatpush.bf16.msra.mxu0 0
  %2786 = vmatpush.bf16.msra.mxu0 0
  %2787 = vmatpush.bf16.msra.mxu0 0
  %2788 = vmatpush.bf16.msra.mxu0 %v2488
  %2789 = vmatmul.bf16.gmra.mxu0 %v184
  %v2790 = vpop.f32.mrf.mxu0
  %v2791 = vadd.f32 0.0, %v2790
  %v2792 = vpop.f32.mrf.mxu0
  %v2793 = vadd.f32 0.0, %v2792
  %2794 = vdwg.mxu0
  %2795 = vmatpush.bf16.msra.mxu0 0
  %2796 = vmatpush.bf16.msra.mxu0 0
  %2797 = vmatpush.bf16.msra.mxu0 0
  %2798 = vmatpush.bf16.msra.mxu0 0
  %2799 = vmatpush.bf16.msra.mxu0 0
  %2800 = vmatpush.bf16.msra.mxu0 0
  %2801 = vmatpush.bf16.msra.mxu0 0
  %2802 = vmatpush.bf16.msra.mxu0 %v2491
  %2803 = vmatmul.bf16.gmra.mxu0 %v184
  %v2804 = vpop.f32.mrf.mxu0
  %v2805 = vadd.f32 0.0, %v2804
  %v2806 = vpop.f32.mrf.mxu0
  %v2807 = vadd.f32 0.0, %v2806
  %2808 = vdwg.mxu0
  %2809 = vmatpush.bf16.msra.mxu0 0
  %2810 = vmatpush.bf16.msra.mxu0 0
  %2811 = vmatpush.bf16.msra.mxu0 0
  %2812 = vmatpush.bf16.msra.mxu0 0
  %2813 = vmatpush.bf16.msra.mxu0 0
  %2814 = vmatpush.bf16.msra.mxu0 0
  %2815 = vmatpush.bf16.msra.mxu0 0
  %2816 = vmatpush.bf16.msra.mxu0 %v2494
  %2817 = vmatmul.bf16.gmra.mxu0 %v184
  %v2818 = vpop.f32.mrf.mxu0
  %v2819 = vadd.f32 0.0, %v2818
  %v2820 = vpop.f32.mrf.mxu0
  %v2821 = vadd.f32 0.0, %v2820
  %2822 = vdwg.mxu0
  %2823 = vmatpush.bf16.msra.mxu0 0
  %2824 = vmatpush.bf16.msra.mxu0 0
  %2825 = vmatpush.bf16.msra.mxu0 0
  %2826 = vmatpush.bf16.msra.mxu0 0
  %2827 = vmatpush.bf16.msra.mxu0 0
  %2828 = vmatpush.bf16.msra.mxu0 0
  %2829 = vmatpush.bf16.msra.mxu0 0
  %2830 = vmatpush.bf16.msra.mxu0 %v2497
  %2831 = vmatmul.bf16.gmra.mxu0 %v184
  %v2832 = vpop.f32.mrf.mxu0
  %v2833 = vadd.f32 0.0, %v2832
  %v2834 = vpop.f32.mrf.mxu0
  %v2835 = vadd.f32 0.0, %v2834
  %2836 = vdwg.mxu0
  %2837 = vmatpush.bf16.msra.mxu0 0
  %2838 = vmatpush.bf16.msra.mxu0 0
  %2839 = vmatpush.bf16.msra.mxu0 0
  %2840 = vmatpush.bf16.msra.mxu0 0
  %2841 = vmatpush.bf16.msra.mxu0 0
  %2842 = vmatpush.bf16.msra.mxu0 0
  %2843 = vmatpush.bf16.msra.mxu0 0
  %2844 = vmatpush.bf16.msra.mxu0 %v2500
  %2845 = vmatmul.bf16.gmra.mxu0 %v184
  %v2846 = vpop.f32.mrf.mxu0
  %v2847 = vadd.f32 0.0, %v2846
  %v2848 = vpop.f32.mrf.mxu0
  %v2849 = vadd.f32 0.0, %v2848
  %2850 = vdwg.mxu0
  %2851 = vmatpush.bf16.msra.mxu0 0
  %2852 = vmatpush.bf16.msra.mxu0 0
  %2853 = vmatpush.bf16.msra.mxu0 0
  %2854 = vmatpush.bf16.msra.mxu0 0
  %2855 = vmatpush.bf16.msra.mxu0 0
  %2856 = vmatpush.bf16.msra.mxu0 0
  %2857 = vmatpush.bf16.msra.mxu0 0
  %2858 = vmatpush.bf16.msra.mxu0 %v2503
  %2859 = vmatmul.bf16.gmra.mxu0 %v184
  %v2860 = vpop.f32.mrf.mxu0
  %v2861 = vadd.f32 0.0, %v2860
  %v2862 = vpop.f32.mrf.mxu0
  %v2863 = vadd.f32 0.0, %v2862
  %2864 = vdwg.mxu0
  %2865 = vmatpush.bf16.msra.mxu0 0
  %2866 = vmatpush.bf16.msra.mxu0 0
  %2867 = vmatpush.bf16.msra.mxu0 0
  %2868 = vmatpush.bf16.msra.mxu0 0
  %2869 = vmatpush.bf16.msra.mxu0 0
  %2870 = vmatpush.bf16.msra.mxu0 0
  %2871 = vmatpush.bf16.msra.mxu0 0
  %2872 = vmatpush.bf16.msra.mxu0 %v2506
  %2873 = vmatmul.bf16.gmra.mxu0 %v184
  %v2874 = vpop.f32.mrf.mxu0
  %v2875 = vadd.f32 0.0, %v2874
  %v2876 = vpop.f32.mrf.mxu0
  %v2877 = vadd.f32 0.0, %v2876
  %2878 = vdwg.mxu0
  %2879 = vmatpush.bf16.msra.mxu0 0
  %2880 = vmatpush.bf16.msra.mxu0 0
  %2881 = vmatpush.bf16.msra.mxu0 0
  %2882 = vmatpush.bf16.msra.mxu0 0
  %2883 = vmatpush.bf16.msra.mxu0 0
  %2884 = vmatpush.bf16.msra.mxu0 0
  %2885 = vmatpush.bf16.msra.mxu0 0
  %2886 = vmatpush.bf16.msra.mxu0 %v2509
  %2887 = vmatmul.bf16.gmra.mxu0 %v184
  %v2888 = vpop.f32.mrf.mxu0
  %v2889 = vadd.f32 0.0, %v2888
  %v2890 = vpop.f32.mrf.mxu0
  %v2891 = vadd.f32 0.0, %v2890
  %2892 = vdwg.mxu0
  %2893 = vmatpush.bf16.msra.mxu0 0
  %2894 = vmatpush.bf16.msra.mxu0 0
  %2895 = vmatpush.bf16.msra.mxu0 0
  %2896 = vmatpush.bf16.msra.mxu0 0
  %2897 = vmatpush.bf16.msra.mxu0 0
  %2898 = vmatpush.bf16.msra.mxu0 0
  %2899 = vmatpush.bf16.msra.mxu0 0
  %2900 = vmatpush.bf16.msra.mxu0 %v2512
  %2901 = vmatmul.bf16.gmra.mxu0 %v184
  %v2902 = vpop.f32.mrf.mxu0
  %v2903 = vadd.f32 0.0, %v2902
  %v2904 = vpop.f32.mrf.mxu0
  %v2905 = vadd.f32 0.0, %v2904
  %2906 = vdwg.mxu0
  %2907 = vmatpush.bf16.msra.mxu0 0
  %2908 = vmatpush.bf16.msra.mxu0 0
  %2909 = vmatpush.bf16.msra.mxu0 0
  %2910 = vmatpush.bf16.msra.mxu0 0
  %2911 = vmatpush.bf16.msra.mxu0 0
  %2912 = vmatpush.bf16.msra.mxu0 0
  %2913 = vmatpush.bf16.msra.mxu0 0
  %2914 = vmatpush.bf16.msra.mxu0 %v2515
  %2915 = vmatmul.bf16.gmra.mxu0 %v184
  %v2916 = vpop.f32.mrf.mxu0
  %v2917 = vadd.f32 0.0, %v2916
  %v2918 = vpop.f32.mrf.mxu0
  %v2919 = vadd.f32 0.0, %v2918
  %2920 = vdwg.mxu0
  %2921 = vmatpush.bf16.msra.mxu0 0
  %2922 = vmatpush.bf16.msra.mxu0 0
  %2923 = vmatpush.bf16.msra.mxu0 0
  %2924 = vmatpush.bf16.msra.mxu0 0
  %2925 = vmatpush.bf16.msra.mxu0 0
  %2926 = vmatpush.bf16.msra.mxu0 0
  %2927 = vmatpush.bf16.msra.mxu0 0
  %2928 = vmatpush.bf16.msra.mxu0 %v2518
  %2929 = vmatmul.bf16.gmra.mxu0 %v184
  %v2930 = vpop.f32.mrf.mxu0
  %v2931 = vadd.f32 0.0, %v2930
  %v2932 = vpop.f32.mrf.mxu0
  %v2933 = vadd.f32 0.0, %v2932
  %2934 = vdwg.mxu0
  %2935 = vmatpush.bf16.msra.mxu0 0
  %2936 = vmatpush.bf16.msra.mxu0 0
  %2937 = vmatpush.bf16.msra.mxu0 0
  %2938 = vmatpush.bf16.msra.mxu0 0
  %2939 = vmatpush.bf16.msra.mxu0 0
  %2940 = vmatpush.bf16.msra.mxu0 0
  %2941 = vmatpush.bf16.msra.mxu0 0
  %2942 = vmatpush.bf16.msra.mxu0 %v2521
  %2943 = vmatmul.bf16.gmra.mxu0 %v184
  %v2944 = vpop.f32.mrf.mxu0
  %v2945 = vadd.f32 0.0, %v2944
  %v2946 = vpop.f32.mrf.mxu0
  %v2947 = vadd.f32 0.0, %v2946
  %2948 = vdwg.mxu0
  %2949 = vmatpush.bf16.msra.mxu0 0
  %2950 = vmatpush.bf16.msra.mxu0 0
  %2951 = vmatpush.bf16.msra.mxu0 0
  %2952 = vmatpush.bf16.msra.mxu0 0
  %2953 = vmatpush.bf16.msra.mxu0 0
  %2954 = vmatpush.bf16.msra.mxu0 0
  %2955 = vmatpush.bf16.msra.mxu0 0
  %2956 = vmatpush.bf16.msra.mxu0 %v2524
  %2957 = vmatmul.bf16.gmra.mxu0 %v184
  %v2958 = vpop.f32.mrf.mxu0
  %v2959 = vadd.f32 0.0, %v2958
  %v2960 = vpop.f32.mrf.mxu0
  %v2961 = vadd.f32 0.0, %v2960
  %2962 = vdwg.mxu0
  %2963 = vmatpush.bf16.msra.mxu0 0
  %2964 = vmatpush.bf16.msra.mxu0 0
  %2965 = vmatpush.bf16.msra.mxu0 0
  %2966 = vmatpush.bf16.msra.mxu0 0
  %2967 = vmatpush.bf16.msra.mxu0 0
  %2968 = vmatpush.bf16.msra.mxu0 0
  %2969 = vmatpush.bf16.msra.mxu0 0
  %2970 = vmatpush.bf16.msra.mxu0 %v2527
  %2971 = vmatmul.bf16.gmra.mxu0 %v184
  %v2972 = vpop.f32.mrf.mxu0
  %v2973 = vadd.f32 0.0, %v2972
  %v2974 = vpop.f32.mrf.mxu0
  %v2975 = vadd.f32 0.0, %v2974
  %2976 = vdwg.mxu0
  %v2977 = vmax.f32 %v2208, %v2539
  %v2978 = vmax.f32 %v2209, %v2553
  %v2979 = vmax.f32 %v2210, %v2567
  %v2980 = vmax.f32 %v2211, %v2581
  %v2981 = vmax.f32 %v2212, %v2595
  %v2982 = vmax.f32 %v2213, %v2609
  %v2983 = vmax.f32 %v2214, %v2623
  %v2984 = vmax.f32 %v2215, %v2637
  %v2985 = vmax.f32 %v2216, %v2651
  %v2986 = vmax.f32 %v2217, %v2665
  %v2987 = vmax.f32 %v2218, %v2679
  %v2988 = vmax.f32 %v2219, %v2693
  %v2989 = vmax.f32 %v2220, %v2707
  %v2990 = vmax.f32 %v2221, %v2721
  %v2991 = vmax.f32 %v2222, %v2735
  %v2992 = vmax.f32 %v2223, %v2749
  %v2993 = vmax.f32 %v2224, %v2763
  %v2994 = vmax.f32 %v2225, %v2777
  %v2995 = vmax.f32 %v2226, %v2791
  %v2996 = vmax.f32 %v2227, %v2805
  %v2997 = vmax.f32 %v2228, %v2819
  %v2998 = vmax.f32 %v2229, %v2833
  %v2999 = vmax.f32 %v2230, %v2847
  %v3000 = vmax.f32 %v2231, %v2861
  %v3001 = vmax.f32 %v2232, %v2875
  %v3002 = vmax.f32 %v2233, %v2889
  %v3003 = vmax.f32 %v2234, %v2903
  %v3004 = vmax.f32 %v2235, %v2917
  %v3005 = vmax.f32 %v2236, %v2931
  %v3006 = vmax.f32 %v2237, %v2945
  %v3007 = vmax.f32 %v2238, %v2959
  %v3008 = vmax.f32 %v2239, %v2973
  %v3009 = vmax.f32 %v2240, %v2541
  %v3010 = vmax.f32 %v2241, %v2555
  %v3011 = vmax.f32 %v2242, %v2569
  %v3012 = vmax.f32 %v2243, %v2583
  %v3013 = vmax.f32 %v2244, %v2597
  %v3014 = vmax.f32 %v2245, %v2611
  %v3015 = vmax.f32 %v2246, %v2625
  %v3016 = vmax.f32 %v2247, %v2639
  %v3017 = vmax.f32 %v2248, %v2653
  %v3018 = vmax.f32 %v2249, %v2667
  %v3019 = vmax.f32 %v2250, %v2681
  %v3020 = vmax.f32 %v2251, %v2695
  %v3021 = vmax.f32 %v2252, %v2709
  %v3022 = vmax.f32 %v2253, %v2723
  %v3023 = vmax.f32 %v2254, %v2737
  %v3024 = vmax.f32 %v2255, %v2751
  %v3025 = vmax.f32 %v2256, %v2765
  %v3026 = vmax.f32 %v2257, %v2779
  %v3027 = vmax.f32 %v2258, %v2793
  %v3028 = vmax.f32 %v2259, %v2807
  %v3029 = vmax.f32 %v2260, %v2821
  %v3030 = vmax.f32 %v2261, %v2835
  %v3031 = vmax.f32 %v2262, %v2849
  %v3032 = vmax.f32 %v2263, %v2863
  %v3033 = vmax.f32 %v2264, %v2877
  %v3034 = vmax.f32 %v2265, %v2891
  %v3035 = vmax.f32 %v2266, %v2905
  %v3036 = vmax.f32 %v2267, %v2919
  %v3037 = vmax.f32 %v2268, %v2933
  %v3038 = vmax.f32 %v2269, %v2947
  %v3039 = vmax.f32 %v2270, %v2961
  %v3040 = vmax.f32 %v2271, %v2975
  %v3041 = vld [vmem:[%s2] sm:$0xff]
  %v3042 = vld [vmem:[%s2 + $0x8] sm:$0xff]
  %3044 = vset.pattern.permute.xlu0 0
  %3045 = vperm.xlu0 %3044, %v3041
  %v3046 = vpop.permute.xlu0 %3045
  %3049 = vset.pattern.permute.xlu0 0
  %3050 = vperm.xlu0 %3049, %v3042
  %v3051 = vpop.permute.xlu0 %3050
  %v3053 = vadd.f32 %v2977, %v3046
  %v3054 = vadd.f32 %v2978, %v3046
  %v3055 = vadd.f32 %v2979, %v3046
  %v3056 = vadd.f32 %v2980, %v3046
  %v3057 = vadd.f32 %v2981, %v3046
  %v3058 = vadd.f32 %v2982, %v3046
  %v3059 = vadd.f32 %v2983, %v3046
  %v3060 = vadd.f32 %v2984, %v3046
  %v3061 = vadd.f32 %v2985, %v3046
  %v3062 = vadd.f32 %v2986, %v3046
  %v3063 = vadd.f32 %v2987, %v3046
  %v3064 = vadd.f32 %v2988, %v3046
  %v3065 = vadd.f32 %v2989, %v3046
  %v3066 = vadd.f32 %v2990, %v3046
  %v3067 = vadd.f32 %v2991, %v3046
  %v3068 = vadd.f32 %v2992, %v3046
  %v3069 = vadd.f32 %v2993, %v3046
  %v3070 = vadd.f32 %v2994, %v3046
  %v3071 = vadd.f32 %v2995, %v3046
  %v3072 = vadd.f32 %v2996, %v3046
  %v3073 = vadd.f32 %v2997, %v3046
  %v3074 = vadd.f32 %v2998, %v3046
  %v3075 = vadd.f32 %v2999, %v3046
  %v3076 = vadd.f32 %v3000, %v3046
  %v3077 = vadd.f32 %v3001, %v3046
  %v3078 = vadd.f32 %v3002, %v3046
  %v3079 = vadd.f32 %v3003, %v3046
  %v3080 = vadd.f32 %v3004, %v3046
  %v3081 = vadd.f32 %v3005, %v3046
  %v3082 = vadd.f32 %v3006, %v3046
  %v3083 = vadd.f32 %v3007, %v3046
  %v3084 = vadd.f32 %v3008, %v3046
  %v3085 = vadd.f32 %v3009, %v3051
  %v3086 = vadd.f32 %v3010, %v3051
  %v3087 = vadd.f32 %v3011, %v3051
  %v3088 = vadd.f32 %v3012, %v3051
  %v3089 = vadd.f32 %v3013, %v3051
  %v3090 = vadd.f32 %v3014, %v3051
  %v3091 = vadd.f32 %v3015, %v3051
  %v3092 = vadd.f32 %v3016, %v3051
  %v3093 = vadd.f32 %v3017, %v3051
  %v3094 = vadd.f32 %v3018, %v3051
  %v3095 = vadd.f32 %v3019, %v3051
  %v3096 = vadd.f32 %v3020, %v3051
  %v3097 = vadd.f32 %v3021, %v3051
  %v3098 = vadd.f32 %v3022, %v3051
  %v3099 = vadd.f32 %v3023, %v3051
  %v3100 = vadd.f32 %v3024, %v3051
  %v3101 = vadd.f32 %v3025, %v3051
  %v3102 = vadd.f32 %v3026, %v3051
  %v3103 = vadd.f32 %v3027, %v3051
  %v3104 = vadd.f32 %v3028, %v3051
  %v3105 = vadd.f32 %v3029, %v3051
  %v3106 = vadd.f32 %v3030, %v3051
  %v3107 = vadd.f32 %v3031, %v3051
  %v3108 = vadd.f32 %v3032, %v3051
  %v3109 = vadd.f32 %v3033, %v3051
  %v3110 = vadd.f32 %v3034, %v3051
  %v3111 = vadd.f32 %v3035, %v3051
  %v3112 = vadd.f32 %v3036, %v3051
  %v3113 = vadd.f32 %v3037, %v3051
  %v3114 = vadd.f32 %v3038, %v3051
  %v3115 = vadd.f32 %v3039, %v3051
  %v3116 = vadd.f32 %v3040, %v3051
  %v3117 = vmax.f32 %v3053, 0.0
  %v3118 = vmax.f32 %v3054, 0.0
  %v3119 = vmax.f32 %v3055, 0.0
  %v3120 = vmax.f32 %v3056, 0.0
  %v3121 = vmax.f32 %v3057, 0.0
  %v3122 = vmax.f32 %v3058, 0.0
  %v3123 = vmax.f32 %v3059, 0.0
  %v3124 = vmax.f32 %v3060, 0.0
  %v3125 = vmax.f32 %v3061, 0.0
  %v3126 = vmax.f32 %v3062, 0.0
  %v3127 = vmax.f32 %v3063, 0.0
  %v3128 = vmax.f32 %v3064, 0.0
  %v3129 = vmax.f32 %v3065, 0.0
  %v3130 = vmax.f32 %v3066, 0.0
  %v3131 = vmax.f32 %v3067, 0.0
  %v3132 = vmax.f32 %v3068, 0.0
  %v3133 = vmax.f32 %v3069, 0.0
  %v3134 = vmax.f32 %v3070, 0.0
  %v3135 = vmax.f32 %v3071, 0.0
  %v3136 = vmax.f32 %v3072, 0.0
  %v3137 = vmax.f32 %v3073, 0.0
  %v3138 = vmax.f32 %v3074, 0.0
  %v3139 = vmax.f32 %v3075, 0.0
  %v3140 = vmax.f32 %v3076, 0.0
  %v3141 = vmax.f32 %v3077, 0.0
  %v3142 = vmax.f32 %v3078, 0.0
  %v3143 = vmax.f32 %v3079, 0.0
  %v3144 = vmax.f32 %v3080, 0.0
  %v3145 = vmax.f32 %v3081, 0.0
  %v3146 = vmax.f32 %v3082, 0.0
  %v3147 = vmax.f32 %v3083, 0.0
  %v3148 = vmax.f32 %v3084, 0.0
  %v3149 = vmax.f32 %v3085, 0.0
  %v3150 = vmax.f32 %v3086, 0.0
  %v3151 = vmax.f32 %v3087, 0.0
  %v3152 = vmax.f32 %v3088, 0.0
  %v3153 = vmax.f32 %v3089, 0.0
  %v3154 = vmax.f32 %v3090, 0.0
  %v3155 = vmax.f32 %v3091, 0.0
  %v3156 = vmax.f32 %v3092, 0.0
  %v3157 = vmax.f32 %v3093, 0.0
  %v3158 = vmax.f32 %v3094, 0.0
  %v3159 = vmax.f32 %v3095, 0.0
  %v3160 = vmax.f32 %v3096, 0.0
  %v3161 = vmax.f32 %v3097, 0.0
  %v3162 = vmax.f32 %v3098, 0.0
  %v3163 = vmax.f32 %v3099, 0.0
  %v3164 = vmax.f32 %v3100, 0.0
  %v3165 = vmax.f32 %v3101, 0.0
  %v3166 = vmax.f32 %v3102, 0.0
  %v3167 = vmax.f32 %v3103, 0.0
  %v3168 = vmax.f32 %v3104, 0.0
  %v3169 = vmax.f32 %v3105, 0.0
  %v3170 = vmax.f32 %v3106, 0.0
  %v3171 = vmax.f32 %v3107, 0.0
  %v3172 = vmax.f32 %v3108, 0.0
  %v3173 = vmax.f32 %v3109, 0.0
  %v3174 = vmax.f32 %v3110, 0.0
  %v3175 = vmax.f32 %v3111, 0.0
  %v3176 = vmax.f32 %v3112, 0.0
  %v3177 = vmax.f32 %v3113, 0.0
  %v3178 = vmax.f32 %v3114, 0.0
  %v3179 = vmax.f32 %v3115, 0.0
  %v3180 = vmax.f32 %v3116, 0.0
  %v3181 = vpack.c.bf16 %v3118, %v3117
  %v3182 = vpack.c.bf16 %v3120, %v3119
  %v3183 = vpack.c.bf16 %v3122, %v3121
  %v3184 = vpack.c.bf16 %v3124, %v3123
  %v3185 = vpack.c.bf16 %v3126, %v3125
  %v3186 = vpack.c.bf16 %v3128, %v3127
  %v3187 = vpack.c.bf16 %v3130, %v3129
  %v3188 = vpack.c.bf16 %v3132, %v3131
  %v3189 = vpack.c.bf16 %v3134, %v3133
  %v3190 = vpack.c.bf16 %v3136, %v3135
  %v3191 = vpack.c.bf16 %v3138, %v3137
  %v3192 = vpack.c.bf16 %v3140, %v3139
  %v3193 = vpack.c.bf16 %v3142, %v3141
  %v3194 = vpack.c.bf16 %v3144, %v3143
  %v3195 = vpack.c.bf16 %v3146, %v3145
  %v3196 = vpack.c.bf16 %v3148, %v3147
  %v3197 = vpack.c.bf16 %v3150, %v3149
  %v3198 = vpack.c.bf16 %v3152, %v3151
  %v3199 = vpack.c.bf16 %v3154, %v3153
  %v3200 = vpack.c.bf16 %v3156, %v3155
  %v3201 = vpack.c.bf16 %v3158, %v3157
  %v3202 = vpack.c.bf16 %v3160, %v3159
  %v3203 = vpack.c.bf16 %v3162, %v3161
  %v3204 = vpack.c.bf16 %v3164, %v3163
  %v3205 = vpack.c.bf16 %v3166, %v3165
  %v3206 = vpack.c.bf16 %v3168, %v3167
  %v3207 = vpack.c.bf16 %v3170, %v3169
  %v3208 = vpack.c.bf16 %v3172, %v3171
  %v3209 = vpack.c.bf16 %v3174, %v3173
  %v3210 = vpack.c.bf16 %v3176, %v3175
  %v3211 = vpack.c.bf16 %v3178, %v3177
  %v3212 = vpack.c.bf16 %v3180, %v3179
  %3213 = vst [vmem:[%s3] sm:$0xff] %v3181
  %3214 = vst [vmem:[%s3 + $0x8] sm:$0xff] %v3182
  %3215 = vst [vmem:[%s3 + $0x10] sm:$0xff] %v3183
  %3216 = vst [vmem:[%s3 + $0x18] sm:$0xff] %v3184
  %3217 = vst [vmem:[%s3 + $0x20] sm:$0xff] %v3185
  %3218 = vst [vmem:[%s3 + $0x28] sm:$0xff] %v3186
  %3219 = vst [vmem:[%s3 + $0x30] sm:$0xff] %v3187
  %3220 = vst [vmem:[%s3 + $0x38] sm:$0xff] %v3188
  %3221 = vst [vmem:[%s3 + $0x40] sm:$0xff] %v3189
  %3222 = vst [vmem:[%s3 + $0x48] sm:$0xff] %v3190
  %3223 = vst [vmem:[%s3 + $0x50] sm:$0xff] %v3191
  %3224 = vst [vmem:[%s3 + $0x58] sm:$0xff] %v3192
  %3225 = vst [vmem:[%s3 + $0x60] sm:$0xff] %v3193
  %3226 = vst [vmem:[%s3 + $0x68] sm:$0xff] %v3194
  %3227 = vst [vmem:[%s3 + $0x70] sm:$0xff] %v3195
  %vm3228 = vcmask 670724
  %vm3229 = vmor %vm3228, %vm186
  %3230 = vst.msk [vmem:[%s3 + $0x78] sm:$0xff] %vm3229, %v3196
  %3231 = vst [vmem:[%s3 + $0x80] sm:$0xff] %v3197
  %3232 = vst [vmem:[%s3 + $0x88] sm:$0xff] %v3198
  %3233 = vst [vmem:[%s3 + $0x90] sm:$0xff] %v3199
  %3234 = vst [vmem:[%s3 + $0x98] sm:$0xff] %v3200
  %3235 = vst [vmem:[%s3 + $0xa0] sm:$0xff] %v3201
  %3236 = vst [vmem:[%s3 + $0xa8] sm:$0xff] %v3202
  %3237 = vst [vmem:[%s3 + $0xb0] sm:$0xff] %v3203
  %3238 = vst [vmem:[%s3 + $0xb8] sm:$0xff] %v3204
  %3239 = vst [vmem:[%s3 + $0xc0] sm:$0xff] %v3205
  %3240 = vst [vmem:[%s3 + $0xc8] sm:$0xff] %v3206
  %3241 = vst [vmem:[%s3 + $0xd0] sm:$0xff] %v3207
  %3242 = vst [vmem:[%s3 + $0xd8] sm:$0xff] %v3208
  %3243 = vst [vmem:[%s3 + $0xe0] sm:$0xff] %v3209
  %3244 = vst [vmem:[%s3 + $0xe8] sm:$0xff] %v3210
  %3245 = vst [vmem:[%s3 + $0xf0] sm:$0xff] %v3211
  %3246 = vst.msk [vmem:[%s3 + $0xf8] sm:$0xff] %vm3229, %v3212
  // Predicated region
  $region14: #{cnn_forward.2} parent=0 // pred_check
    _
  $region15: #{cnn_forward.2} parent=0 // pred_check_branch
    %3248 = sbr.rel (0) target = $region17
  $region16: #{cnn_forward.2} parent=0 // pred_region
    _
  $region17: #{cnn_forward.2} parent=0 // pred_fallthru
    _
  // Predicated region
  $region18: #{cnn_forward.2} parent=0 // pred_check
    _
  $region19: #{cnn_forward.2} parent=0 // pred_check_branch
    %3250 = sbr.rel (0) target = $region21
  $region20: #{cnn_forward.2} parent=0 // pred_region
    _
  $region21: #{cnn_forward.2} parent=0 // pred_fallthru
    _

// kernel: cnn_forward.3
$region0: #{cnn_forward.3}
  #allocation0 [shape = 'u32[]', space=smem, size = 0x4, offset = 0x4, fixed_abs, tag = 'smem constant byte address 0x4 - core index']
  #allocation1 [shape = 'u32[72,128]{1,0:T(1,128)}', space=vmem, size = 0x9000, scoped, tag = 'internal scratch']
  %s0 = inlined_call_operand.vmem [shape: bf16[32,144], index: 0, kind: input, shape index: {}]
  %s1 = inlined_call_operand.vmem [shape: bf16[4,144,50], index: 1, kind: input, shape index: {}]
  %s2 = inlined_call_operand.vmem [shape: f32[32,1], index: 2, kind: input, shape index: {}]
  %s3 = inlined_call_operand.vmem [shape: f32[32,50], index: 3, kind: output, shape index: {}]
  %s4 = sld [smem:[#allocation0]]
  $region22: #{cnn_forward.3} parent=0
    _
  %s6 = ssub.s32 1, %s4
  %s7 = scalar_select 0, %s6, %s4
  // Predicated region
  $region2: #{cnn_forward.3} parent=0 // pred_check
    _
  $region3: #{cnn_forward.3} parent=0 // pred_check_branch
    %9 = sbr.rel (0) target = $region5
  $region4: #{cnn_forward.3} parent=0 // pred_region
    _
  $region5: #{cnn_forward.3} parent=0 // pred_fallthru
    _
  // Predicated region
  $region6: #{cnn_forward.3} parent=0 // pred_check
    _
  $region7: #{cnn_forward.3} parent=0 // pred_check_branch
    %11 = sbr.rel (0) target = $region9
  $region8: #{cnn_forward.3} parent=0 // pred_region
    _
  $region9: #{cnn_forward.3} parent=0 // pred_fallthru
    _
  // Predicated region
  $region10: #{cnn_forward.3} parent=0 // pred_check
    _
  $region11: #{cnn_forward.3} parent=0 // pred_check_branch
    %13 = sbr.rel (0) target = $region13
  $region12: #{cnn_forward.3} parent=0 // pred_region
    _
  $region13: #{cnn_forward.3} parent=0 // pred_fallthru
    _
  %v15 = vld [vmem:[%s0] sm:$0xff]
  %v16 = vld [vmem:[%s0 + $0x8] sm:$0xff]
  %v17 = vld [vmem:[%s0 + $0x10] sm:$0xff]
  %v18 = vld [vmem:[%s0 + $0x18] sm:$0xff]
  %v19 = vld [vmem:[%s1] sm:$0xf]
  %v20 = vld [vmem:[%s1 + $0x4] sm:$0xf]
  %v21 = vld [vmem:[%s1 + $0x8] sm:$0xf]
  %v22 = vld [vmem:[%s1 + $0xc] sm:$0xf]
  %v23 = vld [vmem:[%s1 + $0x10] sm:$0xf]
  %v24 = vld [vmem:[%s1 + $0x14] sm:$0xf]
  %v25 = vld [vmem:[%s1 + $0x18] sm:$0xf]
  %v26 = vld [vmem:[%s1 + $0x1c] sm:$0xf]
  %v27 = vld [vmem:[%s1 + $0x20] sm:$0xf]
  %v28 = vld [vmem:[%s1 + $0x24] sm:$0xf]
  %v29 = vld [vmem:[%s1 + $0x28] sm:$0xf]
  %v30 = vld [vmem:[%s1 + $0x2c] sm:$0xf]
  %v31 = vld [vmem:[%s1 + $0x30] sm:$0xf]
  %v32 = vld [vmem:[%s1 + $0x34] sm:$0xf]
  %v33 = vld [vmem:[%s1 + $0x38] sm:$0xf]
  %v34 = vld [vmem:[%s1 + $0x3c] sm:$0xf]
  %v35 = vld [vmem:[%s1 + $0x40] sm:$0xf]
  %v36 = vld [vmem:[%s1 + $0x44] sm:$0xf]
  %v41 = vunpack.c.l.b16 %v15
  %v42 = vunpack.c.h.b16 %v15
  %v43 = vunpack.c.l.b16 %v16
  %v44 = vunpack.c.h.b16 %v16
  %v45 = vunpack.c.l.b16 %v17
  %v46 = vunpack.c.h.b16 %v17
  %v47 = vunpack.c.l.b16 %v18
  %v48 = vunpack.c.h.b16 %v18
  %v49 = vpack.c.b16 %v43, %v41
  %v50 = vpack.c.b16 %v44, %v42
  %v51 = vpack.c.b16 %v47, %v45
  %v52 = vpack.c.b16 %v48, %v46
  %v73 = vunpack.c.l.b16 %v19
  %v74 = vunpack.c.l.b16 %v20
  %v75 = vunpack.c.l.b16 %v21
  %v76 = vunpack.c.l.b16 %v22
  %v77 = vunpack.c.l.b16 %v23
  %v78 = vunpack.c.l.b16 %v24
  %v79 = vunpack.c.l.b16 %v25
  %v80 = vunpack.c.l.b16 %v26
  %v81 = vunpack.c.l.b16 %v27
  %v82 = vunpack.c.l.b16 %v28
  %v83 = vunpack.c.l.b16 %v29
  %v84 = vunpack.c.l.b16 %v30
  %v85 = vunpack.c.l.b16 %v31
  %v86 = vunpack.c.l.b16 %v32
  %v87 = vunpack.c.l.b16 %v33
  %v88 = vunpack.c.l.b16 %v34
  %v89 = vunpack.c.l.b16 %v35
  %v90 = vunpack.c.l.b16 %v36
  %v91 = vpack.c.b16 %v74, %v73
  %v92 = vpack.c.b16 %v76, %v75
  %v93 = vpack.c.b16 %v78, %v77
  %v94 = vpack.c.b16 %v80, %v79
  %v95 = vpack.c.b16 %v82, %v81
  %v96 = vpack.c.b16 %v84, %v83
  %v97 = vpack.c.b16 %v86, %v85
  %v98 = vpack.c.b16 %v88, %v87
  %v99 = vpack.c.b16 %v90, %v89
  %vm109 = vcmask 130048
  %v111 = vsel %vm109, %v50, 0
  %v114 = vsel %vm109, %v52, 0
  %116 = vmatpush.bf16.msra.mxu0 %v98
  %117 = vmatpush.bf16.msra.mxu0 %v97
  %118 = vmatpush.bf16.msra.mxu0 %v96
  %119 = vmatpush.bf16.msra.mxu0 %v95
  %120 = vmatpush.bf16.msra.mxu0 %v94
  %121 = vmatpush.bf16.msra.mxu0 %v93
  %122 = vmatpush.bf16.msra.mxu0 %v92
  %123 = vmatpush.bf16.msra.mxu0 %v91
  %124 = vmatmul.bf16.gmra.mxu0 %v49
  %v125 = vpop.f32.mrf.mxu0
  %v126 = vadd.f32 0.0, %v125
  %v127 = vpop.f32.mrf.mxu0
  %v128 = vadd.f32 0.0, %v127
  %129 = vmatmul.bf16.gmra.mxu0 %v51
  %v130 = vpop.f32.mrf.mxu0
  %v131 = vadd.f32 0.0, %v130
  %v132 = vpop.f32.mrf.mxu0
  %v133 = vadd.f32 0.0, %v132
  %134 = vdwg.mxu0
  %135 = vmatpush.bf16.msra.mxu0 0
  %136 = vmatpush.bf16.msra.mxu0 0
  %137 = vmatpush.bf16.msra.mxu0 0
  %138 = vmatpush.bf16.msra.mxu0 0
  %139 = vmatpush.bf16.msra.mxu0 0
  %140 = vmatpush.bf16.msra.mxu0 0
  %141 = vmatpush.bf16.msra.mxu0 0
  %142 = vmatpush.bf16.msra.mxu0 %v99
  %143 = vmatmul.bf16.gmra.mxu0 %v111
  %v144 = vpop.f32.mrf.mxu0
  %v145 = vadd.f32 %v126, %v144
  %v146 = vpop.f32.mrf.mxu0
  %v147 = vadd.f32 %v128, %v146
  %148 = vmatmul.bf16.gmra.mxu0 %v114
  %v149 = vpop.f32.mrf.mxu0
  %v150 = vadd.f32 %v131, %v149
  %v151 = vpop.f32.mrf.mxu0
  %v152 = vadd.f32 %v133, %v151
  %153 = vdwg.mxu0
  %s154 = scalar_lea.vmem %s1, 72
  %v155 = vld [vmem:[%s154] sm:$0xf]
  %v156 = vld [vmem:[%s154 + $0x4] sm:$0xf]
  %v157 = vld [vmem:[%s154 + $0x8] sm:$0xf]
  %v158 = vld [vmem:[%s154 + $0xc] sm:$0xf]
  %v159 = vld [vmem:[%s154 + $0x10] sm:$0xf]
  %v160 = vld [vmem:[%s154 + $0x14] sm:$0xf]
  %v161 = vld [vmem:[%s154 + $0x18] sm:$0xf]
  %v162 = vld [vmem:[%s154 + $0x1c] sm:$0xf]
  %v163 = vld [vmem:[%s154 + $0x20] sm:$0xf]
  %v164 = vld [vmem:[%s154 + $0x24] sm:$0xf]
  %v165 = vld [vmem:[%s154 + $0x28] sm:$0xf]
  %v166 = vld [vmem:[%s154 + $0x2c] sm:$0xf]
  %v167 = vld [vmem:[%s154 + $0x30] sm:$0xf]
  %v168 = vld [vmem:[%s154 + $0x34] sm:$0xf]
  %v169 = vld [vmem:[%s154 + $0x38] sm:$0xf]
  %v170 = vld [vmem:[%s154 + $0x3c] sm:$0xf]
  %v171 = vld [vmem:[%s154 + $0x40] sm:$0xf]
  %v172 = vld [vmem:[%s154 + $0x44] sm:$0xf]
  %v191 = vunpack.c.l.b16 %v155
  %v192 = vunpack.c.l.b16 %v156
  %v193 = vunpack.c.l.b16 %v157
  %v194 = vunpack.c.l.b16 %v158
  %v195 = vunpack.c.l.b16 %v159
  %v196 = vunpack.c.l.b16 %v160
  %v197 = vunpack.c.l.b16 %v161
  %v198 = vunpack.c.l.b16 %v162
  %v199 = vunpack.c.l.b16 %v163
  %v200 = vunpack.c.l.b16 %v164
  %v201 = vunpack.c.l.b16 %v165
  %v202 = vunpack.c.l.b16 %v166
  %v203 = vunpack.c.l.b16 %v167
  %v204 = vunpack.c.l.b16 %v168
  %v205 = vunpack.c.l.b16 %v169
  %v206 = vunpack.c.l.b16 %v170
  %v207 = vunpack.c.l.b16 %v171
  %v208 = vunpack.c.l.b16 %v172
  %v209 = vpack.c.b16 %v192, %v191
  %v210 = vpack.c.b16 %v194, %v193
  %v211 = vpack.c.b16 %v196, %v195
  %v212 = vpack.c.b16 %v198, %v197
  %v213 = vpack.c.b16 %v200, %v199
  %v214 = vpack.c.b16 %v202, %v201
  %v215 = vpack.c.b16 %v204, %v203
  %v216 = vpack.c.b16 %v206, %v205
  %v217 = vpack.c.b16 %v208, %v207
  %227 = vmatpush.bf16.msra.mxu0 %v216
  %228 = vmatpush.bf16.msra.mxu0 %v215
  %229 = vmatpush.bf16.msra.mxu0 %v214
  %230 = vmatpush.bf16.msra.mxu0 %v213
  %231 = vmatpush.bf16.msra.mxu0 %v212
  %232 = vmatpush.bf16.msra.mxu0 %v211
  %233 = vmatpush.bf16.msra.mxu0 %v210
  %234 = vmatpush.bf16.msra.mxu0 %v209
  %235 = vmatmul.bf16.gmra.mxu0 %v49
  %v236 = vpop.f32.mrf.mxu0
  %v237 = vadd.f32 0.0, %v236
  %v238 = vpop.f32.mrf.mxu0
  %v239 = vadd.f32 0.0, %v238
  %240 = vmatmul.bf16.gmra.mxu0 %v51
  %v241 = vpop.f32.mrf.mxu0
  %v242 = vadd.f32 0.0, %v241
  %v243 = vpop.f32.mrf.mxu0
  %v244 = vadd.f32 0.0, %v243
  %245 = vdwg.mxu0
  %246 = vmatpush.bf16.msra.mxu0 0
  %247 = vmatpush.bf16.msra.mxu0 0
  %248 = vmatpush.bf16.msra.mxu0 0
  %249 = vmatpush.bf16.msra.mxu0 0
  %250 = vmatpush.bf16.msra.mxu0 0
  %251 = vmatpush.bf16.msra.mxu0 0
  %252 = vmatpush.bf16.msra.mxu0 0
  %253 = vmatpush.bf16.msra.mxu0 %v217
  %254 = vmatmul.bf16.gmra.mxu0 %v111
  %v255 = vpop.f32.mrf.mxu0
  %v256 = vadd.f32 %v237, %v255
  %v257 = vpop.f32.mrf.mxu0
  %v258 = vadd.f32 %v239, %v257
  %259 = vmatmul.bf16.gmra.mxu0 %v114
  %v260 = vpop.f32.mrf.mxu0
  %v261 = vadd.f32 %v242, %v260
  %v262 = vpop.f32.mrf.mxu0
  %v263 = vadd.f32 %v244, %v262
  %264 = vdwg.mxu0
  %v265 = vmax.f32 %v145, %v256
  %v266 = vmax.f32 %v147, %v258
  %v267 = vmax.f32 %v150, %v261
  %v268 = vmax.f32 %v152, %v263
  %s269 = scalar_lea.vmem %s1, 144
  %v270 = vld [vmem:[%s269] sm:$0xf]
  %v271 = vld [vmem:[%s269 + $0x4] sm:$0xf]
  %v272 = vld [vmem:[%s269 + $0x8] sm:$0xf]
  %v273 = vld [vmem:[%s269 + $0xc] sm:$0xf]
  %v274 = vld [vmem:[%s269 + $0x10] sm:$0xf]
  %v275 = vld [vmem:[%s269 + $0x14] sm:$0xf]
  %v276 = vld [vmem:[%s269 + $0x18] sm:$0xf]
  %v277 = vld [vmem:[%s269 + $0x1c] sm:$0xf]
  %v278 = vld [vmem:[%s269 + $0x20] sm:$0xf]
  %v279 = vld [vmem:[%s269 + $0x24] sm:$0xf]
  %v280 = vld [vmem:[%s269 + $0x28] sm:$0xf]
  %v281 = vld [vmem:[%s269 + $0x2c] sm:$0xf]
  %v282 = vld [vmem:[%s269 + $0x30] sm:$0xf]
  %v283 = vld [vmem:[%s269 + $0x34] sm:$0xf]
  %v284 = vld [vmem:[%s269 + $0x38] sm:$0xf]
  %v285 = vld [vmem:[%s269 + $0x3c] sm:$0xf]
  %v286 = vld [vmem:[%s269 + $0x40] sm:$0xf]
  %v287 = vld [vmem:[%s269 + $0x44] sm:$0xf]
  %v306 = vunpack.c.l.b16 %v270
  %v307 = vunpack.c.l.b16 %v271
  %v308 = vunpack.c.l.b16 %v272
  %v309 = vunpack.c.l.b16 %v273
  %v310 = vunpack.c.l.b16 %v274
  %v311 = vunpack.c.l.b16 %v275
  %v312 = vunpack.c.l.b16 %v276
  %v313 = vunpack.c.l.b16 %v277
  %v314 = vunpack.c.l.b16 %v278
  %v315 = vunpack.c.l.b16 %v279
  %v316 = vunpack.c.l.b16 %v280
  %v317 = vunpack.c.l.b16 %v281
  %v318 = vunpack.c.l.b16 %v282
  %v319 = vunpack.c.l.b16 %v283
  %v320 = vunpack.c.l.b16 %v284
  %v321 = vunpack.c.l.b16 %v285
  %v322 = vunpack.c.l.b16 %v286
  %v323 = vunpack.c.l.b16 %v287
  %v324 = vpack.c.b16 %v307, %v306
  %v325 = vpack.c.b16 %v309, %v308
  %v326 = vpack.c.b16 %v311, %v310
  %v327 = vpack.c.b16 %v313, %v312
  %v328 = vpack.c.b16 %v315, %v314
  %v329 = vpack.c.b16 %v317, %v316
  %v330 = vpack.c.b16 %v319, %v318
  %v331 = vpack.c.b16 %v321, %v320
  %v332 = vpack.c.b16 %v323, %v322
  %342 = vmatpush.bf16.msra.mxu0 %v331
  %343 = vmatpush.bf16.msra.mxu0 %v330
  %344 = vmatpush.bf16.msra.mxu0 %v329
  %345 = vmatpush.bf16.msra.mxu0 %v328
  %346 = vmatpush.bf16.msra.mxu0 %v327
  %347 = vmatpush.bf16.msra.mxu0 %v326
  %348 = vmatpush.bf16.msra.mxu0 %v325
  %349 = vmatpush.bf16.msra.mxu0 %v324
  %350 = vmatmul.bf16.gmra.mxu0 %v49
  %v351 = vpop.f32.mrf.mxu0
  %v352 = vadd.f32 0.0, %v351
  %v353 = vpop.f32.mrf.mxu0
  %v354 = vadd.f32 0.0, %v353
  %355 = vmatmul.bf16.gmra.mxu0 %v51
  %v356 = vpop.f32.mrf.mxu0
  %v357 = vadd.f32 0.0, %v356
  %v358 = vpop.f32.mrf.mxu0
  %v359 = vadd.f32 0.0, %v358
  %360 = vdwg.mxu0
  %361 = vmatpush.bf16.msra.mxu0 0
  %362 = vmatpush.bf16.msra.mxu0 0
  %363 = vmatpush.bf16.msra.mxu0 0
  %364 = vmatpush.bf16.msra.mxu0 0
  %365 = vmatpush.bf16.msra.mxu0 0
  %366 = vmatpush.bf16.msra.mxu0 0
  %367 = vmatpush.bf16.msra.mxu0 0
  %368 = vmatpush.bf16.msra.mxu0 %v332
  %369 = vmatmul.bf16.gmra.mxu0 %v111
  %v370 = vpop.f32.mrf.mxu0
  %v371 = vadd.f32 %v352, %v370
  %v372 = vpop.f32.mrf.mxu0
  %v373 = vadd.f32 %v354, %v372
  %374 = vmatmul.bf16.gmra.mxu0 %v114
  %v375 = vpop.f32.mrf.mxu0
  %v376 = vadd.f32 %v357, %v375
  %v377 = vpop.f32.mrf.mxu0
  %v378 = vadd.f32 %v359, %v377
  %379 = vdwg.mxu0
  %v380 = vmax.f32 %v265, %v371
  %v381 = vmax.f32 %v266, %v373
  %v382 = vmax.f32 %v267, %v376
  %v383 = vmax.f32 %v268, %v378
  %s384 = scalar_lea.vmem %s1, 216
  %v385 = vld [vmem:[%s384] sm:$0xf]
  %v386 = vld [vmem:[%s384 + $0x4] sm:$0xf]
  %v387 = vld [vmem:[%s384 + $0x8] sm:$0xf]
  %v388 = vld [vmem:[%s384 + $0xc] sm:$0xf]
  %v389 = vld [vmem:[%s384 + $0x10] sm:$0xf]
  %v390 = vld [vmem:[%s384 + $0x14] sm:$0xf]
  %v391 = vld [vmem:[%s384 + $0x18] sm:$0xf]
  %v392 = vld [vmem:[%s384 + $0x1c] sm:$0xf]
  %v393 = vld [vmem:[%s384 + $0x20] sm:$0xf]
  %v394 = vld [vmem:[%s384 + $0x24] sm:$0xf]
  %v395 = vld [vmem:[%s384 + $0x28] sm:$0xf]
  %v396 = vld [vmem:[%s384 + $0x2c] sm:$0xf]
  %v397 = vld [vmem:[%s384 + $0x30] sm:$0xf]
  %v398 = vld [vmem:[%s384 + $0x34] sm:$0xf]
  %v399 = vld [vmem:[%s384 + $0x38] sm:$0xf]
  %v400 = vld [vmem:[%s384 + $0x3c] sm:$0xf]
  %v401 = vld [vmem:[%s384 + $0x40] sm:$0xf]
  %v402 = vld [vmem:[%s384 + $0x44] sm:$0xf]
  %v421 = vunpack.c.l.b16 %v385
  %v422 = vunpack.c.l.b16 %v386
  %v423 = vunpack.c.l.b16 %v387
  %v424 = vunpack.c.l.b16 %v388
  %v425 = vunpack.c.l.b16 %v389
  %v426 = vunpack.c.l.b16 %v390
  %v427 = vunpack.c.l.b16 %v391
  %v428 = vunpack.c.l.b16 %v392
  %v429 = vunpack.c.l.b16 %v393
  %v430 = vunpack.c.l.b16 %v394
  %v431 = vunpack.c.l.b16 %v395
  %v432 = vunpack.c.l.b16 %v396
  %v433 = vunpack.c.l.b16 %v397
  %v434 = vunpack.c.l.b16 %v398
  %v435 = vunpack.c.l.b16 %v399
  %v436 = vunpack.c.l.b16 %v400
  %v437 = vunpack.c.l.b16 %v401
  %v438 = vunpack.c.l.b16 %v402
  %v439 = vpack.c.b16 %v422, %v421
  %v440 = vpack.c.b16 %v424, %v423
  %v441 = vpack.c.b16 %v426, %v425
  %v442 = vpack.c.b16 %v428, %v427
  %v443 = vpack.c.b16 %v430, %v429
  %v444 = vpack.c.b16 %v432, %v431
  %v445 = vpack.c.b16 %v434, %v433
  %v446 = vpack.c.b16 %v436, %v435
  %v447 = vpack.c.b16 %v438, %v437
  %457 = vmatpush.bf16.msra.mxu0 %v446
  %458 = vmatpush.bf16.msra.mxu0 %v445
  %459 = vmatpush.bf16.msra.mxu0 %v444
  %460 = vmatpush.bf16.msra.mxu0 %v443
  %461 = vmatpush.bf16.msra.mxu0 %v442
  %462 = vmatpush.bf16.msra.mxu0 %v441
  %463 = vmatpush.bf16.msra.mxu0 %v440
  %464 = vmatpush.bf16.msra.mxu0 %v439
  %465 = vmatmul.bf16.gmra.mxu0 %v49
  %v466 = vpop.f32.mrf.mxu0
  %v467 = vadd.f32 0.0, %v466
  %v468 = vpop.f32.mrf.mxu0
  %v469 = vadd.f32 0.0, %v468
  %470 = vmatmul.bf16.gmra.mxu0 %v51
  %v471 = vpop.f32.mrf.mxu0
  %v472 = vadd.f32 0.0, %v471
  %v473 = vpop.f32.mrf.mxu0
  %v474 = vadd.f32 0.0, %v473
  %475 = vdwg.mxu0
  %476 = vmatpush.bf16.msra.mxu0 0
  %477 = vmatpush.bf16.msra.mxu0 0
  %478 = vmatpush.bf16.msra.mxu0 0
  %479 = vmatpush.bf16.msra.mxu0 0
  %480 = vmatpush.bf16.msra.mxu0 0
  %481 = vmatpush.bf16.msra.mxu0 0
  %482 = vmatpush.bf16.msra.mxu0 0
  %483 = vmatpush.bf16.msra.mxu0 %v447
  %484 = vmatmul.bf16.gmra.mxu0 %v111
  %v485 = vpop.f32.mrf.mxu0
  %v486 = vadd.f32 %v467, %v485
  %v487 = vpop.f32.mrf.mxu0
  %v488 = vadd.f32 %v469, %v487
  %489 = vmatmul.bf16.gmra.mxu0 %v114
  %v490 = vpop.f32.mrf.mxu0
  %v491 = vadd.f32 %v472, %v490
  %v492 = vpop.f32.mrf.mxu0
  %v493 = vadd.f32 %v474, %v492
  %494 = vdwg.mxu0
  %v495 = vmax.f32 %v380, %v486
  %v496 = vmax.f32 %v381, %v488
  %v497 = vmax.f32 %v382, %v491
  %v498 = vmax.f32 %v383, %v493
  %v499 = vld [vmem:[%s2] sm:$0xff]
  %v500 = vld [vmem:[%s2 + $0x8] sm:$0xff]
  %v501 = vld [vmem:[%s2 + $0x10] sm:$0xff]
  %v502 = vld [vmem:[%s2 + $0x18] sm:$0xff]
  %504 = vset.pattern.permute.xlu0 0
  %505 = vperm.xlu0 %504, %v499
  %v506 = vpop.permute.xlu0 %505
  %509 = vset.pattern.permute.xlu0 0
  %510 = vperm.xlu0 %509, %v500
  %v511 = vpop.permute.xlu0 %510
  %514 = vset.pattern.permute.xlu0 0
  %515 = vperm.xlu0 %514, %v501
  %v516 = vpop.permute.xlu0 %515
  %519 = vset.pattern.permute.xlu0 0
  %520 = vperm.xlu0 %519, %v502
  %v521 = vpop.permute.xlu0 %520
  %v523 = vadd.f32 %v495, %v506
  %v524 = vadd.f32 %v496, %v511
  %v525 = vadd.f32 %v497, %v516
  %v526 = vadd.f32 %v498, %v521
  %v527 = vmax.f32 %v523, 0.0
  %v528 = vmax.f32 %v524, 0.0
  %v529 = vmax.f32 %v525, 0.0
  %v530 = vmax.f32 %v526, 0.0
  %vm531 = vcmask 408576
  %532 = vst.msk [vmem:[%s3] sm:$0xff] %vm531, %v527
  %533 = vst.msk [vmem:[%s3 + $0x8] sm:$0xff] %vm531, %v528
  %534 = vst.msk [vmem:[%s3 + $0x10] sm:$0xff] %vm531, %v529
  %535 = vst.msk [vmem:[%s3 + $0x18] sm:$0xff] %vm531, %v530
  // Predicated region
  $region14: #{cnn_forward.3} parent=0 // pred_check
    _
  $region15: #{cnn_forward.3} parent=0 // pred_check_branch
    %537 = sbr.rel (0) target = $region17
  $region16: #{cnn_forward.3} parent=0 // pred_region
    _
  $region17: #{cnn_forward.3} parent=0 // pred_fallthru
    _
  // Predicated region
  $region18: #{cnn_forward.3} parent=0 // pred_check
    _
  $region19: #{cnn_forward.3} parent=0 // pred_check_branch
    %539 = sbr.rel (0) target = $region21
  $region20: #{cnn_forward.3} parent=0 // pred_region
    _
  $region21: #{cnn_forward.3} parent=0 // pred_fallthru
    _

</llo_original>
